<compile_context>
chip_gen: v5e
topology: v5e:2x2
jax: 0.10.0
libtpu: 0.0.40
codegen_flags: <defaults>
</compile_context>

<pallas_src>
import functools

import jax
import jax.numpy as jnp
from jax.experimental import pallas as pl
from jax.experimental.pallas import tpu as pltpu  # noqa: F401  (TPU backend)

# ---------------- small, structure-faithful config ----------------
B = 2            # batch
C = 3            # image channels
IMG = 16         # image H = W
PATCH = 8        # patch size  -> 2x2 = 4 patches
NP = (IMG // PATCH) ** 2
SEQ = NP + 1     # + class token
ROWS = B * SEQ
D = 32           # ViT hidden dim ("in_features"), scaled down from 768
HEADS = 4
HD = D // HEADS
MLP = 4 * D
LAYERS = 2       # scaled down from 12
OUT_DIM = 32     # SPSimCLR out_dim
SE_RED = 16
SE_HID = OUT_DIM // SE_RED
EPS = 1e-6
OUT_PAD_B = 8    # lane-dense output slab: one full (8, 128) vreg
OUT_PAD_N = 128


# ---------------- in-kernel helpers ----------------
def _ln(v, g, b):
    mu = jnp.mean(v, axis=-1, keepdims=True)
    var = jnp.mean((v - mu) ** 2, axis=-1, keepdims=True)
    return (v - mu) * jax.lax.rsqrt(var + EPS) * g + b


def _mm(x, w_bf16):
    # MXU-native bf16 operands, f32 accumulation; elementwise stays f32.
    return jnp.dot(x.astype(jnp.bfloat16), w_bf16, preferred_element_type=jnp.float32)


# ---------------- the fused forward kernel ----------------
def _sp_simclr_kernel(
        patches_ref, pw_ref, pb_ref, cls_ref, pos_ref,
        ln1g_ref, ln1b_ref, wq_ref, bq_ref, wk_ref, bk_ref, wv_ref, bv_ref,
        wo_ref, bo_ref, ln2g_ref, ln2b_ref, w1_ref, b1_ref, w2_ref, b2_ref,
        lng_ref, lnb_ref, wh1_ref, bh1_ref, wh2_ref, bh2_ref,
        ws1_ref, bs1_ref, ws2_ref, bs2_ref,
        o_ref):
    bf16 = jnp.bfloat16

    # ---- patch embedding: Conv2d(C, D, k=PATCH, s=PATCH) as a matmul ----
    emb = _mm(patches_ref[...], pw_ref[...]) + pb_ref[...]            # (B*NP, D) f32
    tok = emb.reshape(B, NP, D)
    cls = jnp.broadcast_to(cls_ref[...], (B, 1, D))
    tok = jnp.concatenate([cls, tok], axis=1) + pos_ref[...]          # (B, SEQ, D)
    x = tok.reshape(ROWS, D)                                          # (B*SEQ, D)

    scale = 1.0 / (HD ** 0.5)
    for l in range(LAYERS):                                           # static unroll
        # ---- multi-head self-attention ----
        xn = _ln(x, ln1g_ref[l], ln1b_ref[l])
        q = (_mm(xn, wq_ref[l]) + bq_ref[l]).reshape(B, SEQ, D)
        k = (_mm(xn, wk_ref[l]) + bk_ref[l]).reshape(B, SEQ, D)
        v = (_mm(xn, wv_ref[l]) + bv_ref[l]).reshape(B, SEQ, D)
        # fold heads into the leading batch dim: (HEADS*B, SEQ, HD)
        qh = jnp.concatenate([q[..., h * HD:(h + 1) * HD] for h in range(HEADS)], axis=0)
        kh = jnp.concatenate([k[..., h * HD:(h + 1) * HD] for h in range(HEADS)], axis=0)
        vh = jnp.concatenate([v[..., h * HD:(h + 1) * HD] for h in range(HEADS)], axis=0)
        s = jnp.einsum('nqd,nkd->nqk', qh.astype(bf16), kh.astype(bf16),
                       preferred_element_type=jnp.float32) * scale    # (HEADS*B, SEQ, SEQ)
        s = s - jnp.max(s, axis=-1, keepdims=True)
        p = jnp.exp(s)
        p = p * pl.reciprocal(jnp.sum(p, axis=-1, keepdims=True), approx=True)
        ctx = jnp.einsum('nqk,nkd->nqd', p.astype(bf16), vh.astype(bf16),
                         preferred_element_type=jnp.float32)          # (HEADS*B, SEQ, HD)
        # un-fold heads back onto lanes, then ONE output projection
        ctx = jnp.concatenate([ctx[h * B:(h + 1) * B] for h in range(HEADS)], axis=-1)
        ctx = ctx.reshape(ROWS, D)
        x = x + _mm(ctx, wo_ref[l]) + bo_ref[l]                       # residual 1
        # ---- MLP ----
        y = _ln(x, ln2g_ref[l], ln2b_ref[l])
        h1 = _mm(y, w1_ref[l]) + b1_ref[l]
        # TODO(synk): torchvision ViT uses exact (erf) GELU; tanh approximation here.
        h1 = jax.nn.gelu(h1, approximate=True)
        x = x + _mm(h1, w2_ref[l]) + b2_ref[l]                        # residual 2

    # ---- class token -> encoder final LN -> SimCLR MLP head (heads override) ----
    cls_out = jnp.concatenate([x[b * SEQ:b * SEQ + 1, :] for b in range(B)], axis=0)  # (B, D)
    cls_out = _ln(cls_out, lng_ref[...], lnb_ref[...])
    h = jnp.maximum(_mm(cls_out, wh1_ref[...]) + bh1_ref[...], 0.0)
    z = _mm(h, wh2_ref[...]) + bh2_ref[...]                           # (B, OUT_DIM)
    # ---- SEBlock on (B, OUT_DIM, 1, 1): AdaptiveAvgPool2d(1) over a 1x1 map == identity ----
    se = jnp.maximum(_mm(z, ws1_ref[...]) + bs1_ref[...], 0.0)
    se = jax.nn.sigmoid(_mm(se, ws2_ref[...]) + bs2_ref[...])
    gated = z * se                                                    # (B, OUT_DIM)

    # ---- lane-dense (8, 128) store; wrapper slices back to (B, OUT_DIM) ----
    padded = jnp.concatenate(
        [gated, jnp.zeros((B, OUT_PAD_N - OUT_DIM), jnp.float32)], axis=-1)
    padded = jnp.concatenate(
        [padded, jnp.zeros((OUT_PAD_B - B, OUT_PAD_N), jnp.float32)], axis=0)
    o_ref[...] = padded


# ---------------- one-time weight packing (bf16 cast done ONCE, not per call) ----------------
def pack_params(params):
    bf = lambda a: a.astype(jnp.bfloat16)   # matmul weights -> bf16 (MXU native, halves DMA)
    L = params["layers"]
    return (
        bf(params["patch_w"]), params["patch_b"],
        params["cls_token"], params["pos_embed"],
        L["ln1g"], L["ln1b"],
        bf(L["wq"]), L["bq"], bf(L["wk"]), L["bk"], bf(L["wv"]), L["bv"],
        bf(L["wo"]), L["bo"],
        L["ln2g"], L["ln2b"],
        bf(L["w1"]), L["b1"], bf(L["w2"]), L["b2"],
        params["ln_g"], params["ln_b"],
        bf(params["wh1"]), params["bh1"], bf(params["wh2"]), params["bh2"],
        bf(params["ws1"]), params["bs1"], bf(params["ws2"]), params["bs2"],
    )


# ---------------- full forward (jitted JAX glue around the single kernel) ----------------
@functools.partial(jax.jit, static_argnames=())
def sp_simclr_forward(x, packed):
    bsz, c, hh, ww = x.shape
    hp, wp = hh // PATCH, ww // PATCH
    # Conv2d(C, D, kernel=PATCH, stride=PATCH) == linear over (c, ph, pw)-flattened patches.
    patches = x.reshape(bsz, c, hp, PATCH, wp, PATCH)
    patches = patches.transpose(0, 2, 4, 1, 3, 5).reshape(bsz * hp * wp, c * PATCH * PATCH)

    out = pl.pallas_call(
        _sp_simclr_kernel,
        out_shape=jax.ShapeDtypeStruct((OUT_PAD_B, OUT_PAD_N), jnp.float32),
    )(patches, *packed)
    return out[:bsz, :OUT_DIM]


# ---------------- deterministic parameter init (per-layer params stacked over LAYERS) ----------------
def init_params(key):
    keys = iter(jax.random.split(key, 64))

    def nrm(shape, s=0.02):
        return (s * jax.random.normal(next(keys), shape)).astype(jnp.float32)

    def nrm_stack(shape, s=0.02):
        return jnp.stack([nrm(shape, s) for _ in range(LAYERS)], axis=0)

    def zeros(shape):
        return jnp.zeros(shape, jnp.float32)

    def ones(shape):
        return jnp.ones(shape, jnp.float32)

    layers = {
        "ln1g": ones((LAYERS, 1, D)), "ln1b": zeros((LAYERS, 1, D)),
        "wq": nrm_stack((D, D)), "bq": zeros((LAYERS, 1, D)),
        "wk": nrm_stack((D, D)), "bk": zeros((LAYERS, 1, D)),
        "wv": nrm_stack((D, D)), "bv": zeros((LAYERS, 1, D)),
        "wo": nrm_stack((D, D)), "bo": zeros((LAYERS, 1, D)),
        "ln2g": ones((LAYERS, 1, D)), "ln2b": zeros((LAYERS, 1, D)),
        "w1": nrm_stack((D, MLP)), "b1": zeros((LAYERS, 1, MLP)),
        "w2": nrm_stack((MLP, D)), "b2": zeros((LAYERS, 1, D)),
    }
    return {
        "patch_w": nrm((C * PATCH * PATCH, D)),
        "patch_b": zeros((1, D)),
        "cls_token": nrm((1, D)),
        "pos_embed": nrm((SEQ, D)),
        "layers": layers,
        "ln_g": ones((1, D)), "ln_b": zeros((1, D)),                 # encoder final LN
        "wh1": nrm((D, D)), "bh1": zeros((1, D)),                    # heads Linear(D,D)
        "wh2": nrm((D, OUT_DIM)), "bh2": zeros((1, OUT_DIM)),        # heads Linear(D,out)
        "ws1": nrm((OUT_DIM, SE_HID)), "bs1": zeros((1, SE_HID)),    # SE fc1
        "ws2": nrm((SE_HID, OUT_DIM)), "bs2": zeros((1, OUT_DIM)),   # SE fc2
    }


if __name__ == "__main__":
    key = jax.random.PRNGKey(0)
    k_x, k_p = jax.random.split(key)
    x = jax.random.normal(k_x, (B, C, IMG, IMG), dtype=jnp.float32)   # NCHW, like PyTorch
    params = init_params(k_p)
    packed = pack_params(params)   # bf16 weight casts happen once, outside the forward path

    out = sp_simclr_forward(x, packed)
    out = jax.block_until_ready(out)
    assert out.shape == (B, OUT_DIM), out.shape
    assert bool(jnp.all(jnp.isfinite(out)))
    print("KERNEL_OK")
</pallas_src>

<mosaic_0001>
module attributes {stable_mosaic.version = 11 : i64} {
  func.func @_sp_simclr_kernel(%arg0: memref<8x192xf32, #tpu.memory_space<vmem>>, %arg1: memref<192x32xbf16, #tpu.memory_space<vmem>>, %arg2: memref<1x32xf32, #tpu.memory_space<vmem>>, %arg3: memref<1x32xf32, #tpu.memory_space<vmem>>, %arg4: memref<5x32xf32, #tpu.memory_space<vmem>>, %arg5: memref<2x1x32xf32, #tpu.memory_space<vmem>>, %arg6: memref<2x1x32xf32, #tpu.memory_space<vmem>>, %arg7: memref<2x32x32xbf16, #tpu.memory_space<vmem>>, %arg8: memref<2x1x32xf32, #tpu.memory_space<vmem>>, %arg9: memref<2x32x32xbf16, #tpu.memory_space<vmem>>, %arg10: memref<2x1x32xf32, #tpu.memory_space<vmem>>, %arg11: memref<2x32x32xbf16, #tpu.memory_space<vmem>>, %arg12: memref<2x1x32xf32, #tpu.memory_space<vmem>>, %arg13: memref<2x32x32xbf16, #tpu.memory_space<vmem>>, %arg14: memref<2x1x32xf32, #tpu.memory_space<vmem>>, %arg15: memref<2x1x32xf32, #tpu.memory_space<vmem>>, %arg16: memref<2x1x32xf32, #tpu.memory_space<vmem>>, %arg17: memref<2x32x128xbf16, #tpu.memory_space<vmem>>, %arg18: memref<2x1x128xf32, #tpu.memory_space<vmem>>, %arg19: memref<2x128x32xbf16, #tpu.memory_space<vmem>>, %arg20: memref<2x1x32xf32, #tpu.memory_space<vmem>>, %arg21: memref<1x32xf32, #tpu.memory_space<vmem>>, %arg22: memref<1x32xf32, #tpu.memory_space<vmem>>, %arg23: memref<32x32xbf16, #tpu.memory_space<vmem>>, %arg24: memref<1x32xf32, #tpu.memory_space<vmem>>, %arg25: memref<32x32xbf16, #tpu.memory_space<vmem>>, %arg26: memref<1x32xf32, #tpu.memory_space<vmem>>, %arg27: memref<32x2xbf16, #tpu.memory_space<vmem>>, %arg28: memref<1x2xf32, #tpu.memory_space<vmem>>, %arg29: memref<2x32xbf16, #tpu.memory_space<vmem>>, %arg30: memref<1x32xf32, #tpu.memory_space<vmem>>, %arg31: memref<8x128xf32, #tpu.memory_space<vmem>>) attributes {dimension_semantics = [], scalar_prefetch = 0 : i64, scratch_operands = 0 : i64, tpu.core_type = #tpu.core_type<tc>} {
    %c0 = arith.constant 0 : index
    %c0_0 = arith.constant 0 : index
    %0 = vector.load %arg0[%c0, %c0_0] : memref<8x192xf32, #tpu.memory_space<vmem>>, vector<8x192xf32>
    %c0_1 = arith.constant 0 : index
    %c0_2 = arith.constant 0 : index
    %1 = vector.load %arg1[%c0_1, %c0_2] : memref<192x32xbf16, #tpu.memory_space<vmem>>, vector<192x32xbf16>
    %2 = arith.truncf %0 : vector<8x192xf32> to vector<8x192xbf16>
    %cst = arith.constant dense<0.000000e+00> : vector<8x32xf32>
    %3 = tpu.matmul %2, %1, %cst {dimension_numbers = #tpu.dot_dimension_numbers<[1], [0], [0], [1], [0, 0, 1, 1], [], []>} : vector<8x192xbf16>, vector<192x32xbf16>, vector<8x32xf32> -> vector<8x32xf32>
    %c0_3 = arith.constant 0 : index
    %c0_4 = arith.constant 0 : index
    %4 = vector.load %arg2[%c0_3, %c0_4] : memref<1x32xf32, #tpu.memory_space<vmem>>, vector<1x32xf32>
    %5 = vector.broadcast %4 : vector<1x32xf32> to vector<8x32xf32>
    %6 = arith.addf %3, %5 : vector<8x32xf32>
    %7 = vector.shape_cast %6 : vector<8x32xf32> to vector<2x4x32xf32>
    %c0_5 = arith.constant 0 : index
    %c0_6 = arith.constant 0 : index
    %8 = vector.load %arg3[%c0_5, %c0_6] : memref<1x32xf32, #tpu.memory_space<vmem>>, vector<1x32xf32>
    %9 = vector.shape_cast %8 : vector<1x32xf32> to vector<1x1x32xf32>
    %10 = vector.broadcast %9 : vector<1x1x32xf32> to vector<2x1x32xf32>
    %11 = tpu.concatenate %10, %7 in 1 : vector<2x1x32xf32>, vector<2x4x32xf32> -> vector<2x5x32xf32>
    %c0_7 = arith.constant 0 : index
    %c0_8 = arith.constant 0 : index
    %12 = vector.load %arg4[%c0_7, %c0_8] : memref<5x32xf32, #tpu.memory_space<vmem>>, vector<5x32xf32>
    %13 = vector.shape_cast %12 : vector<5x32xf32> to vector<1x5x32xf32>
    %14 = vector.broadcast %13 : vector<1x5x32xf32> to vector<2x5x32xf32>
    %15 = arith.addf %11, %14 : vector<2x5x32xf32>
    %16 = vector.shape_cast %15 : vector<2x5x32xf32> to vector<10x32xf32>
    %c0_9 = arith.constant 0 : index
    %c0_10 = arith.constant 0 : index
    %c0_11 = arith.constant 0 : index
    %17 = vector.load %arg5[%c0_9, %c0_10, %c0_11] : memref<2x1x32xf32, #tpu.memory_space<vmem>>, vector<1x1x32xf32>
    %18 = vector.shape_cast %17 : vector<1x1x32xf32> to vector<1x32xf32>
    %c0_12 = arith.constant 0 : index
    %c0_13 = arith.constant 0 : index
    %c0_14 = arith.constant 0 : index
    %19 = vector.load %arg6[%c0_12, %c0_13, %c0_14] : memref<2x1x32xf32, #tpu.memory_space<vmem>>, vector<1x1x32xf32>
    %20 = vector.shape_cast %19 : vector<1x1x32xf32> to vector<1x32xf32>
    %cst_15 = arith.constant dense<0.000000e+00> : vector<10xf32>
    %21 = vector.multi_reduction <add>, %16, %cst_15 [1] : vector<10x32xf32> to vector<10xf32>
    %22 = vector.shape_cast %21 : vector<10xf32> to vector<10x1xf32>
    %cst_16 = arith.constant 3.200000e+01 : f32
    %23 = vector.broadcast %cst_16 : f32 to vector<10x1xf32>
    %24 = arith.divf %22, %23 : vector<10x1xf32>
    %25 = vector.broadcast %24 : vector<10x1xf32> to vector<10x32xf32>
    %26 = arith.subf %16, %25 : vector<10x32xf32>
    %27 = arith.mulf %26, %26 : vector<10x32xf32>
    %cst_17 = arith.constant dense<0.000000e+00> : vector<10xf32>
    %28 = vector.multi_reduction <add>, %27, %cst_17 [1] : vector<10x32xf32> to vector<10xf32>
    %29 = vector.shape_cast %28 : vector<10xf32> to vector<10x1xf32>
    %cst_18 = arith.constant 3.200000e+01 : f32
    %30 = vector.broadcast %cst_18 : f32 to vector<10x1xf32>
    %31 = arith.divf %29, %30 : vector<10x1xf32>
    %32 = vector.broadcast %24 : vector<10x1xf32> to vector<10x32xf32>
    %33 = arith.subf %16, %32 : vector<10x32xf32>
    %cst_19 = arith.constant 9.99999997E-7 : f32
    %34 = vector.broadcast %cst_19 : f32 to vector<10x1xf32>
    %35 = arith.addf %31, %34 : vector<10x1xf32>
    %36 = math.rsqrt %35 : vector<10x1xf32>
    %37 = vector.broadcast %36 : vector<10x1xf32> to vector<10x32xf32>
    %38 = arith.mulf %33, %37 : vector<10x32xf32>
    %39 = vector.broadcast %18 : vector<1x32xf32> to vector<10x32xf32>
    %40 = arith.mulf %38, %39 : vector<10x32xf32>
    %41 = vector.broadcast %20 : vector<1x32xf32> to vector<10x32xf32>
    %42 = arith.addf %40, %41 : vector<10x32xf32>
    %c0_20 = arith.constant 0 : index
    %c0_21 = arith.constant 0 : index
    %c0_22 = arith.constant 0 : index
    %43 = vector.load %arg7[%c0_20, %c0_21, %c0_22] : memref<2x32x32xbf16, #tpu.memory_space<vmem>>, vector<1x32x32xbf16>
    %44 = vector.shape_cast %43 : vector<1x32x32xbf16> to vector<32x32xbf16>
    %45 = arith.truncf %42 : vector<10x32xf32> to vector<10x32xbf16>
    %cst_23 = arith.constant dense<0.000000e+00> : vector<10x32xf32>
    %46 = tpu.matmul %45, %44, %cst_23 {dimension_numbers = #tpu.dot_dimension_numbers<[1], [0], [0], [1], [0, 0, 1, 1], [], []>} : vector<10x32xbf16>, vector<32x32xbf16>, vector<10x32xf32> -> vector<10x32xf32>
    %c0_24 = arith.constant 0 : index
    %c0_25 = arith.constant 0 : index
    %c0_26 = arith.constant 0 : index
    %47 = vector.load %arg8[%c0_24, %c0_25, %c0_26] : memref<2x1x32xf32, #tpu.memory_space<vmem>>, vector<1x1x32xf32>
    %48 = vector.shape_cast %47 : vector<1x1x32xf32> to vector<1x32xf32>
    %49 = vector.broadcast %48 : vector<1x32xf32> to vector<10x32xf32>
    %50 = arith.addf %46, %49 : vector<10x32xf32>
    %51 = vector.shape_cast %50 : vector<10x32xf32> to vector<2x5x32xf32>
    %c0_27 = arith.constant 0 : index
    %c0_28 = arith.constant 0 : index
    %c0_29 = arith.constant 0 : index
    %52 = vector.load %arg9[%c0_27, %c0_28, %c0_29] : memref<2x32x32xbf16, #tpu.memory_space<vmem>>, vector<1x32x32xbf16>
    %53 = vector.shape_cast %52 : vector<1x32x32xbf16> to vector<32x32xbf16>
    %54 = arith.truncf %42 : vector<10x32xf32> to vector<10x32xbf16>
    %cst_30 = arith.constant dense<0.000000e+00> : vector<10x32xf32>
    %55 = tpu.matmul %54, %53, %cst_30 {dimension_numbers = #tpu.dot_dimension_numbers<[1], [0], [0], [1], [0, 0, 1, 1], [], []>} : vector<10x32xbf16>, vector<32x32xbf16>, vector<10x32xf32> -> vector<10x32xf32>
    %c0_31 = arith.constant 0 : index
    %c0_32 = arith.constant 0 : index
    %c0_33 = arith.constant 0 : index
    %56 = vector.load %arg10[%c0_31, %c0_32, %c0_33] : memref<2x1x32xf32, #tpu.memory_space<vmem>>, vector<1x1x32xf32>
    %57 = vector.shape_cast %56 : vector<1x1x32xf32> to vector<1x32xf32>
    %58 = vector.broadcast %57 : vector<1x32xf32> to vector<10x32xf32>
    %59 = arith.addf %55, %58 : vector<10x32xf32>
    %60 = vector.shape_cast %59 : vector<10x32xf32> to vector<2x5x32xf32>
    %c0_34 = arith.constant 0 : index
    %c0_35 = arith.constant 0 : index
    %c0_36 = arith.constant 0 : index
    %61 = vector.load %arg11[%c0_34, %c0_35, %c0_36] : memref<2x32x32xbf16, #tpu.memory_space<vmem>>, vector<1x32x32xbf16>
    %62 = vector.shape_cast %61 : vector<1x32x32xbf16> to vector<32x32xbf16>
    %63 = arith.truncf %42 : vector<10x32xf32> to vector<10x32xbf16>
    %cst_37 = arith.constant dense<0.000000e+00> : vector<10x32xf32>
    %64 = tpu.matmul %63, %62, %cst_37 {dimension_numbers = #tpu.dot_dimension_numbers<[1], [0], [0], [1], [0, 0, 1, 1], [], []>} : vector<10x32xbf16>, vector<32x32xbf16>, vector<10x32xf32> -> vector<10x32xf32>
    %c0_38 = arith.constant 0 : index
    %c0_39 = arith.constant 0 : index
    %c0_40 = arith.constant 0 : index
    %65 = vector.load %arg12[%c0_38, %c0_39, %c0_40] : memref<2x1x32xf32, #tpu.memory_space<vmem>>, vector<1x1x32xf32>
    %66 = vector.shape_cast %65 : vector<1x1x32xf32> to vector<1x32xf32>
    %67 = vector.broadcast %66 : vector<1x32xf32> to vector<10x32xf32>
    %68 = arith.addf %64, %67 : vector<10x32xf32>
    %69 = vector.shape_cast %68 : vector<10x32xf32> to vector<2x5x32xf32>
    %70 = vector.extract_strided_slice %51 {offsets = [0, 0, 0], sizes = [2, 5, 8], strides = [1, 1, 1]} : vector<2x5x32xf32> to vector<2x5x8xf32>
    %71 = vector.extract_strided_slice %51 {offsets = [0, 0, 8], sizes = [2, 5, 8], strides = [1, 1, 1]} : vector<2x5x32xf32> to vector<2x5x8xf32>
    %72 = vector.extract_strided_slice %51 {offsets = [0, 0, 16], sizes = [2, 5, 8], strides = [1, 1, 1]} : vector<2x5x32xf32> to vector<2x5x8xf32>
    %73 = vector.extract_strided_slice %51 {offsets = [0, 0, 24], sizes = [2, 5, 8], strides = [1, 1, 1]} : vector<2x5x32xf32> to vector<2x5x8xf32>
    %74 = tpu.concatenate %70, %71, %72, %73 in 0 : vector<2x5x8xf32>, vector<2x5x8xf32>, vector<2x5x8xf32>, vector<2x5x8xf32> -> vector<8x5x8xf32>
    %75 = vector.extract_strided_slice %60 {offsets = [0, 0, 0], sizes = [2, 5, 8], strides = [1, 1, 1]} : vector<2x5x32xf32> to vector<2x5x8xf32>
    %76 = vector.extract_strided_slice %60 {offsets = [0, 0, 8], sizes = [2, 5, 8], strides = [1, 1, 1]} : vector<2x5x32xf32> to vector<2x5x8xf32>
    %77 = vector.extract_strided_slice %60 {offsets = [0, 0, 16], sizes = [2, 5, 8], strides = [1, 1, 1]} : vector<2x5x32xf32> to vector<2x5x8xf32>
    %78 = vector.extract_strided_slice %60 {offsets = [0, 0, 24], sizes = [2, 5, 8], strides = [1, 1, 1]} : vector<2x5x32xf32> to vector<2x5x8xf32>
    %79 = tpu.concatenate %75, %76, %77, %78 in 0 : vector<2x5x8xf32>, vector<2x5x8xf32>, vector<2x5x8xf32>, vector<2x5x8xf32> -> vector<8x5x8xf32>
    %80 = vector.extract_strided_slice %69 {offsets = [0, 0, 0], sizes = [2, 5, 8], strides = [1, 1, 1]} : vector<2x5x32xf32> to vector<2x5x8xf32>
    %81 = vector.extract_strided_slice %69 {offsets = [0, 0, 8], sizes = [2, 5, 8], strides = [1, 1, 1]} : vector<2x5x32xf32> to vector<2x5x8xf32>
    %82 = vector.extract_strided_slice %69 {offsets = [0, 0, 16], sizes = [2, 5, 8], strides = [1, 1, 1]} : vector<2x5x32xf32> to vector<2x5x8xf32>
    %83 = vector.extract_strided_slice %69 {offsets = [0, 0, 24], sizes = [2, 5, 8], strides = [1, 1, 1]} : vector<2x5x32xf32> to vector<2x5x8xf32>
    %84 = tpu.concatenate %80, %81, %82, %83 in 0 : vector<2x5x8xf32>, vector<2x5x8xf32>, vector<2x5x8xf32>, vector<2x5x8xf32> -> vector<8x5x8xf32>
    %85 = arith.truncf %74 : vector<8x5x8xf32> to vector<8x5x8xbf16>
    %86 = arith.truncf %79 : vector<8x5x8xf32> to vector<8x5x8xbf16>
    "tpu.trace_start"() <{level = 10 : i32, message = "nqd,nkd->nqk"}> : () -> ()
    %cst_41 = arith.constant dense<0.000000e+00> : vector<8x5x5xf32>
    %87 = tpu.matmul %85, %86, %cst_41 {dimension_numbers = #tpu.dot_dimension_numbers<[2], [2], [1], [1], [0, 0, 0, 1, 1, 1], [0], [0]>} : vector<8x5x8xbf16>, vector<8x5x8xbf16>, vector<8x5x5xf32> -> vector<8x5x5xf32>
    "tpu.trace_stop"() : () -> ()
    %cst_42 = arith.constant 0.353553385 : f32
    %88 = vector.broadcast %cst_42 : f32 to vector<8x5x5xf32>
    %89 = arith.mulf %87, %88 : vector<8x5x5xf32>
    %cst_43 = arith.constant dense<0xFF800000> : vector<8x5xf32>
    %90 = vector.multi_reduction <maximumf>, %89, %cst_43 [2] : vector<8x5x5xf32> to vector<8x5xf32>
    %91 = vector.shape_cast %90 : vector<8x5xf32> to vector<8x5x1xf32>
    %92 = vector.broadcast %91 : vector<8x5x1xf32> to vector<8x5x5xf32>
    %93 = arith.subf %89, %92 : vector<8x5x5xf32>
    %94 = math.exp %93 : vector<8x5x5xf32>
    %cst_44 = arith.constant dense<0.000000e+00> : vector<8x5xf32>
    %95 = vector.multi_reduction <add>, %94, %cst_44 [2] : vector<8x5x5xf32> to vector<8x5xf32>
    %96 = vector.shape_cast %95 : vector<8x5xf32> to vector<8x5x1xf32>
    %97 = tpu.reciprocal %96 {approx = true} : vector<8x5x1xf32> -> vector<8x5x1xf32>
    %98 = vector.broadcast %97 : vector<8x5x1xf32> to vector<8x5x5xf32>
    %99 = arith.mulf %94, %98 : vector<8x5x5xf32>
    %100 = arith.truncf %99 : vector<8x5x5xf32> to vector<8x5x5xbf16>
    %101 = arith.truncf %84 : vector<8x5x8xf32> to vector<8x5x8xbf16>
    "tpu.trace_start"() <{level = 10 : i32, message = "nqk,nkd->nqd"}> : () -> ()
    %cst_45 = arith.constant dense<0.000000e+00> : vector<8x5x8xf32>
    %102 = tpu.matmul %100, %101, %cst_45 {dimension_numbers = #tpu.dot_dimension_numbers<[2], [1], [1], [2], [0, 0, 0, 1, 1, 2], [0], [0]>} : vector<8x5x5xbf16>, vector<8x5x8xbf16>, vector<8x5x8xf32> -> vector<8x5x8xf32>
    "tpu.trace_stop"() : () -> ()
    %103 = vector.extract_strided_slice %102 {offsets = [0, 0, 0], sizes = [2, 5, 8], strides = [1, 1, 1]} : vector<8x5x8xf32> to vector<2x5x8xf32>
    %104 = vector.extract_strided_slice %102 {offsets = [2, 0, 0], sizes = [2, 5, 8], strides = [1, 1, 1]} : vector<8x5x8xf32> to vector<2x5x8xf32>
    %105 = vector.extract_strided_slice %102 {offsets = [4, 0, 0], sizes = [2, 5, 8], strides = [1, 1, 1]} : vector<8x5x8xf32> to vector<2x5x8xf32>
    %106 = vector.extract_strided_slice %102 {offsets = [6, 0, 0], sizes = [2, 5, 8], strides = [1, 1, 1]} : vector<8x5x8xf32> to vector<2x5x8xf32>
    %107 = tpu.concatenate %103, %104, %105, %106 in 2 : vector<2x5x8xf32>, vector<2x5x8xf32>, vector<2x5x8xf32>, vector<2x5x8xf32> -> vector<2x5x32xf32>
    %108 = vector.shape_cast %107 : vector<2x5x32xf32> to vector<10x32xf32>
    %c0_46 = arith.constant 0 : index
    %c0_47 = arith.constant 0 : index
    %c0_48 = arith.constant 0 : index
    %109 = vector.load %arg13[%c0_46, %c0_47, %c0_48] : memref<2x32x32xbf16, #tpu.memory_space<vmem>>, vector<1x32x32xbf16>
    %110 = vector.shape_cast %109 : vector<1x32x32xbf16> to vector<32x32xbf16>
    %111 = arith.truncf %108 : vector<10x32xf32> to vector<10x32xbf16>
    %cst_49 = arith.constant dense<0.000000e+00> : vector<10x32xf32>
    %112 = tpu.matmul %111, %110, %cst_49 {dimension_numbers = #tpu.dot_dimension_numbers<[1], [0], [0], [1], [0, 0, 1, 1], [], []>} : vector<10x32xbf16>, vector<32x32xbf16>, vector<10x32xf32> -> vector<10x32xf32>
    %113 = arith.addf %16, %112 : vector<10x32xf32>
    %c0_50 = arith.constant 0 : index
    %c0_51 = arith.constant 0 : index
    %c0_52 = arith.constant 0 : index
    %114 = vector.load %arg14[%c0_50, %c0_51, %c0_52] : memref<2x1x32xf32, #tpu.memory_space<vmem>>, vector<1x1x32xf32>
    %115 = vector.shape_cast %114 : vector<1x1x32xf32> to vector<1x32xf32>
    %116 = vector.broadcast %115 : vector<1x32xf32> to vector<10x32xf32>
    %117 = arith.addf %113, %116 : vector<10x32xf32>
    %c0_53 = arith.constant 0 : index
    %c0_54 = arith.constant 0 : index
    %c0_55 = arith.constant 0 : index
    %118 = vector.load %arg15[%c0_53, %c0_54, %c0_55] : memref<2x1x32xf32, #tpu.memory_space<vmem>>, vector<1x1x32xf32>
    %119 = vector.shape_cast %118 : vector<1x1x32xf32> to vector<1x32xf32>
    %c0_56 = arith.constant 0 : index
    %c0_57 = arith.constant 0 : index
    %c0_58 = arith.constant 0 : index
    %120 = vector.load %arg16[%c0_56, %c0_57, %c0_58] : memref<2x1x32xf32, #tpu.memory_space<vmem>>, vector<1x1x32xf32>
    %121 = vector.shape_cast %120 : vector<1x1x32xf32> to vector<1x32xf32>
    %cst_59 = arith.constant dense<0.000000e+00> : vector<10xf32>
    %122 = vector.multi_reduction <add>, %117, %cst_59 [1] : vector<10x32xf32> to vector<10xf32>
    %123 = vector.shape_cast %122 : vector<10xf32> to vector<10x1xf32>
    %cst_60 = arith.constant 3.200000e+01 : f32
    %124 = vector.broadcast %cst_60 : f32 to vector<10x1xf32>
    %125 = arith.divf %123, %124 : vector<10x1xf32>
    %126 = vector.broadcast %125 : vector<10x1xf32> to vector<10x32xf32>
    %127 = arith.subf %117, %126 : vector<10x32xf32>
    %128 = arith.mulf %127, %127 : vector<10x32xf32>
    %cst_61 = arith.constant dense<0.000000e+00> : vector<10xf32>
    %129 = vector.multi_reduction <add>, %128, %cst_61 [1] : vector<10x32xf32> to vector<10xf32>
    %130 = vector.shape_cast %129 : vector<10xf32> to vector<10x1xf32>
    %cst_62 = arith.constant 3.200000e+01 : f32
    %131 = vector.broadcast %cst_62 : f32 to vector<10x1xf32>
    %132 = arith.divf %130, %131 : vector<10x1xf32>
    %133 = vector.broadcast %125 : vector<10x1xf32> to vector<10x32xf32>
    %134 = arith.subf %117, %133 : vector<10x32xf32>
    %cst_63 = arith.constant 9.99999997E-7 : f32
    %135 = vector.broadcast %cst_63 : f32 to vector<10x1xf32>
    %136 = arith.addf %132, %135 : vector<10x1xf32>
    %137 = math.rsqrt %136 : vector<10x1xf32>
    %138 = vector.broadcast %137 : vector<10x1xf32> to vector<10x32xf32>
    %139 = arith.mulf %134, %138 : vector<10x32xf32>
    %140 = vector.broadcast %119 : vector<1x32xf32> to vector<10x32xf32>
    %141 = arith.mulf %139, %140 : vector<10x32xf32>
    %142 = vector.broadcast %121 : vector<1x32xf32> to vector<10x32xf32>
    %143 = arith.addf %141, %142 : vector<10x32xf32>
    %c0_64 = arith.constant 0 : index
    %c0_65 = arith.constant 0 : index
    %c0_66 = arith.constant 0 : index
    %144 = vector.load %arg17[%c0_64, %c0_65, %c0_66] : memref<2x32x128xbf16, #tpu.memory_space<vmem>>, vector<1x32x128xbf16>
    %145 = vector.shape_cast %144 : vector<1x32x128xbf16> to vector<32x128xbf16>
    %146 = arith.truncf %143 : vector<10x32xf32> to vector<10x32xbf16>
    %cst_67 = arith.constant dense<0.000000e+00> : vector<10x128xf32>
    %147 = tpu.matmul %146, %145, %cst_67 {dimension_numbers = #tpu.dot_dimension_numbers<[1], [0], [0], [1], [0, 0, 1, 1], [], []>} : vector<10x32xbf16>, vector<32x128xbf16>, vector<10x128xf32> -> vector<10x128xf32>
    %c0_68 = arith.constant 0 : index
    %c0_69 = arith.constant 0 : index
    %c0_70 = arith.constant 0 : index
    %148 = vector.load %arg18[%c0_68, %c0_69, %c0_70] : memref<2x1x128xf32, #tpu.memory_space<vmem>>, vector<1x1x128xf32>
    %149 = vector.shape_cast %148 : vector<1x1x128xf32> to vector<1x128xf32>
    %150 = vector.broadcast %149 : vector<1x128xf32> to vector<10x128xf32>
    %151 = arith.addf %147, %150 : vector<10x128xf32>
    %152 = arith.mulf %151, %151 : vector<10x128xf32>
    %153 = arith.mulf %151, %152 : vector<10x128xf32>
    %cst_71 = arith.constant 4.471500e-02 : f32
    %154 = vector.broadcast %cst_71 : f32 to vector<10x128xf32>
    %155 = arith.mulf %154, %153 : vector<10x128xf32>
    %156 = arith.addf %151, %155 : vector<10x128xf32>
    %cst_72 = arith.constant 0.797884583 : f32
    %157 = vector.broadcast %cst_72 : f32 to vector<10x128xf32>
    %158 = arith.mulf %157, %156 : vector<10x128xf32>
    %159 = math.tanh %158 : vector<10x128xf32>
    %cst_73 = arith.constant 1.000000e+00 : f32
    %160 = vector.broadcast %cst_73 : f32 to vector<10x128xf32>
    %161 = arith.addf %160, %159 : vector<10x128xf32>
    %cst_74 = arith.constant 5.000000e-01 : f32
    %162 = vector.broadcast %cst_74 : f32 to vector<10x128xf32>
    %163 = arith.mulf %162, %161 : vector<10x128xf32>
    %164 = arith.mulf %151, %163 : vector<10x128xf32>
    %c0_75 = arith.constant 0 : index
    %c0_76 = arith.constant 0 : index
    %c0_77 = arith.constant 0 : index
    %165 = vector.load %arg19[%c0_75, %c0_76, %c0_77] : memref<2x128x32xbf16, #tpu.memory_space<vmem>>, vector<1x128x32xbf16>
    %166 = vector.shape_cast %165 : vector<1x128x32xbf16> to vector<128x32xbf16>
    %167 = arith.truncf %164 : vector<10x128xf32> to vector<10x128xbf16>
    %cst_78 = arith.constant dense<0.000000e+00> : vector<10x32xf32>
    %168 = tpu.matmul %167, %166, %cst_78 {dimension_numbers = #tpu.dot_dimension_numbers<[1], [0], [0], [1], [0, 0, 1, 1], [], []>} : vector<10x128xbf16>, vector<128x32xbf16>, vector<10x32xf32> -> vector<10x32xf32>
    %169 = arith.addf %117, %168 : vector<10x32xf32>
    %c0_79 = arith.constant 0 : index
    %c0_80 = arith.constant 0 : index
    %c0_81 = arith.constant 0 : index
    %170 = vector.load %arg20[%c0_79, %c0_80, %c0_81] : memref<2x1x32xf32, #tpu.memory_space<vmem>>, vector<1x1x32xf32>
    %171 = vector.shape_cast %170 : vector<1x1x32xf32> to vector<1x32xf32>
    %172 = vector.broadcast %171 : vector<1x32xf32> to vector<10x32xf32>
    %173 = arith.addf %169, %172 : vector<10x32xf32>
    %c1 = arith.constant 1 : index
    %c0_82 = arith.constant 0 : index
    %c0_83 = arith.constant 0 : index
    %174 = vector.load %arg5[%c1, %c0_82, %c0_83] : memref<2x1x32xf32, #tpu.memory_space<vmem>>, vector<1x1x32xf32>
    %175 = vector.shape_cast %174 : vector<1x1x32xf32> to vector<1x32xf32>
    %c1_84 = arith.constant 1 : index
    %c0_85 = arith.constant 0 : index
    %c0_86 = arith.constant 0 : index
    %176 = vector.load %arg6[%c1_84, %c0_85, %c0_86] : memref<2x1x32xf32, #tpu.memory_space<vmem>>, vector<1x1x32xf32>
    %177 = vector.shape_cast %176 : vector<1x1x32xf32> to vector<1x32xf32>
    %cst_87 = arith.constant dense<0.000000e+00> : vector<10xf32>
    %178 = vector.multi_reduction <add>, %173, %cst_87 [1] : vector<10x32xf32> to vector<10xf32>
    %179 = vector.shape_cast %178 : vector<10xf32> to vector<10x1xf32>
    %cst_88 = arith.constant 3.200000e+01 : f32
    %180 = vector.broadcast %cst_88 : f32 to vector<10x1xf32>
    %181 = arith.divf %179, %180 : vector<10x1xf32>
    %182 = vector.broadcast %181 : vector<10x1xf32> to vector<10x32xf32>
    %183 = arith.subf %173, %182 : vector<10x32xf32>
    %184 = arith.mulf %183, %183 : vector<10x32xf32>
    %cst_89 = arith.constant dense<0.000000e+00> : vector<10xf32>
    %185 = vector.multi_reduction <add>, %184, %cst_89 [1] : vector<10x32xf32> to vector<10xf32>
    %186 = vector.shape_cast %185 : vector<10xf32> to vector<10x1xf32>
    %cst_90 = arith.constant 3.200000e+01 : f32
    %187 = vector.broadcast %cst_90 : f32 to vector<10x1xf32>
    %188 = arith.divf %186, %187 : vector<10x1xf32>
    %189 = vector.broadcast %181 : vector<10x1xf32> to vector<10x32xf32>
    %190 = arith.subf %173, %189 : vector<10x32xf32>
    %cst_91 = arith.constant 9.99999997E-7 : f32
    %191 = vector.broadcast %cst_91 : f32 to vector<10x1xf32>
    %192 = arith.addf %188, %191 : vector<10x1xf32>
    %193 = math.rsqrt %192 : vector<10x1xf32>
    %194 = vector.broadcast %193 : vector<10x1xf32> to vector<10x32xf32>
    %195 = arith.mulf %190, %194 : vector<10x32xf32>
    %196 = vector.broadcast %175 : vector<1x32xf32> to vector<10x32xf32>
    %197 = arith.mulf %195, %196 : vector<10x32xf32>
    %198 = vector.broadcast %177 : vector<1x32xf32> to vector<10x32xf32>
    %199 = arith.addf %197, %198 : vector<10x32xf32>
    %c1_92 = arith.constant 1 : index
    %c0_93 = arith.constant 0 : index
    %c0_94 = arith.constant 0 : index
    %200 = vector.load %arg7[%c1_92, %c0_93, %c0_94] : memref<2x32x32xbf16, #tpu.memory_space<vmem>>, vector<1x32x32xbf16>
    %201 = vector.shape_cast %200 : vector<1x32x32xbf16> to vector<32x32xbf16>
    %202 = arith.truncf %199 : vector<10x32xf32> to vector<10x32xbf16>
    %cst_95 = arith.constant dense<0.000000e+00> : vector<10x32xf32>
    %203 = tpu.matmul %202, %201, %cst_95 {dimension_numbers = #tpu.dot_dimension_numbers<[1], [0], [0], [1], [0, 0, 1, 1], [], []>} : vector<10x32xbf16>, vector<32x32xbf16>, vector<10x32xf32> -> vector<10x32xf32>
    %c1_96 = arith.constant 1 : index
    %c0_97 = arith.constant 0 : index
    %c0_98 = arith.constant 0 : index
    %204 = vector.load %arg8[%c1_96, %c0_97, %c0_98] : memref<2x1x32xf32, #tpu.memory_space<vmem>>, vector<1x1x32xf32>
    %205 = vector.shape_cast %204 : vector<1x1x32xf32> to vector<1x32xf32>
    %206 = vector.broadcast %205 : vector<1x32xf32> to vector<10x32xf32>
    %207 = arith.addf %203, %206 : vector<10x32xf32>
    %208 = vector.shape_cast %207 : vector<10x32xf32> to vector<2x5x32xf32>
    %c1_99 = arith.constant 1 : index
    %c0_100 = arith.constant 0 : index
    %c0_101 = arith.constant 0 : index
    %209 = vector.load %arg9[%c1_99, %c0_100, %c0_101] : memref<2x32x32xbf16, #tpu.memory_space<vmem>>, vector<1x32x32xbf16>
    %210 = vector.shape_cast %209 : vector<1x32x32xbf16> to vector<32x32xbf16>
    %211 = arith.truncf %199 : vector<10x32xf32> to vector<10x32xbf16>
    %cst_102 = arith.constant dense<0.000000e+00> : vector<10x32xf32>
    %212 = tpu.matmul %211, %210, %cst_102 {dimension_numbers = #tpu.dot_dimension_numbers<[1], [0], [0], [1], [0, 0, 1, 1], [], []>} : vector<10x32xbf16>, vector<32x32xbf16>, vector<10x32xf32> -> vector<10x32xf32>
    %c1_103 = arith.constant 1 : index
    %c0_104 = arith.constant 0 : index
    %c0_105 = arith.constant 0 : index
    %213 = vector.load %arg10[%c1_103, %c0_104, %c0_105] : memref<2x1x32xf32, #tpu.memory_space<vmem>>, vector<1x1x32xf32>
    %214 = vector.shape_cast %213 : vector<1x1x32xf32> to vector<1x32xf32>
    %215 = vector.broadcast %214 : vector<1x32xf32> to vector<10x32xf32>
    %216 = arith.addf %212, %215 : vector<10x32xf32>
    %217 = vector.shape_cast %216 : vector<10x32xf32> to vector<2x5x32xf32>
    %c1_106 = arith.constant 1 : index
    %c0_107 = arith.constant 0 : index
    %c0_108 = arith.constant 0 : index
    %218 = vector.load %arg11[%c1_106, %c0_107, %c0_108] : memref<2x32x32xbf16, #tpu.memory_space<vmem>>, vector<1x32x32xbf16>
    %219 = vector.shape_cast %218 : vector<1x32x32xbf16> to vector<32x32xbf16>
    %220 = arith.truncf %199 : vector<10x32xf32> to vector<10x32xbf16>
    %cst_109 = arith.constant dense<0.000000e+00> : vector<10x32xf32>
    %221 = tpu.matmul %220, %219, %cst_109 {dimension_numbers = #tpu.dot_dimension_numbers<[1], [0], [0], [1], [0, 0, 1, 1], [], []>} : vector<10x32xbf16>, vector<32x32xbf16>, vector<10x32xf32> -> vector<10x32xf32>
    %c1_110 = arith.constant 1 : index
    %c0_111 = arith.constant 0 : index
    %c0_112 = arith.constant 0 : index
    %222 = vector.load %arg12[%c1_110, %c0_111, %c0_112] : memref<2x1x32xf32, #tpu.memory_space<vmem>>, vector<1x1x32xf32>
    %223 = vector.shape_cast %222 : vector<1x1x32xf32> to vector<1x32xf32>
    %224 = vector.broadcast %223 : vector<1x32xf32> to vector<10x32xf32>
    %225 = arith.addf %221, %224 : vector<10x32xf32>
    %226 = vector.shape_cast %225 : vector<10x32xf32> to vector<2x5x32xf32>
    %227 = vector.extract_strided_slice %208 {offsets = [0, 0, 0], sizes = [2, 5, 8], strides = [1, 1, 1]} : vector<2x5x32xf32> to vector<2x5x8xf32>
    %228 = vector.extract_strided_slice %208 {offsets = [0, 0, 8], sizes = [2, 5, 8], strides = [1, 1, 1]} : vector<2x5x32xf32> to vector<2x5x8xf32>
    %229 = vector.extract_strided_slice %208 {offsets = [0, 0, 16], sizes = [2, 5, 8], strides = [1, 1, 1]} : vector<2x5x32xf32> to vector<2x5x8xf32>
    %230 = vector.extract_strided_slice %208 {offsets = [0, 0, 24], sizes = [2, 5, 8], strides = [1, 1, 1]} : vector<2x5x32xf32> to vector<2x5x8xf32>
    %231 = tpu.concatenate %227, %228, %229, %230 in 0 : vector<2x5x8xf32>, vector<2x5x8xf32>, vector<2x5x8xf32>, vector<2x5x8xf32> -> vector<8x5x8xf32>
    %232 = vector.extract_strided_slice %217 {offsets = [0, 0, 0], sizes = [2, 5, 8], strides = [1, 1, 1]} : vector<2x5x32xf32> to vector<2x5x8xf32>
    %233 = vector.extract_strided_slice %217 {offsets = [0, 0, 8], sizes = [2, 5, 8], strides = [1, 1, 1]} : vector<2x5x32xf32> to vector<2x5x8xf32>
    %234 = vector.extract_strided_slice %217 {offsets = [0, 0, 16], sizes = [2, 5, 8], strides = [1, 1, 1]} : vector<2x5x32xf32> to vector<2x5x8xf32>
    %235 = vector.extract_strided_slice %217 {offsets = [0, 0, 24], sizes = [2, 5, 8], strides = [1, 1, 1]} : vector<2x5x32xf32> to vector<2x5x8xf32>
    %236 = tpu.concatenate %232, %233, %234, %235 in 0 : vector<2x5x8xf32>, vector<2x5x8xf32>, vector<2x5x8xf32>, vector<2x5x8xf32> -> vector<8x5x8xf32>
    %237 = vector.extract_strided_slice %226 {offsets = [0, 0, 0], sizes = [2, 5, 8], strides = [1, 1, 1]} : vector<2x5x32xf32> to vector<2x5x8xf32>
    %238 = vector.extract_strided_slice %226 {offsets = [0, 0, 8], sizes = [2, 5, 8], strides = [1, 1, 1]} : vector<2x5x32xf32> to vector<2x5x8xf32>
    %239 = vector.extract_strided_slice %226 {offsets = [0, 0, 16], sizes = [2, 5, 8], strides = [1, 1, 1]} : vector<2x5x32xf32> to vector<2x5x8xf32>
    %240 = vector.extract_strided_slice %226 {offsets = [0, 0, 24], sizes = [2, 5, 8], strides = [1, 1, 1]} : vector<2x5x32xf32> to vector<2x5x8xf32>
    %241 = tpu.concatenate %237, %238, %239, %240 in 0 : vector<2x5x8xf32>, vector<2x5x8xf32>, vector<2x5x8xf32>, vector<2x5x8xf32> -> vector<8x5x8xf32>
    %242 = arith.truncf %231 : vector<8x5x8xf32> to vector<8x5x8xbf16>
    %243 = arith.truncf %236 : vector<8x5x8xf32> to vector<8x5x8xbf16>
    "tpu.trace_start"() <{level = 10 : i32, message = "nqd,nkd->nqk"}> : () -> ()
    %cst_113 = arith.constant dense<0.000000e+00> : vector<8x5x5xf32>
    %244 = tpu.matmul %242, %243, %cst_113 {dimension_numbers = #tpu.dot_dimension_numbers<[2], [2], [1], [1], [0, 0, 0, 1, 1, 1], [0], [0]>} : vector<8x5x8xbf16>, vector<8x5x8xbf16>, vector<8x5x5xf32> -> vector<8x5x5xf32>
    "tpu.trace_stop"() : () -> ()
    %cst_114 = arith.constant 0.353553385 : f32
    %245 = vector.broadcast %cst_114 : f32 to vector<8x5x5xf32>
    %246 = arith.mulf %244, %245 : vector<8x5x5xf32>
    %cst_115 = arith.constant dense<0xFF800000> : vector<8x5xf32>
    %247 = vector.multi_reduction <maximumf>, %246, %cst_115 [2] : vector<8x5x5xf32> to vector<8x5xf32>
    %248 = vector.shape_cast %247 : vector<8x5xf32> to vector<8x5x1xf32>
    %249 = vector.broadcast %248 : vector<8x5x1xf32> to vector<8x5x5xf32>
    %250 = arith.subf %246, %249 : vector<8x5x5xf32>
    %251 = math.exp %250 : vector<8x5x5xf32>
    %cst_116 = arith.constant dense<0.000000e+00> : vector<8x5xf32>
    %252 = vector.multi_reduction <add>, %251, %cst_116 [2] : vector<8x5x5xf32> to vector<8x5xf32>
    %253 = vector.shape_cast %252 : vector<8x5xf32> to vector<8x5x1xf32>
    %254 = tpu.reciprocal %253 {approx = true} : vector<8x5x1xf32> -> vector<8x5x1xf32>
    %255 = vector.broadcast %254 : vector<8x5x1xf32> to vector<8x5x5xf32>
    %256 = arith.mulf %251, %255 : vector<8x5x5xf32>
    %257 = arith.truncf %256 : vector<8x5x5xf32> to vector<8x5x5xbf16>
    %258 = arith.truncf %241 : vector<8x5x8xf32> to vector<8x5x8xbf16>
    "tpu.trace_start"() <{level = 10 : i32, message = "nqk,nkd->nqd"}> : () -> ()
    %cst_117 = arith.constant dense<0.000000e+00> : vector<8x5x8xf32>
    %259 = tpu.matmul %257, %258, %cst_117 {dimension_numbers = #tpu.dot_dimension_numbers<[2], [1], [1], [2], [0, 0, 0, 1, 1, 2], [0], [0]>} : vector<8x5x5xbf16>, vector<8x5x8xbf16>, vector<8x5x8xf32> -> vector<8x5x8xf32>
    "tpu.trace_stop"() : () -> ()
    %260 = vector.extract_strided_slice %259 {offsets = [0, 0, 0], sizes = [2, 5, 8], strides = [1, 1, 1]} : vector<8x5x8xf32> to vector<2x5x8xf32>
    %261 = vector.extract_strided_slice %259 {offsets = [2, 0, 0], sizes = [2, 5, 8], strides = [1, 1, 1]} : vector<8x5x8xf32> to vector<2x5x8xf32>
    %262 = vector.extract_strided_slice %259 {offsets = [4, 0, 0], sizes = [2, 5, 8], strides = [1, 1, 1]} : vector<8x5x8xf32> to vector<2x5x8xf32>
    %263 = vector.extract_strided_slice %259 {offsets = [6, 0, 0], sizes = [2, 5, 8], strides = [1, 1, 1]} : vector<8x5x8xf32> to vector<2x5x8xf32>
    %264 = tpu.concatenate %260, %261, %262, %263 in 2 : vector<2x5x8xf32>, vector<2x5x8xf32>, vector<2x5x8xf32>, vector<2x5x8xf32> -> vector<2x5x32xf32>
    %265 = vector.shape_cast %264 : vector<2x5x32xf32> to vector<10x32xf32>
    %c1_118 = arith.constant 1 : index
    %c0_119 = arith.constant 0 : index
    %c0_120 = arith.constant 0 : index
    %266 = vector.load %arg13[%c1_118, %c0_119, %c0_120] : memref<2x32x32xbf16, #tpu.memory_space<vmem>>, vector<1x32x32xbf16>
    %267 = vector.shape_cast %266 : vector<1x32x32xbf16> to vector<32x32xbf16>
    %268 = arith.truncf %265 : vector<10x32xf32> to vector<10x32xbf16>
    %cst_121 = arith.constant dense<0.000000e+00> : vector<10x32xf32>
    %269 = tpu.matmul %268, %267, %cst_121 {dimension_numbers = #tpu.dot_dimension_numbers<[1], [0], [0], [1], [0, 0, 1, 1], [], []>} : vector<10x32xbf16>, vector<32x32xbf16>, vector<10x32xf32> -> vector<10x32xf32>
    %270 = arith.addf %173, %269 : vector<10x32xf32>
    %c1_122 = arith.constant 1 : index
    %c0_123 = arith.constant 0 : index
    %c0_124 = arith.constant 0 : index
    %271 = vector.load %arg14[%c1_122, %c0_123, %c0_124] : memref<2x1x32xf32, #tpu.memory_space<vmem>>, vector<1x1x32xf32>
    %272 = vector.shape_cast %271 : vector<1x1x32xf32> to vector<1x32xf32>
    %273 = vector.broadcast %272 : vector<1x32xf32> to vector<10x32xf32>
    %274 = arith.addf %270, %273 : vector<10x32xf32>
    %c1_125 = arith.constant 1 : index
    %c0_126 = arith.constant 0 : index
    %c0_127 = arith.constant 0 : index
    %275 = vector.load %arg15[%c1_125, %c0_126, %c0_127] : memref<2x1x32xf32, #tpu.memory_space<vmem>>, vector<1x1x32xf32>
    %276 = vector.shape_cast %275 : vector<1x1x32xf32> to vector<1x32xf32>
    %c1_128 = arith.constant 1 : index
    %c0_129 = arith.constant 0 : index
    %c0_130 = arith.constant 0 : index
    %277 = vector.load %arg16[%c1_128, %c0_129, %c0_130] : memref<2x1x32xf32, #tpu.memory_space<vmem>>, vector<1x1x32xf32>
    %278 = vector.shape_cast %277 : vector<1x1x32xf32> to vector<1x32xf32>
    %cst_131 = arith.constant dense<0.000000e+00> : vector<10xf32>
    %279 = vector.multi_reduction <add>, %274, %cst_131 [1] : vector<10x32xf32> to vector<10xf32>
    %280 = vector.shape_cast %279 : vector<10xf32> to vector<10x1xf32>
    %cst_132 = arith.constant 3.200000e+01 : f32
    %281 = vector.broadcast %cst_132 : f32 to vector<10x1xf32>
    %282 = arith.divf %280, %281 : vector<10x1xf32>
    %283 = vector.broadcast %282 : vector<10x1xf32> to vector<10x32xf32>
    %284 = arith.subf %274, %283 : vector<10x32xf32>
    %285 = arith.mulf %284, %284 : vector<10x32xf32>
    %cst_133 = arith.constant dense<0.000000e+00> : vector<10xf32>
    %286 = vector.multi_reduction <add>, %285, %cst_133 [1] : vector<10x32xf32> to vector<10xf32>
    %287 = vector.shape_cast %286 : vector<10xf32> to vector<10x1xf32>
    %cst_134 = arith.constant 3.200000e+01 : f32
    %288 = vector.broadcast %cst_134 : f32 to vector<10x1xf32>
    %289 = arith.divf %287, %288 : vector<10x1xf32>
    %290 = vector.broadcast %282 : vector<10x1xf32> to vector<10x32xf32>
    %291 = arith.subf %274, %290 : vector<10x32xf32>
    %cst_135 = arith.constant 9.99999997E-7 : f32
    %292 = vector.broadcast %cst_135 : f32 to vector<10x1xf32>
    %293 = arith.addf %289, %292 : vector<10x1xf32>
    %294 = math.rsqrt %293 : vector<10x1xf32>
    %295 = vector.broadcast %294 : vector<10x1xf32> to vector<10x32xf32>
    %296 = arith.mulf %291, %295 : vector<10x32xf32>
    %297 = vector.broadcast %276 : vector<1x32xf32> to vector<10x32xf32>
    %298 = arith.mulf %296, %297 : vector<10x32xf32>
    %299 = vector.broadcast %278 : vector<1x32xf32> to vector<10x32xf32>
    %300 = arith.addf %298, %299 : vector<10x32xf32>
    %c1_136 = arith.constant 1 : index
    %c0_137 = arith.constant 0 : index
    %c0_138 = arith.constant 0 : index
    %301 = vector.load %arg17[%c1_136, %c0_137, %c0_138] : memref<2x32x128xbf16, #tpu.memory_space<vmem>>, vector<1x32x128xbf16>
    %302 = vector.shape_cast %301 : vector<1x32x128xbf16> to vector<32x128xbf16>
    %303 = arith.truncf %300 : vector<10x32xf32> to vector<10x32xbf16>
    %cst_139 = arith.constant dense<0.000000e+00> : vector<10x128xf32>
    %304 = tpu.matmul %303, %302, %cst_139 {dimension_numbers = #tpu.dot_dimension_numbers<[1], [0], [0], [1], [0, 0, 1, 1], [], []>} : vector<10x32xbf16>, vector<32x128xbf16>, vector<10x128xf32> -> vector<10x128xf32>
    %c1_140 = arith.constant 1 : index
    %c0_141 = arith.constant 0 : index
    %c0_142 = arith.constant 0 : index
    %305 = vector.load %arg18[%c1_140, %c0_141, %c0_142] : memref<2x1x128xf32, #tpu.memory_space<vmem>>, vector<1x1x128xf32>
    %306 = vector.shape_cast %305 : vector<1x1x128xf32> to vector<1x128xf32>
    %307 = vector.broadcast %306 : vector<1x128xf32> to vector<10x128xf32>
    %308 = arith.addf %304, %307 : vector<10x128xf32>
    %309 = arith.mulf %308, %308 : vector<10x128xf32>
    %310 = arith.mulf %308, %309 : vector<10x128xf32>
    %cst_143 = arith.constant 4.471500e-02 : f32
    %311 = vector.broadcast %cst_143 : f32 to vector<10x128xf32>
    %312 = arith.mulf %311, %310 : vector<10x128xf32>
    %313 = arith.addf %308, %312 : vector<10x128xf32>
    %cst_144 = arith.constant 0.797884583 : f32
    %314 = vector.broadcast %cst_144 : f32 to vector<10x128xf32>
    %315 = arith.mulf %314, %313 : vector<10x128xf32>
    %316 = math.tanh %315 : vector<10x128xf32>
    %cst_145 = arith.constant 1.000000e+00 : f32
    %317 = vector.broadcast %cst_145 : f32 to vector<10x128xf32>
    %318 = arith.addf %317, %316 : vector<10x128xf32>
    %cst_146 = arith.constant 5.000000e-01 : f32
    %319 = vector.broadcast %cst_146 : f32 to vector<10x128xf32>
    %320 = arith.mulf %319, %318 : vector<10x128xf32>
    %321 = arith.mulf %308, %320 : vector<10x128xf32>
    %c1_147 = arith.constant 1 : index
    %c0_148 = arith.constant 0 : index
    %c0_149 = arith.constant 0 : index
    %322 = vector.load %arg19[%c1_147, %c0_148, %c0_149] : memref<2x128x32xbf16, #tpu.memory_space<vmem>>, vector<1x128x32xbf16>
    %323 = vector.shape_cast %322 : vector<1x128x32xbf16> to vector<128x32xbf16>
    %324 = arith.truncf %321 : vector<10x128xf32> to vector<10x128xbf16>
    %cst_150 = arith.constant dense<0.000000e+00> : vector<10x32xf32>
    %325 = tpu.matmul %324, %323, %cst_150 {dimension_numbers = #tpu.dot_dimension_numbers<[1], [0], [0], [1], [0, 0, 1, 1], [], []>} : vector<10x128xbf16>, vector<128x32xbf16>, vector<10x32xf32> -> vector<10x32xf32>
    %326 = arith.addf %274, %325 : vector<10x32xf32>
    %c1_151 = arith.constant 1 : index
    %c0_152 = arith.constant 0 : index
    %c0_153 = arith.constant 0 : index
    %327 = vector.load %arg20[%c1_151, %c0_152, %c0_153] : memref<2x1x32xf32, #tpu.memory_space<vmem>>, vector<1x1x32xf32>
    %328 = vector.shape_cast %327 : vector<1x1x32xf32> to vector<1x32xf32>
    %329 = vector.broadcast %328 : vector<1x32xf32> to vector<10x32xf32>
    %330 = arith.addf %326, %329 : vector<10x32xf32>
    %331 = vector.extract_strided_slice %330 {offsets = [0, 0], sizes = [1, 32], strides = [1, 1]} : vector<10x32xf32> to vector<1x32xf32>
    %332 = vector.extract_strided_slice %330 {offsets = [5, 0], sizes = [1, 32], strides = [1, 1]} : vector<10x32xf32> to vector<1x32xf32>
    %333 = tpu.concatenate %331, %332 in 0 : vector<1x32xf32>, vector<1x32xf32> -> vector<2x32xf32>
    %c0_154 = arith.constant 0 : index
    %c0_155 = arith.constant 0 : index
    %334 = vector.load %arg21[%c0_154, %c0_155] : memref<1x32xf32, #tpu.memory_space<vmem>>, vector<1x32xf32>
    %c0_156 = arith.constant 0 : index
    %c0_157 = arith.constant 0 : index
    %335 = vector.load %arg22[%c0_156, %c0_157] : memref<1x32xf32, #tpu.memory_space<vmem>>, vector<1x32xf32>
    %cst_158 = arith.constant dense<0.000000e+00> : vector<2xf32>
    %336 = vector.multi_reduction <add>, %333, %cst_158 [1] : vector<2x32xf32> to vector<2xf32>
    %337 = vector.shape_cast %336 : vector<2xf32> to vector<2x1xf32>
    %cst_159 = arith.constant 3.200000e+01 : f32
    %338 = vector.broadcast %cst_159 : f32 to vector<2x1xf32>
    %339 = arith.divf %337, %338 : vector<2x1xf32>
    %340 = vector.broadcast %339 : vector<2x1xf32> to vector<2x32xf32>
    %341 = arith.subf %333, %340 : vector<2x32xf32>
    %342 = arith.mulf %341, %341 : vector<2x32xf32>
    %cst_160 = arith.constant dense<0.000000e+00> : vector<2xf32>
    %343 = vector.multi_reduction <add>, %342, %cst_160 [1] : vector<2x32xf32> to vector<2xf32>
    %344 = vector.shape_cast %343 : vector<2xf32> to vector<2x1xf32>
    %cst_161 = arith.constant 3.200000e+01 : f32
    %345 = vector.broadcast %cst_161 : f32 to vector<2x1xf32>
    %346 = arith.divf %344, %345 : vector<2x1xf32>
    %347 = vector.broadcast %339 : vector<2x1xf32> to vector<2x32xf32>
    %348 = arith.subf %333, %347 : vector<2x32xf32>
    %cst_162 = arith.constant 9.99999997E-7 : f32
    %349 = vector.broadcast %cst_162 : f32 to vector<2x1xf32>
    %350 = arith.addf %346, %349 : vector<2x1xf32>
    %351 = math.rsqrt %350 : vector<2x1xf32>
    %352 = vector.broadcast %351 : vector<2x1xf32> to vector<2x32xf32>
    %353 = arith.mulf %348, %352 : vector<2x32xf32>
    %354 = vector.broadcast %334 : vector<1x32xf32> to vector<2x32xf32>
    %355 = arith.mulf %353, %354 : vector<2x32xf32>
    %356 = vector.broadcast %335 : vector<1x32xf32> to vector<2x32xf32>
    %357 = arith.addf %355, %356 : vector<2x32xf32>
    %c0_163 = arith.constant 0 : index
    %c0_164 = arith.constant 0 : index
    %358 = vector.load %arg23[%c0_163, %c0_164] : memref<32x32xbf16, #tpu.memory_space<vmem>>, vector<32x32xbf16>
    %359 = arith.truncf %357 : vector<2x32xf32> to vector<2x32xbf16>
    %cst_165 = arith.constant dense<0.000000e+00> : vector<2x32xf32>
    %360 = tpu.matmul %359, %358, %cst_165 {dimension_numbers = #tpu.dot_dimension_numbers<[1], [0], [0], [1], [0, 0, 1, 1], [], []>} : vector<2x32xbf16>, vector<32x32xbf16>, vector<2x32xf32> -> vector<2x32xf32>
    %c0_166 = arith.constant 0 : index
    %c0_167 = arith.constant 0 : index
    %361 = vector.load %arg24[%c0_166, %c0_167] : memref<1x32xf32, #tpu.memory_space<vmem>>, vector<1x32xf32>
    %362 = vector.broadcast %361 : vector<1x32xf32> to vector<2x32xf32>
    %363 = arith.addf %360, %362 : vector<2x32xf32>
    %cst_168 = arith.constant 0.000000e+00 : f32
    %364 = vector.broadcast %cst_168 : f32 to vector<2x32xf32>
    %365 = arith.maximumf %363, %364 : vector<2x32xf32>
    %c0_169 = arith.constant 0 : index
    %c0_170 = arith.constant 0 : index
    %366 = vector.load %arg25[%c0_169, %c0_170] : memref<32x32xbf16, #tpu.memory_space<vmem>>, vector<32x32xbf16>
    %367 = arith.truncf %365 : vector<2x32xf32> to vector<2x32xbf16>
    %cst_171 = arith.constant dense<0.000000e+00> : vector<2x32xf32>
    %368 = tpu.matmul %367, %366, %cst_171 {dimension_numbers = #tpu.dot_dimension_numbers<[1], [0], [0], [1], [0, 0, 1, 1], [], []>} : vector<2x32xbf16>, vector<32x32xbf16>, vector<2x32xf32> -> vector<2x32xf32>
    %c0_172 = arith.constant 0 : index
    %c0_173 = arith.constant 0 : index
    %369 = vector.load %arg26[%c0_172, %c0_173] : memref<1x32xf32, #tpu.memory_space<vmem>>, vector<1x32xf32>
    %370 = vector.broadcast %369 : vector<1x32xf32> to vector<2x32xf32>
    %371 = arith.addf %368, %370 : vector<2x32xf32>
    %c0_174 = arith.constant 0 : index
    %c0_175 = arith.constant 0 : index
    %372 = vector.load %arg27[%c0_174, %c0_175] : memref<32x2xbf16, #tpu.memory_space<vmem>>, vector<32x2xbf16>
    %373 = arith.truncf %371 : vector<2x32xf32> to vector<2x32xbf16>
    %cst_176 = arith.constant dense<0.000000e+00> : vector<2x2xf32>
    %374 = tpu.matmul %373, %372, %cst_176 {dimension_numbers = #tpu.dot_dimension_numbers<[1], [0], [0], [1], [0, 0, 1, 1], [], []>} : vector<2x32xbf16>, vector<32x2xbf16>, vector<2x2xf32> -> vector<2x2xf32>
    %c0_177 = arith.constant 0 : index
    %c0_178 = arith.constant 0 : index
    %375 = vector.load %arg28[%c0_177, %c0_178] : memref<1x2xf32, #tpu.memory_space<vmem>>, vector<1x2xf32>
    %376 = vector.broadcast %375 : vector<1x2xf32> to vector<2x2xf32>
    %377 = arith.addf %374, %376 : vector<2x2xf32>
    %cst_179 = arith.constant 0.000000e+00 : f32
    %378 = vector.broadcast %cst_179 : f32 to vector<2x2xf32>
    %379 = arith.maximumf %377, %378 : vector<2x2xf32>
    %c0_180 = arith.constant 0 : index
    %c0_181 = arith.constant 0 : index
    %380 = vector.load %arg29[%c0_180, %c0_181] : memref<2x32xbf16, #tpu.memory_space<vmem>>, vector<2x32xbf16>
    %381 = arith.truncf %379 : vector<2x2xf32> to vector<2x2xbf16>
    %cst_182 = arith.constant dense<0.000000e+00> : vector<2x32xf32>
    %382 = tpu.matmul %381, %380, %cst_182 {dimension_numbers = #tpu.dot_dimension_numbers<[1], [0], [0], [1], [0, 0, 1, 1], [], []>} : vector<2x2xbf16>, vector<2x32xbf16>, vector<2x32xf32> -> vector<2x32xf32>
    %c0_183 = arith.constant 0 : index
    %c0_184 = arith.constant 0 : index
    %383 = vector.load %arg30[%c0_183, %c0_184] : memref<1x32xf32, #tpu.memory_space<vmem>>, vector<1x32xf32>
    %384 = vector.broadcast %383 : vector<1x32xf32> to vector<2x32xf32>
    %385 = arith.addf %382, %384 : vector<2x32xf32>
    %386 = arith.negf %385 : vector<2x32xf32>
    %387 = math.exp %386 : vector<2x32xf32>
    %cst_185 = arith.constant 1.000000e+00 : f32
    %388 = vector.broadcast %cst_185 : f32 to vector<2x32xf32>
    %389 = arith.addf %388, %387 : vector<2x32xf32>
    %390 = arith.divf %388, %389 : vector<2x32xf32>
    %391 = arith.mulf %371, %390 : vector<2x32xf32>
    %cst_186 = arith.constant 0.000000e+00 : f32
    %392 = vector.broadcast %cst_186 : f32 to vector<2x96xf32>
    %393 = tpu.concatenate %391, %392 in 1 : vector<2x32xf32>, vector<2x96xf32> -> vector<2x128xf32>
    %cst_187 = arith.constant 0.000000e+00 : f32
    %394 = vector.broadcast %cst_187 : f32 to vector<6x128xf32>
    %395 = tpu.concatenate %393, %394 in 0 : vector<2x128xf32>, vector<6x128xf32> -> vector<8x128xf32>
    %c0_188 = arith.constant 0 : index
    %c0_189 = arith.constant 0 : index
    %396 = vector.load %arg31[%c0_188, %c0_189] : memref<8x128xf32, #tpu.memory_space<vmem>>, vector<8x128xf32>
    tpu.vector_store %arg31[%c0_188, %c0_189], %395 {strides = array<i32>} : memref<8x128xf32, #tpu.memory_space<vmem>>, vector<8x128xf32>,
    return
  }
}

</mosaic_0001>

<llo_original>
// kernel: sp_simclr_forward.1
$region0: #{sp_simclr_forward.1}
  #allocation0 [shape = 'u32[]', space=smem, size = 0x4, offset = 0x4, fixed_abs, tag = 'smem constant byte address 0x4 - core index']
  #allocation1 [shape = 'u32[72,128]{1,0:T(1,128)}', space=vmem, size = 0x9000, scoped, tag = 'internal scratch']
  %s0 = inlined_call_operand.smem [shape: u32[32], index: -1, kind: input, shape index: {}]
  %s1 = sld [smem:[%s0]]
  %s2 = scalar_lea.smem %s0, 1
  %s3 = sld [smem:[%s2]]
  %s4 = scalar_lea.smem %s0, 2
  %s5 = sld [smem:[%s4]]
  %s6 = scalar_lea.smem %s0, 3
  %s7 = sld [smem:[%s6]]
  %s8 = scalar_lea.smem %s0, 4
  %s9 = sld [smem:[%s8]]
  %s10 = scalar_lea.smem %s0, 5
  %s11 = sld [smem:[%s10]]
  %s12 = scalar_lea.smem %s0, 6
  %s13 = sld [smem:[%s12]]
  %s14 = scalar_lea.smem %s0, 7
  %s15 = sld [smem:[%s14]]
  %s16 = scalar_lea.smem %s0, 8
  %s17 = sld [smem:[%s16]]
  %s18 = scalar_lea.smem %s0, 9
  %s19 = sld [smem:[%s18]]
  %s20 = scalar_lea.smem %s0, 10
  %s21 = sld [smem:[%s20]]
  %s22 = scalar_lea.smem %s0, 11
  %s23 = sld [smem:[%s22]]
  %s24 = scalar_lea.smem %s0, 12
  %s25 = sld [smem:[%s24]]
  %s26 = scalar_lea.smem %s0, 13
  %s27 = sld [smem:[%s26]]
  %s28 = scalar_lea.smem %s0, 14
  %s29 = sld [smem:[%s28]]
  %s30 = scalar_lea.smem %s0, 15
  %s31 = sld [smem:[%s30]]
  %s32 = scalar_lea.smem %s0, 16
  %s33 = sld [smem:[%s32]]
  %s34 = scalar_lea.smem %s0, 17
  %s35 = sld [smem:[%s34]]
  %s36 = scalar_lea.smem %s0, 18
  %s37 = sld [smem:[%s36]]
  %s38 = scalar_lea.smem %s0, 19
  %s39 = sld [smem:[%s38]]
  %s40 = scalar_lea.smem %s0, 20
  %s41 = sld [smem:[%s40]]
  %s42 = scalar_lea.smem %s0, 21
  %s43 = sld [smem:[%s42]]
  %s44 = scalar_lea.smem %s0, 22
  %s45 = sld [smem:[%s44]]
  %s46 = scalar_lea.smem %s0, 23
  %s47 = sld [smem:[%s46]]
  %s48 = scalar_lea.smem %s0, 24
  %s49 = sld [smem:[%s48]]
  %s50 = scalar_lea.smem %s0, 25
  %s51 = sld [smem:[%s50]]
  %s52 = scalar_lea.smem %s0, 26
  %s53 = sld [smem:[%s52]]
  %s54 = scalar_lea.smem %s0, 27
  %s55 = sld [smem:[%s54]]
  %s56 = scalar_lea.smem %s0, 28
  %s57 = sld [smem:[%s56]]
  %s58 = scalar_lea.smem %s0, 29
  %s59 = sld [smem:[%s58]]
  %s60 = scalar_lea.smem %s0, 30
  %s61 = sld [smem:[%s60]]
  %s62 = scalar_lea.smem %s0, 31
  %s63 = sld [smem:[%s62]]
  %s64 = sld [smem:[#allocation0]]
  $region134: #{sp_simclr_forward.1} parent=0
    _
  %s66 = ssub.s32 1, %s64
  %s67 = scalar_select 0, %s66, %s64
  // Predicated region
  $region2: #{sp_simclr_forward.1} parent=0 // pred_check
    _
  $region3: #{sp_simclr_forward.1} parent=0 // pred_check_branch
    %69 = sbr.rel (0) target = $region5
  $region4: #{sp_simclr_forward.1} parent=0 // pred_region
    _
  $region5: #{sp_simclr_forward.1} parent=0 // pred_fallthru
    _
  // Predicated region
  $region6: #{sp_simclr_forward.1} parent=0 // pred_check
    _
  $region7: #{sp_simclr_forward.1} parent=0 // pred_check_branch
    %71 = sbr.rel (0) target = $region9
  $region8: #{sp_simclr_forward.1} parent=0 // pred_region
    _
  $region9: #{sp_simclr_forward.1} parent=0 // pred_fallthru
    _
  // Predicated region
  $region10: #{sp_simclr_forward.1} parent=0 // pred_check
    _
  $region11: #{sp_simclr_forward.1} parent=0 // pred_check_branch
    %73 = sbr.rel (0) target = $region13
  $region12: #{sp_simclr_forward.1} parent=0 // pred_region
    _
  $region13: #{sp_simclr_forward.1} parent=0 // pred_fallthru
    _
  // Predicated region
  $region14: #{sp_simclr_forward.1} parent=0 // pred_check
    _
  $region15: #{sp_simclr_forward.1} parent=0 // pred_check_branch
    %75 = sbr.rel (0) target = $region17
  $region16: #{sp_simclr_forward.1} parent=0 // pred_region
    _
  $region17: #{sp_simclr_forward.1} parent=0 // pred_fallthru
    _
  // Predicated region
  $region18: #{sp_simclr_forward.1} parent=0 // pred_check
    _
  $region19: #{sp_simclr_forward.1} parent=0 // pred_check_branch
    %77 = sbr.rel (0) target = $region21
  $region20: #{sp_simclr_forward.1} parent=0 // pred_region
    _
  $region21: #{sp_simclr_forward.1} parent=0 // pred_fallthru
    _
  // Predicated region
  $region22: #{sp_simclr_forward.1} parent=0 // pred_check
    _
  $region23: #{sp_simclr_forward.1} parent=0 // pred_check_branch
    %79 = sbr.rel (0) target = $region25
  $region24: #{sp_simclr_forward.1} parent=0 // pred_region
    _
  $region25: #{sp_simclr_forward.1} parent=0 // pred_fallthru
    _
  // Predicated region
  $region26: #{sp_simclr_forward.1} parent=0 // pred_check
    _
  $region27: #{sp_simclr_forward.1} parent=0 // pred_check_branch
    %81 = sbr.rel (0) target = $region29
  $region28: #{sp_simclr_forward.1} parent=0 // pred_region
    _
  $region29: #{sp_simclr_forward.1} parent=0 // pred_fallthru
    _
  // Predicated region
  $region30: #{sp_simclr_forward.1} parent=0 // pred_check
    _
  $region31: #{sp_simclr_forward.1} parent=0 // pred_check_branch
    %83 = sbr.rel (0) target = $region33
  $region32: #{sp_simclr_forward.1} parent=0 // pred_region
    _
  $region33: #{sp_simclr_forward.1} parent=0 // pred_fallthru
    _
  // Predicated region
  $region34: #{sp_simclr_forward.1} parent=0 // pred_check
    _
  $region35: #{sp_simclr_forward.1} parent=0 // pred_check_branch
    %85 = sbr.rel (0) target = $region37
  $region36: #{sp_simclr_forward.1} parent=0 // pred_region
    _
  $region37: #{sp_simclr_forward.1} parent=0 // pred_fallthru
    _
  // Predicated region
  $region38: #{sp_simclr_forward.1} parent=0 // pred_check
    _
  $region39: #{sp_simclr_forward.1} parent=0 // pred_check_branch
    %87 = sbr.rel (0) target = $region41
  $region40: #{sp_simclr_forward.1} parent=0 // pred_region
    _
  $region41: #{sp_simclr_forward.1} parent=0 // pred_fallthru
    _
  // Predicated region
  $region42: #{sp_simclr_forward.1} parent=0 // pred_check
    _
  $region43: #{sp_simclr_forward.1} parent=0 // pred_check_branch
    %89 = sbr.rel (0) target = $region45
  $region44: #{sp_simclr_forward.1} parent=0 // pred_region
    _
  $region45: #{sp_simclr_forward.1} parent=0 // pred_fallthru
    _
  // Predicated region
  $region46: #{sp_simclr_forward.1} parent=0 // pred_check
    _
  $region47: #{sp_simclr_forward.1} parent=0 // pred_check_branch
    %91 = sbr.rel (0) target = $region49
  $region48: #{sp_simclr_forward.1} parent=0 // pred_region
    _
  $region49: #{sp_simclr_forward.1} parent=0 // pred_fallthru
    _
  // Predicated region
  $region50: #{sp_simclr_forward.1} parent=0 // pred_check
    _
  $region51: #{sp_simclr_forward.1} parent=0 // pred_check_branch
    %93 = sbr.rel (0) target = $region53
  $region52: #{sp_simclr_forward.1} parent=0 // pred_region
    _
  $region53: #{sp_simclr_forward.1} parent=0 // pred_fallthru
    _
  // Predicated region
  $region54: #{sp_simclr_forward.1} parent=0 // pred_check
    _
  $region55: #{sp_simclr_forward.1} parent=0 // pred_check_branch
    %95 = sbr.rel (0) target = $region57
  $region56: #{sp_simclr_forward.1} parent=0 // pred_region
    _
  $region57: #{sp_simclr_forward.1} parent=0 // pred_fallthru
    _
  // Predicated region
  $region58: #{sp_simclr_forward.1} parent=0 // pred_check
    _
  $region59: #{sp_simclr_forward.1} parent=0 // pred_check_branch
    %97 = sbr.rel (0) target = $region61
  $region60: #{sp_simclr_forward.1} parent=0 // pred_region
    _
  $region61: #{sp_simclr_forward.1} parent=0 // pred_fallthru
    _
  // Predicated region
  $region62: #{sp_simclr_forward.1} parent=0 // pred_check
    _
  $region63: #{sp_simclr_forward.1} parent=0 // pred_check_branch
    %99 = sbr.rel (0) target = $region65
  $region64: #{sp_simclr_forward.1} parent=0 // pred_region
    _
  $region65: #{sp_simclr_forward.1} parent=0 // pred_fallthru
    _
  // Predicated region
  $region66: #{sp_simclr_forward.1} parent=0 // pred_check
    _
  $region67: #{sp_simclr_forward.1} parent=0 // pred_check_branch
    %101 = sbr.rel (0) target = $region69
  $region68: #{sp_simclr_forward.1} parent=0 // pred_region
    _
  $region69: #{sp_simclr_forward.1} parent=0 // pred_fallthru
    _
  // Predicated region
  $region70: #{sp_simclr_forward.1} parent=0 // pred_check
    _
  $region71: #{sp_simclr_forward.1} parent=0 // pred_check_branch
    %103 = sbr.rel (0) target = $region73
  $region72: #{sp_simclr_forward.1} parent=0 // pred_region
    _
  $region73: #{sp_simclr_forward.1} parent=0 // pred_fallthru
    _
  // Predicated region
  $region74: #{sp_simclr_forward.1} parent=0 // pred_check
    _
  $region75: #{sp_simclr_forward.1} parent=0 // pred_check_branch
    %105 = sbr.rel (0) target = $region77
  $region76: #{sp_simclr_forward.1} parent=0 // pred_region
    _
  $region77: #{sp_simclr_forward.1} parent=0 // pred_fallthru
    _
  // Predicated region
  $region78: #{sp_simclr_forward.1} parent=0 // pred_check
    _
  $region79: #{sp_simclr_forward.1} parent=0 // pred_check_branch
    %107 = sbr.rel (0) target = $region81
  $region80: #{sp_simclr_forward.1} parent=0 // pred_region
    _
  $region81: #{sp_simclr_forward.1} parent=0 // pred_fallthru
    _
  // Predicated region
  $region82: #{sp_simclr_forward.1} parent=0 // pred_check
    _
  $region83: #{sp_simclr_forward.1} parent=0 // pred_check_branch
    %109 = sbr.rel (0) target = $region85
  $region84: #{sp_simclr_forward.1} parent=0 // pred_region
    _
  $region85: #{sp_simclr_forward.1} parent=0 // pred_fallthru
    _
  // Predicated region
  $region86: #{sp_simclr_forward.1} parent=0 // pred_check
    _
  $region87: #{sp_simclr_forward.1} parent=0 // pred_check_branch
    %111 = sbr.rel (0) target = $region89
  $region88: #{sp_simclr_forward.1} parent=0 // pred_region
    _
  $region89: #{sp_simclr_forward.1} parent=0 // pred_fallthru
    _
  // Predicated region
  $region90: #{sp_simclr_forward.1} parent=0 // pred_check
    _
  $region91: #{sp_simclr_forward.1} parent=0 // pred_check_branch
    %113 = sbr.rel (0) target = $region93
  $region92: #{sp_simclr_forward.1} parent=0 // pred_region
    _
  $region93: #{sp_simclr_forward.1} parent=0 // pred_fallthru
    _
  // Predicated region
  $region94: #{sp_simclr_forward.1} parent=0 // pred_check
    _
  $region95: #{sp_simclr_forward.1} parent=0 // pred_check_branch
    %115 = sbr.rel (0) target = $region97
  $region96: #{sp_simclr_forward.1} parent=0 // pred_region
    _
  $region97: #{sp_simclr_forward.1} parent=0 // pred_fallthru
    _
  // Predicated region
  $region98: #{sp_simclr_forward.1} parent=0 // pred_check
    _
  $region99: #{sp_simclr_forward.1} parent=0 // pred_check_branch
    %117 = sbr.rel (0) target = $region101
  $region100: #{sp_simclr_forward.1} parent=0 // pred_region
    _
  $region101: #{sp_simclr_forward.1} parent=0 // pred_fallthru
    _
  // Predicated region
  $region102: #{sp_simclr_forward.1} parent=0 // pred_check
    _
  $region103: #{sp_simclr_forward.1} parent=0 // pred_check_branch
    %119 = sbr.rel (0) target = $region105
  $region104: #{sp_simclr_forward.1} parent=0 // pred_region
    _
  $region105: #{sp_simclr_forward.1} parent=0 // pred_fallthru
    _
  // Predicated region
  $region106: #{sp_simclr_forward.1} parent=0 // pred_check
    _
  $region107: #{sp_simclr_forward.1} parent=0 // pred_check_branch
    %121 = sbr.rel (0) target = $region109
  $region108: #{sp_simclr_forward.1} parent=0 // pred_region
    _
  $region109: #{sp_simclr_forward.1} parent=0 // pred_fallthru
    _
  // Predicated region
  $region110: #{sp_simclr_forward.1} parent=0 // pred_check
    _
  $region111: #{sp_simclr_forward.1} parent=0 // pred_check_branch
    %123 = sbr.rel (0) target = $region113
  $region112: #{sp_simclr_forward.1} parent=0 // pred_region
    _
  $region113: #{sp_simclr_forward.1} parent=0 // pred_fallthru
    _
  // Predicated region
  $region114: #{sp_simclr_forward.1} parent=0 // pred_check
    _
  $region115: #{sp_simclr_forward.1} parent=0 // pred_check_branch
    %125 = sbr.rel (0) target = $region117
  $region116: #{sp_simclr_forward.1} parent=0 // pred_region
    _
  $region117: #{sp_simclr_forward.1} parent=0 // pred_fallthru
    _
  // Predicated region
  $region118: #{sp_simclr_forward.1} parent=0 // pred_check
    _
  $region119: #{sp_simclr_forward.1} parent=0 // pred_check_branch
    %127 = sbr.rel (0) target = $region121
  $region120: #{sp_simclr_forward.1} parent=0 // pred_region
    _
  $region121: #{sp_simclr_forward.1} parent=0 // pred_fallthru
    _
  // Predicated region
  $region122: #{sp_simclr_forward.1} parent=0 // pred_check
    _
  $region123: #{sp_simclr_forward.1} parent=0 // pred_check_branch
    %129 = sbr.rel (0) target = $region125
  $region124: #{sp_simclr_forward.1} parent=0 // pred_region
    _
  $region125: #{sp_simclr_forward.1} parent=0 // pred_fallthru
    _
  %v131 = vld [vmem:[%s1] sm:$0xff]
  %v132 = vld [vmem:[%s1 + $0x8] sm:$0xff]
  %v133 = vld [vmem:[%s3] sm:$0xf]
  %v134 = vld [vmem:[%s3 + $0x4] sm:$0xf]
  %v135 = vld [vmem:[%s3 + $0x8] sm:$0xf]
  %v136 = vld [vmem:[%s3 + $0xc] sm:$0xf]
  %v137 = vld [vmem:[%s3 + $0x10] sm:$0xf]
  %v138 = vld [vmem:[%s3 + $0x14] sm:$0xf]
  %v139 = vld [vmem:[%s3 + $0x18] sm:$0xf]
  %v140 = vld [vmem:[%s3 + $0x1c] sm:$0xf]
  %v141 = vld [vmem:[%s3 + $0x20] sm:$0xf]
  %v142 = vld [vmem:[%s3 + $0x24] sm:$0xf]
  %v143 = vld [vmem:[%s3 + $0x28] sm:$0xf]
  %v144 = vld [vmem:[%s3 + $0x2c] sm:$0xf]
  %v145 = vld [vmem:[%s3 + $0x30] sm:$0xf]
  %v146 = vld [vmem:[%s3 + $0x34] sm:$0xf]
  %v147 = vld [vmem:[%s3 + $0x38] sm:$0xf]
  %v148 = vld [vmem:[%s3 + $0x3c] sm:$0xf]
  %v149 = vld [vmem:[%s3 + $0x40] sm:$0xf]
  %v150 = vld [vmem:[%s3 + $0x44] sm:$0xf]
  %v151 = vld [vmem:[%s3 + $0x48] sm:$0xf]
  %v152 = vld [vmem:[%s3 + $0x4c] sm:$0xf]
  %v153 = vld [vmem:[%s3 + $0x50] sm:$0xf]
  %v154 = vld [vmem:[%s3 + $0x54] sm:$0xf]
  %v155 = vld [vmem:[%s3 + $0x58] sm:$0xf]
  %v156 = vld [vmem:[%s3 + $0x5c] sm:$0xf]
  %v157 = vpack.c.bf16 %v131, %v131
  %v158 = vpack.c.bf16 %v132, %v132
  %v159 = vld [vmem:[%s5] sm:$0x1]
  %v161 = vperm.slane %v159, 0
  %v187 = vunpack.c.l.b16 %v133
  %v188 = vunpack.c.l.b16 %v134
  %v189 = vunpack.c.l.b16 %v135
  %v190 = vunpack.c.l.b16 %v136
  %v191 = vunpack.c.l.b16 %v137
  %v192 = vunpack.c.l.b16 %v138
  %v193 = vunpack.c.l.b16 %v139
  %v194 = vunpack.c.l.b16 %v140
  %v195 = vunpack.c.l.b16 %v141
  %v196 = vunpack.c.l.b16 %v142
  %v197 = vunpack.c.l.b16 %v143
  %v198 = vunpack.c.l.b16 %v144
  %v199 = vunpack.c.l.b16 %v145
  %v200 = vunpack.c.l.b16 %v146
  %v201 = vunpack.c.l.b16 %v147
  %v202 = vunpack.c.l.b16 %v148
  %v203 = vunpack.c.l.b16 %v149
  %v204 = vunpack.c.l.b16 %v150
  %v205 = vunpack.c.l.b16 %v151
  %v206 = vunpack.c.l.b16 %v152
  %v207 = vunpack.c.l.b16 %v153
  %v208 = vunpack.c.l.b16 %v154
  %v209 = vunpack.c.l.b16 %v155
  %v210 = vunpack.c.l.b16 %v156
  %v211 = vpack.c.b16 %v188, %v187
  %v212 = vpack.c.b16 %v190, %v189
  %v213 = vpack.c.b16 %v192, %v191
  %v214 = vpack.c.b16 %v194, %v193
  %v215 = vpack.c.b16 %v196, %v195
  %v216 = vpack.c.b16 %v198, %v197
  %v217 = vpack.c.b16 %v200, %v199
  %v218 = vpack.c.b16 %v202, %v201
  %v219 = vpack.c.b16 %v204, %v203
  %v220 = vpack.c.b16 %v206, %v205
  %v221 = vpack.c.b16 %v208, %v207
  %v222 = vpack.c.b16 %v210, %v209
  %vm235 = vcmask 523264
  %v237 = vsel %vm235, %v158, 0
  %239 = vmatpush.bf16.msra.mxu0 %v218
  %240 = vmatpush.bf16.msra.mxu0 %v217
  %241 = vmatpush.bf16.msra.mxu0 %v216
  %242 = vmatpush.bf16.msra.mxu0 %v215
  %243 = vmatpush.bf16.msra.mxu0 %v214
  %244 = vmatpush.bf16.msra.mxu0 %v213
  %245 = vmatpush.bf16.msra.mxu0 %v212
  %246 = vmatpush.bf16.msra.mxu0 %v211
  %247 = vmatmul.bf16.gmra.mxu0 %v157
  %v248 = vpop.f32.mrf.mxu0
  %v249 = vadd.f32 %v161, %v248
  %v250 = vpop.f32.mrf.mxu0
  %251 = vdwg.mxu0
  %252 = vmatpush.bf16.msra.mxu0 0
  %253 = vmatpush.bf16.msra.mxu0 0
  %254 = vmatpush.bf16.msra.mxu0 0
  %255 = vmatpush.bf16.msra.mxu0 0
  %256 = vmatpush.bf16.msra.mxu0 %v222
  %257 = vmatpush.bf16.msra.mxu0 %v221
  %258 = vmatpush.bf16.msra.mxu0 %v220
  %259 = vmatpush.bf16.msra.mxu0 %v219
  %260 = vmatmul.bf16.gmra.mxu0 %v237
  %v261 = vpop.f32.mrf.mxu0
  %v262 = vadd.f32 %v249, %v261
  %v263 = vpop.f32.mrf.mxu0
  %264 = vdwg.mxu0
  %v266 = vrot.slane %v262, 4
  %v267 = vld [vmem:[%s7] sm:$0x1]
  %268 = vst [vmem:[#allocation1] ss:$2 sm:$0xff] %v262
  %v269 = vld.sshfl [vmem:[#allocation1] sm:$0xff pattern:$0x75316420]
  %s270 = scalar_lea.vmem [#allocation1], 16
  %271 = vst [vmem:[%s270] ss:$2 sm:$0xff] %v266
  %v272 = vld.sshfl [vmem:[#allocation1 + $0x10] sm:$0xff pattern:$0x75316420]
  %v273 = vrot.slane %v269, 7
  %v274 = vrot.slane %v272, 7
  %vm277 = vcmask 1040384
  %v278 = vsel %vm277, %v267, %v273
  %v279 = vsel %vm277, %v267, %v274
  %v280 = vld [vmem:[%s9] sm:$0x1f]
  %v281 = vadd.f32 %v278, %v280
  %v282 = vadd.f32 %v279, %v280
  %v285 = vrot.slane %v281, 1
  %v286 = vrot.slane %v281, 2
  %v287 = vrot.slane %v281, 3
  %v288 = vrot.slane %v281, 4
  %v289 = vrot.slane %v282, 1
  %v290 = vrot.slane %v282, 2
  %v291 = vrot.slane %v282, 3
  %v292 = vrot.slane %v282, 4
  %v301 = vld [vmem:[%s11] sm:$0x1]
  %v302 = vld [vmem:[%s13] sm:$0x1]
  %303 = vst [vmem:[#allocation1] ss:$9 sm:$0xff] %v281
  %s304 = scalar_lea.vmem [#allocation1], 1
  %305 = vst [vmem:[%s304] ss:$9 sm:$0xff] %v285
  %s306 = scalar_lea.vmem [#allocation1], 2
  %307 = vst [vmem:[%s306] ss:$9 sm:$0xff] %v286
  %s308 = scalar_lea.vmem [#allocation1], 3
  %309 = vst [vmem:[%s308] ss:$9 sm:$0xff] %v287
  %s310 = scalar_lea.vmem [#allocation1], 4
  %311 = vst [vmem:[%s310] ss:$9 sm:$0xff] %v288
  %s312 = scalar_lea.vmem [#allocation1], 5
  %313 = vst [vmem:[%s312] ss:$9 sm:$0xff] %v282
  %s314 = scalar_lea.vmem [#allocation1], 6
  %315 = vst [vmem:[%s314] ss:$9 sm:$0xff] %v289
  %s316 = scalar_lea.vmem [#allocation1], 7
  %317 = vst [vmem:[%s316] ss:$9 sm:$0xff] %v290
  %v318 = vld [vmem:[#allocation1] sm:$0xff]
  %319 = vst [vmem:[#allocation1] ss:$9 sm:$0xff] %v291
  %320 = vst [vmem:[%s304] ss:$9 sm:$0xff] %v292
  %v321 = vld [vmem:[#allocation1] sm:$0xff]
  %vm324 = vcmask 261120
  %v325 = vsel %vm324, %v318, 0.0
  %326 = vadd.xlane.f32.xlu0 %v325
  %v327 = vpop.xlane.xlu0 %326
  %vm328 = vcmask 254976
  %v329 = vsel %vm328, %v321, 0.0
  %330 = vadd.xlane.f32.xlu0 %v329
  %v331 = vpop.xlane.xlu0 %330
  %v332 = vrcp.pop 32.0
  %v333 = vmul.f32 32.0, %v332
  %v334 = vsub.f32 1.0, %v333
  %v335 = vmul.f32 %v332, %v334
  %v336 = vadd.f32 %v332, %v335
  %vm337 = vweird.f32 %v332
  %v338 = vsel %vm337, %v332, %v336
  %v339 = vmul.f32 %v327, %v338
  %v340 = vmul.f32 %v331, %v338
  %v343 = vperm.slane %v339, 0
  %v344 = vperm.slane %v339, 1
  %v345 = vperm.slane %v339, 2
  %v346 = vperm.slane %v339, 3
  %v347 = vperm.slane %v339, 4
  %v348 = vperm.slane %v339, 5
  %v349 = vperm.slane %v339, 6
  %v350 = vperm.slane %v339, 7
  %v351 = vperm.slane %v340, 0
  %v352 = vperm.slane %v340, 1
  %v363 = vsub.f32 %v281, %v343
  %v364 = vsub.f32 %v285, %v344
  %v365 = vsub.f32 %v286, %v345
  %v366 = vsub.f32 %v287, %v346
  %v367 = vsub.f32 %v288, %v347
  %v368 = vsub.f32 %v282, %v348
  %v369 = vsub.f32 %v289, %v349
  %v370 = vsub.f32 %v290, %v350
  %v371 = vsub.f32 %v291, %v351
  %v372 = vsub.f32 %v292, %v352
  %v373 = vmul.f32 %v363, %v363
  %v374 = vmul.f32 %v364, %v364
  %v375 = vmul.f32 %v365, %v365
  %v376 = vmul.f32 %v366, %v366
  %v377 = vmul.f32 %v367, %v367
  %v378 = vmul.f32 %v368, %v368
  %v379 = vmul.f32 %v369, %v369
  %v380 = vmul.f32 %v370, %v370
  %v381 = vmul.f32 %v371, %v371
  %v382 = vmul.f32 %v372, %v372
  %393 = vst [vmem:[#allocation1] ss:$9 sm:$0xff] %v373
  %s394 = scalar_lea.vmem [#allocation1], 1
  %395 = vst [vmem:[%s394] ss:$9 sm:$0xff] %v374
  %s396 = scalar_lea.vmem [#allocation1], 2
  %397 = vst [vmem:[%s396] ss:$9 sm:$0xff] %v375
  %s398 = scalar_lea.vmem [#allocation1], 3
  %399 = vst [vmem:[%s398] ss:$9 sm:$0xff] %v376
  %s400 = scalar_lea.vmem [#allocation1], 4
  %401 = vst [vmem:[%s400] ss:$9 sm:$0xff] %v377
  %s402 = scalar_lea.vmem [#allocation1], 5
  %403 = vst [vmem:[%s402] ss:$9 sm:$0xff] %v378
  %s404 = scalar_lea.vmem [#allocation1], 6
  %405 = vst [vmem:[%s404] ss:$9 sm:$0xff] %v379
  %s406 = scalar_lea.vmem [#allocation1], 7
  %407 = vst [vmem:[%s406] ss:$9 sm:$0xff] %v380
  %v408 = vld [vmem:[#allocation1] sm:$0xff]
  %409 = vst [vmem:[#allocation1] ss:$9 sm:$0xff] %v381
  %410 = vst [vmem:[%s394] ss:$9 sm:$0xff] %v382
  %v411 = vld [vmem:[#allocation1] sm:$0xff]
  %v414 = vsel %vm324, %v408, 0.0
  %415 = vadd.xlane.f32.xlu0 %v414
  %v416 = vpop.xlane.xlu0 %415
  %v417 = vsel %vm328, %v411, 0.0
  %418 = vadd.xlane.f32.xlu0 %v417
  %v419 = vpop.xlane.xlu0 %418
  %v420 = vmul.f32 %v416, %v338
  %v421 = vmul.f32 %v419, %v338
  %v422 = vadd.f32 %v420, 1e-06
  %v423 = vadd.f32 %v421, 1e-06
  %v424 = vrsqrt.pop %v422
  %v425 = vmul.f32 %v424, %v422
  %v426 = vmul.f32 %v425, %v424
  %v427 = vmul.f32 0.5, %v426
  %v428 = vsub.f32 1.5, %v427
  %v429 = vmul.f32 %v424, %v428
  %vm430 = vweird.f32 %v422
  %vm431 = vweird.f32 %v424
  %vm432 = vmor %vm430, %vm431
  %v433 = vsel %vm432, %v424, %v429
  %v434 = vrsqrt.pop %v423
  %v435 = vmul.f32 %v434, %v423
  %v436 = vmul.f32 %v435, %v434
  %v437 = vmul.f32 0.5, %v436
  %v438 = vsub.f32 1.5, %v437
  %v439 = vmul.f32 %v434, %v438
  %vm440 = vweird.f32 %v423
  %vm441 = vweird.f32 %v434
  %vm442 = vmor %vm440, %vm441
  %v443 = vsel %vm442, %v434, %v439
  %v446 = vperm.slane %v433, 0
  %v447 = vperm.slane %v433, 1
  %v448 = vperm.slane %v433, 2
  %v449 = vperm.slane %v433, 3
  %v450 = vperm.slane %v433, 4
  %v451 = vperm.slane %v433, 5
  %v452 = vperm.slane %v433, 6
  %v453 = vperm.slane %v433, 7
  %v454 = vperm.slane %v443, 0
  %v455 = vperm.slane %v443, 1
  %v466 = vmul.f32 %v363, %v446
  %v467 = vmul.f32 %v364, %v447
  %v468 = vmul.f32 %v365, %v448
  %v469 = vmul.f32 %v366, %v449
  %v470 = vmul.f32 %v367, %v450
  %v471 = vmul.f32 %v368, %v451
  %v472 = vmul.f32 %v369, %v452
  %v473 = vmul.f32 %v370, %v453
  %v474 = vmul.f32 %v371, %v454
  %v475 = vmul.f32 %v372, %v455
  %v477 = vperm.slane %v301, 0
  %v479 = vrot.slane %v477, 1
  %v480 = vrot.slane %v477, 2
  %v481 = vrot.slane %v477, 3
  %v482 = vrot.slane %v477, 4
  %v483 = vrot.slane %v477, 5
  %v484 = vrot.slane %v477, 6
  %v485 = vrot.slane %v477, 7
  %v493 = vmul.f32 %v466, %v477
  %v494 = vmul.f32 %v467, %v479
  %v495 = vmul.f32 %v468, %v480
  %v496 = vmul.f32 %v469, %v481
  %v497 = vmul.f32 %v470, %v482
  %v498 = vmul.f32 %v471, %v483
  %v499 = vmul.f32 %v472, %v484
  %v500 = vmul.f32 %v473, %v485
  %v501 = vmul.f32 %v474, %v477
  %v502 = vmul.f32 %v475, %v479
  %v504 = vperm.slane %v302, 0
  %v506 = vrot.slane %v504, 1
  %v507 = vrot.slane %v504, 2
  %v508 = vrot.slane %v504, 3
  %v509 = vrot.slane %v504, 4
  %v510 = vrot.slane %v504, 5
  %v511 = vrot.slane %v504, 6
  %v512 = vrot.slane %v504, 7
  %v520 = vadd.f32 %v493, %v504
  %v521 = vadd.f32 %v494, %v506
  %v522 = vadd.f32 %v495, %v507
  %v523 = vadd.f32 %v496, %v508
  %v524 = vadd.f32 %v497, %v509
  %v525 = vadd.f32 %v498, %v510
  %v526 = vadd.f32 %v499, %v511
  %v527 = vadd.f32 %v500, %v512
  %v528 = vadd.f32 %v501, %v504
  %v529 = vadd.f32 %v502, %v506
  %v530 = vld [vmem:[%s15] sm:$0xf]
  %v531 = vld [vmem:[%s15 + $0x4] sm:$0xf]
  %v532 = vld [vmem:[%s15 + $0x8] sm:$0xf]
  %v533 = vld [vmem:[%s15 + $0xc] sm:$0xf]
  %544 = vst [vmem:[#allocation1] ss:$9 sm:$0xff] %v520
  %s545 = scalar_lea.vmem [#allocation1], 1
  %546 = vst [vmem:[%s545] ss:$9 sm:$0xff] %v521
  %s547 = scalar_lea.vmem [#allocation1], 2
  %548 = vst [vmem:[%s547] ss:$9 sm:$0xff] %v522
  %s549 = scalar_lea.vmem [#allocation1], 3
  %550 = vst [vmem:[%s549] ss:$9 sm:$0xff] %v523
  %s551 = scalar_lea.vmem [#allocation1], 4
  %552 = vst [vmem:[%s551] ss:$9 sm:$0xff] %v524
  %s553 = scalar_lea.vmem [#allocation1], 5
  %554 = vst [vmem:[%s553] ss:$9 sm:$0xff] %v525
  %s555 = scalar_lea.vmem [#allocation1], 6
  %556 = vst [vmem:[%s555] ss:$9 sm:$0xff] %v526
  %s557 = scalar_lea.vmem [#allocation1], 7
  %558 = vst [vmem:[%s557] ss:$9 sm:$0xff] %v527
  %v559 = vld [vmem:[#allocation1] sm:$0xff]
  %560 = vst [vmem:[#allocation1] ss:$9 sm:$0xff] %v528
  %561 = vst [vmem:[%s545] ss:$9 sm:$0xff] %v529
  %v562 = vld [vmem:[#allocation1] sm:$0xff]
  %v565 = vpack.c.bf16 %v562, %v559
  %v566 = vld [vmem:[%s17] sm:$0x1]
  %v568 = vperm.slane %v566, 0
  %v574 = vunpack.c.l.b16 %v530
  %v575 = vunpack.c.l.b16 %v531
  %v576 = vunpack.c.l.b16 %v532
  %v577 = vunpack.c.l.b16 %v533
  %v578 = vpack.c.b16 %v575, %v574
  %v579 = vpack.c.b16 %v577, %v576
  %v583 = vsel %vm324, %v565, 0
  %585 = vmatpush.bf16.msra.mxu0 0
  %586 = vmatpush.bf16.msra.mxu0 0
  %587 = vmatpush.bf16.msra.mxu0 0
  %588 = vmatpush.bf16.msra.mxu0 0
  %589 = vmatpush.bf16.msra.mxu0 0
  %590 = vmatpush.bf16.msra.mxu0 0
  %591 = vmatpush.bf16.msra.mxu0 %v579
  %592 = vmatpush.bf16.msra.mxu0 %v578
  %593 = vmatmul.bf16.gmra.mxu0 %v583
  %v594 = vpop.f32.mrf.mxu0
  %v595 = vadd.f32 %v568, %v594
  %v596 = vpop.f32.mrf.mxu0
  %v597 = vadd.f32 %v568, %v596
  %598 = vdwg.mxu0
  %v601 = vrot.slane %v595, 1
  %v602 = vrot.slane %v595, 2
  %v603 = vrot.slane %v595, 3
  %v604 = vrot.slane %v595, 4
  %v605 = vrot.slane %v595, 5
  %v606 = vrot.slane %v595, 6
  %v607 = vrot.slane %v595, 7
  %v608 = vrot.slane %v597, 1
  %v609 = vld [vmem:[%s19] sm:$0xf]
  %v610 = vld [vmem:[%s19 + $0x4] sm:$0xf]
  %v611 = vld [vmem:[%s19 + $0x8] sm:$0xf]
  %v612 = vld [vmem:[%s19 + $0xc] sm:$0xf]
  %v613 = vld [vmem:[%s21] sm:$0x1]
  %v615 = vperm.slane %v613, 0
  %v621 = vunpack.c.l.b16 %v609
  %v622 = vunpack.c.l.b16 %v610
  %v623 = vunpack.c.l.b16 %v611
  %v624 = vunpack.c.l.b16 %v612
  %v625 = vpack.c.b16 %v622, %v621
  %v626 = vpack.c.b16 %v624, %v623
  %629 = vmatpush.bf16.msra.mxu0 0
  %630 = vmatpush.bf16.msra.mxu0 0
  %631 = vmatpush.bf16.msra.mxu0 0
  %632 = vmatpush.bf16.msra.mxu0 0
  %633 = vmatpush.bf16.msra.mxu0 0
  %634 = vmatpush.bf16.msra.mxu0 0
  %635 = vmatpush.bf16.msra.mxu0 %v626
  %636 = vmatpush.bf16.msra.mxu0 %v625
  %637 = vmatmul.bf16.gmra.mxu0 %v583
  %v638 = vpop.f32.mrf.mxu0
  %v639 = vadd.f32 %v615, %v638
  %v640 = vpop.f32.mrf.mxu0
  %v641 = vadd.f32 %v615, %v640
  %642 = vdwg.mxu0
  %v645 = vrot.slane %v639, 1
  %v646 = vrot.slane %v639, 2
  %v647 = vrot.slane %v639, 3
  %v648 = vrot.slane %v639, 4
  %v649 = vrot.slane %v639, 5
  %v650 = vrot.slane %v639, 6
  %v651 = vrot.slane %v639, 7
  %v652 = vrot.slane %v641, 1
  %v653 = vld [vmem:[%s23] sm:$0xf]
  %v654 = vld [vmem:[%s23 + $0x4] sm:$0xf]
  %v655 = vld [vmem:[%s23 + $0x8] sm:$0xf]
  %v656 = vld [vmem:[%s23 + $0xc] sm:$0xf]
  %v657 = vld [vmem:[%s25] sm:$0x1]
  %v659 = vperm.slane %v657, 0
  %v665 = vunpack.c.l.b16 %v653
  %v666 = vunpack.c.l.b16 %v654
  %v667 = vunpack.c.l.b16 %v655
  %v668 = vunpack.c.l.b16 %v656
  %v669 = vpack.c.b16 %v666, %v665
  %v670 = vpack.c.b16 %v668, %v667
  %673 = vmatpush.bf16.msra.mxu0 0
  %674 = vmatpush.bf16.msra.mxu0 0
  %675 = vmatpush.bf16.msra.mxu0 0
  %676 = vmatpush.bf16.msra.mxu0 0
  %677 = vmatpush.bf16.msra.mxu0 0
  %678 = vmatpush.bf16.msra.mxu0 0
  %679 = vmatpush.bf16.msra.mxu0 %v670
  %680 = vmatpush.bf16.msra.mxu0 %v669
  %681 = vmatmul.bf16.gmra.mxu0 %v583
  %v682 = vpop.f32.mrf.mxu0
  %v683 = vadd.f32 %v659, %v682
  %v684 = vpop.f32.mrf.mxu0
  %v685 = vadd.f32 %v659, %v684
  %686 = vdwg.mxu0
  %v689 = vrot.slane %v683, 1
  %v690 = vrot.slane %v683, 2
  %v691 = vrot.slane %v683, 3
  %v692 = vrot.slane %v683, 4
  %v693 = vrot.slane %v683, 5
  %v694 = vrot.slane %v683, 6
  %v695 = vrot.slane %v683, 7
  %v696 = vrot.slane %v685, 1
  %697 = vrot.lane.b32.xlu0 %v595, 120
  %v698 = vpop.permute.xlu0 %697
  %699 = vrot.lane.b32.xlu0 %v601, 120
  %v700 = vpop.permute.xlu0 %699
  %701 = vrot.lane.b32.xlu0 %v602, 120
  %v702 = vpop.permute.xlu0 %701
  %703 = vrot.lane.b32.xlu0 %v603, 120
  %v704 = vpop.permute.xlu0 %703
  %705 = vrot.lane.b32.xlu0 %v604, 120
  %v706 = vpop.permute.xlu0 %705
  %707 = vrot.lane.b32.xlu0 %v605, 120
  %v708 = vpop.permute.xlu0 %707
  %709 = vrot.lane.b32.xlu0 %v606, 120
  %v710 = vpop.permute.xlu0 %709
  %711 = vrot.lane.b32.xlu0 %v607, 120
  %v712 = vpop.permute.xlu0 %711
  %713 = vrot.lane.b32.xlu0 %v597, 120
  %v714 = vpop.permute.xlu0 %713
  %715 = vrot.lane.b32.xlu0 %v608, 120
  %v716 = vpop.permute.xlu0 %715
  %717 = vrot.lane.b32.xlu0 %v595, 112
  %v718 = vpop.permute.xlu0 %717
  %719 = vrot.lane.b32.xlu0 %v601, 112
  %v720 = vpop.permute.xlu0 %719
  %721 = vrot.lane.b32.xlu0 %v602, 112
  %v722 = vpop.permute.xlu0 %721
  %723 = vrot.lane.b32.xlu0 %v603, 112
  %v724 = vpop.permute.xlu0 %723
  %725 = vrot.lane.b32.xlu0 %v604, 112
  %v726 = vpop.permute.xlu0 %725
  %727 = vrot.lane.b32.xlu0 %v605, 112
  %v728 = vpop.permute.xlu0 %727
  %729 = vrot.lane.b32.xlu0 %v606, 112
  %v730 = vpop.permute.xlu0 %729
  %731 = vrot.lane.b32.xlu0 %v607, 112
  %v732 = vpop.permute.xlu0 %731
  %733 = vrot.lane.b32.xlu0 %v597, 112
  %v734 = vpop.permute.xlu0 %733
  %735 = vrot.lane.b32.xlu0 %v608, 112
  %v736 = vpop.permute.xlu0 %735
  %737 = vrot.lane.b32.xlu0 %v595, 104
  %v738 = vpop.permute.xlu0 %737
  %739 = vrot.lane.b32.xlu0 %v601, 104
  %v740 = vpop.permute.xlu0 %739
  %741 = vrot.lane.b32.xlu0 %v602, 104
  %v742 = vpop.permute.xlu0 %741
  %743 = vrot.lane.b32.xlu0 %v603, 104
  %v744 = vpop.permute.xlu0 %743
  %745 = vrot.lane.b32.xlu0 %v604, 104
  %v746 = vpop.permute.xlu0 %745
  %747 = vrot.lane.b32.xlu0 %v605, 104
  %v748 = vpop.permute.xlu0 %747
  %749 = vrot.lane.b32.xlu0 %v606, 104
  %v750 = vpop.permute.xlu0 %749
  %751 = vrot.lane.b32.xlu0 %v607, 104
  %v752 = vpop.permute.xlu0 %751
  %753 = vrot.lane.b32.xlu0 %v597, 104
  %v754 = vpop.permute.xlu0 %753
  %755 = vrot.lane.b32.xlu0 %v608, 104
  %v756 = vpop.permute.xlu0 %755
  %757 = vrot.lane.b32.xlu0 %v639, 120
  %v758 = vpop.permute.xlu0 %757
  %759 = vrot.lane.b32.xlu0 %v645, 120
  %v760 = vpop.permute.xlu0 %759
  %761 = vrot.lane.b32.xlu0 %v646, 120
  %v762 = vpop.permute.xlu0 %761
  %763 = vrot.lane.b32.xlu0 %v647, 120
  %v764 = vpop.permute.xlu0 %763
  %765 = vrot.lane.b32.xlu0 %v648, 120
  %v766 = vpop.permute.xlu0 %765
  %767 = vrot.lane.b32.xlu0 %v649, 120
  %v768 = vpop.permute.xlu0 %767
  %769 = vrot.lane.b32.xlu0 %v650, 120
  %v770 = vpop.permute.xlu0 %769
  %771 = vrot.lane.b32.xlu0 %v651, 120
  %v772 = vpop.permute.xlu0 %771
  %773 = vrot.lane.b32.xlu0 %v641, 120
  %v774 = vpop.permute.xlu0 %773
  %775 = vrot.lane.b32.xlu0 %v652, 120
  %v776 = vpop.permute.xlu0 %775
  %777 = vrot.lane.b32.xlu0 %v639, 112
  %v778 = vpop.permute.xlu0 %777
  %779 = vrot.lane.b32.xlu0 %v645, 112
  %v780 = vpop.permute.xlu0 %779
  %781 = vrot.lane.b32.xlu0 %v646, 112
  %v782 = vpop.permute.xlu0 %781
  %783 = vrot.lane.b32.xlu0 %v647, 112
  %v784 = vpop.permute.xlu0 %783
  %785 = vrot.lane.b32.xlu0 %v648, 112
  %v786 = vpop.permute.xlu0 %785
  %787 = vrot.lane.b32.xlu0 %v649, 112
  %v788 = vpop.permute.xlu0 %787
  %789 = vrot.lane.b32.xlu0 %v650, 112
  %v790 = vpop.permute.xlu0 %789
  %791 = vrot.lane.b32.xlu0 %v651, 112
  %v792 = vpop.permute.xlu0 %791
  %793 = vrot.lane.b32.xlu0 %v641, 112
  %v794 = vpop.permute.xlu0 %793
  %795 = vrot.lane.b32.xlu0 %v652, 112
  %v796 = vpop.permute.xlu0 %795
  %797 = vrot.lane.b32.xlu0 %v639, 104
  %v798 = vpop.permute.xlu0 %797
  %799 = vrot.lane.b32.xlu0 %v645, 104
  %v800 = vpop.permute.xlu0 %799
  %801 = vrot.lane.b32.xlu0 %v646, 104
  %v802 = vpop.permute.xlu0 %801
  %803 = vrot.lane.b32.xlu0 %v647, 104
  %v804 = vpop.permute.xlu0 %803
  %805 = vrot.lane.b32.xlu0 %v648, 104
  %v806 = vpop.permute.xlu0 %805
  %807 = vrot.lane.b32.xlu0 %v649, 104
  %v808 = vpop.permute.xlu0 %807
  %809 = vrot.lane.b32.xlu0 %v650, 104
  %v810 = vpop.permute.xlu0 %809
  %811 = vrot.lane.b32.xlu0 %v651, 104
  %v812 = vpop.permute.xlu0 %811
  %813 = vrot.lane.b32.xlu0 %v641, 104
  %v814 = vpop.permute.xlu0 %813
  %815 = vrot.lane.b32.xlu0 %v652, 104
  %v816 = vpop.permute.xlu0 %815
  %817 = vrot.lane.b32.xlu0 %v683, 120
  %v818 = vpop.permute.xlu0 %817
  %819 = vrot.lane.b32.xlu0 %v689, 120
  %v820 = vpop.permute.xlu0 %819
  %821 = vrot.lane.b32.xlu0 %v690, 120
  %v822 = vpop.permute.xlu0 %821
  %823 = vrot.lane.b32.xlu0 %v691, 120
  %v824 = vpop.permute.xlu0 %823
  %825 = vrot.lane.b32.xlu0 %v692, 120
  %v826 = vpop.permute.xlu0 %825
  %827 = vrot.lane.b32.xlu0 %v693, 120
  %v828 = vpop.permute.xlu0 %827
  %829 = vrot.lane.b32.xlu0 %v694, 120
  %v830 = vpop.permute.xlu0 %829
  %831 = vrot.lane.b32.xlu0 %v695, 120
  %v832 = vpop.permute.xlu0 %831
  %833 = vrot.lane.b32.xlu0 %v685, 120
  %v834 = vpop.permute.xlu0 %833
  %835 = vrot.lane.b32.xlu0 %v696, 120
  %v836 = vpop.permute.xlu0 %835
  %837 = vrot.lane.b32.xlu0 %v683, 112
  %v838 = vpop.permute.xlu0 %837
  %839 = vrot.lane.b32.xlu0 %v689, 112
  %v840 = vpop.permute.xlu0 %839
  %841 = vrot.lane.b32.xlu0 %v690, 112
  %v842 = vpop.permute.xlu0 %841
  %843 = vrot.lane.b32.xlu0 %v691, 112
  %v844 = vpop.permute.xlu0 %843
  %845 = vrot.lane.b32.xlu0 %v692, 112
  %v846 = vpop.permute.xlu0 %845
  %847 = vrot.lane.b32.xlu0 %v693, 112
  %v848 = vpop.permute.xlu0 %847
  %849 = vrot.lane.b32.xlu0 %v694, 112
  %v850 = vpop.permute.xlu0 %849
  %851 = vrot.lane.b32.xlu0 %v695, 112
  %v852 = vpop.permute.xlu0 %851
  %853 = vrot.lane.b32.xlu0 %v685, 112
  %v854 = vpop.permute.xlu0 %853
  %855 = vrot.lane.b32.xlu0 %v696, 112
  %v856 = vpop.permute.xlu0 %855
  %857 = vrot.lane.b32.xlu0 %v683, 104
  %v858 = vpop.permute.xlu0 %857
  %859 = vrot.lane.b32.xlu0 %v689, 104
  %v860 = vpop.permute.xlu0 %859
  %861 = vrot.lane.b32.xlu0 %v690, 104
  %v862 = vpop.permute.xlu0 %861
  %863 = vrot.lane.b32.xlu0 %v691, 104
  %v864 = vpop.permute.xlu0 %863
  %865 = vrot.lane.b32.xlu0 %v692, 104
  %v866 = vpop.permute.xlu0 %865
  %867 = vrot.lane.b32.xlu0 %v693, 104
  %v868 = vpop.permute.xlu0 %867
  %869 = vrot.lane.b32.xlu0 %v694, 104
  %v870 = vpop.permute.xlu0 %869
  %871 = vrot.lane.b32.xlu0 %v695, 104
  %v872 = vpop.permute.xlu0 %871
  %873 = vrot.lane.b32.xlu0 %v685, 104
  %v874 = vpop.permute.xlu0 %873
  %875 = vrot.lane.b32.xlu0 %v696, 104
  %v876 = vpop.permute.xlu0 %875
  %877 = vst [vmem:[#allocation1] ss:$9 sm:$0xff] %v595
  %s878 = scalar_lea.vmem [#allocation1], 1
  %879 = vst [vmem:[%s878] ss:$9 sm:$0xff] %v601
  %s880 = scalar_lea.vmem [#allocation1], 2
  %881 = vst [vmem:[%s880] ss:$9 sm:$0xff] %v602
  %s882 = scalar_lea.vmem [#allocation1], 3
  %883 = vst [vmem:[%s882] ss:$9 sm:$0xff] %v603
  %s884 = scalar_lea.vmem [#allocation1], 4
  %885 = vst [vmem:[%s884] ss:$9 sm:$0xff] %v604
  %v886 = vld [vmem:[#allocation1] sm:$0xff]
  %887 = vst [vmem:[#allocation1] ss:$9 sm:$0xff] %v605
  %888 = vst [vmem:[%s878] ss:$9 sm:$0xff] %v606
  %889 = vst [vmem:[%s880] ss:$9 sm:$0xff] %v607
  %890 = vst [vmem:[%s882] ss:$9 sm:$0xff] %v597
  %891 = vst [vmem:[%s884] ss:$9 sm:$0xff] %v608
  %v892 = vld [vmem:[#allocation1] sm:$0xff]
  %893 = vst [vmem:[#allocation1] ss:$9 sm:$0xff] %v698
  %894 = vst [vmem:[%s878] ss:$9 sm:$0xff] %v700
  %895 = vst [vmem:[%s880] ss:$9 sm:$0xff] %v702
  %896 = vst [vmem:[%s882] ss:$9 sm:$0xff] %v704
  %897 = vst [vmem:[%s884] ss:$9 sm:$0xff] %v706
  %v898 = vld [vmem:[#allocation1] sm:$0xff]
  %899 = vst [vmem:[#allocation1] ss:$9 sm:$0xff] %v708
  %900 = vst [vmem:[%s878] ss:$9 sm:$0xff] %v710
  %901 = vst [vmem:[%s880] ss:$9 sm:$0xff] %v712
  %902 = vst [vmem:[%s882] ss:$9 sm:$0xff] %v714
  %903 = vst [vmem:[%s884] ss:$9 sm:$0xff] %v716
  %v904 = vld [vmem:[#allocation1] sm:$0xff]
  %905 = vst [vmem:[#allocation1] ss:$9 sm:$0xff] %v718
  %906 = vst [vmem:[%s878] ss:$9 sm:$0xff] %v720
  %907 = vst [vmem:[%s880] ss:$9 sm:$0xff] %v722
  %908 = vst [vmem:[%s882] ss:$9 sm:$0xff] %v724
  %909 = vst [vmem:[%s884] ss:$9 sm:$0xff] %v726
  %v910 = vld [vmem:[#allocation1] sm:$0xff]
  %911 = vst [vmem:[#allocation1] ss:$9 sm:$0xff] %v728
  %912 = vst [vmem:[%s878] ss:$9 sm:$0xff] %v730
  %913 = vst [vmem:[%s880] ss:$9 sm:$0xff] %v732
  %914 = vst [vmem:[%s882] ss:$9 sm:$0xff] %v734
  %915 = vst [vmem:[%s884] ss:$9 sm:$0xff] %v736
  %v916 = vld [vmem:[#allocation1] sm:$0xff]
  %917 = vst [vmem:[#allocation1] ss:$9 sm:$0xff] %v738
  %918 = vst [vmem:[%s878] ss:$9 sm:$0xff] %v740
  %919 = vst [vmem:[%s880] ss:$9 sm:$0xff] %v742
  %920 = vst [vmem:[%s882] ss:$9 sm:$0xff] %v744
  %921 = vst [vmem:[%s884] ss:$9 sm:$0xff] %v746
  %v922 = vld [vmem:[#allocation1] sm:$0xff]
  %923 = vst [vmem:[#allocation1] ss:$9 sm:$0xff] %v748
  %924 = vst [vmem:[%s878] ss:$9 sm:$0xff] %v750
  %925 = vst [vmem:[%s880] ss:$9 sm:$0xff] %v752
  %926 = vst [vmem:[%s882] ss:$9 sm:$0xff] %v754
  %927 = vst [vmem:[%s884] ss:$9 sm:$0xff] %v756
  %v928 = vld [vmem:[#allocation1] sm:$0xff]
  %v937 = vpack.c.bf16 %v886, %v886
  %v938 = vpack.c.bf16 %v892, %v892
  %v939 = vpack.c.bf16 %v898, %v898
  %v940 = vpack.c.bf16 %v904, %v904
  %v941 = vpack.c.bf16 %v910, %v910
  %v942 = vpack.c.bf16 %v916, %v916
  %v943 = vpack.c.bf16 %v922, %v922
  %v944 = vpack.c.bf16 %v928, %v928
  %945 = vst [vmem:[#allocation1] ss:$9 sm:$0xff] %v639
  %s946 = scalar_lea.vmem [#allocation1], 1
  %947 = vst [vmem:[%s946] ss:$9 sm:$0xff] %v645
  %s948 = scalar_lea.vmem [#allocation1], 2
  %949 = vst [vmem:[%s948] ss:$9 sm:$0xff] %v646
  %s950 = scalar_lea.vmem [#allocation1], 3
  %951 = vst [vmem:[%s950] ss:$9 sm:$0xff] %v647
  %s952 = scalar_lea.vmem [#allocation1], 4
  %953 = vst [vmem:[%s952] ss:$9 sm:$0xff] %v648
  %v954 = vld [vmem:[#allocation1] sm:$0xff]
  %955 = vst [vmem:[#allocation1] ss:$9 sm:$0xff] %v649
  %956 = vst [vmem:[%s946] ss:$9 sm:$0xff] %v650
  %957 = vst [vmem:[%s948] ss:$9 sm:$0xff] %v651
  %958 = vst [vmem:[%s950] ss:$9 sm:$0xff] %v641
  %959 = vst [vmem:[%s952] ss:$9 sm:$0xff] %v652
  %v960 = vld [vmem:[#allocation1] sm:$0xff]
  %961 = vst [vmem:[#allocation1] ss:$9 sm:$0xff] %v758
  %962 = vst [vmem:[%s946] ss:$9 sm:$0xff] %v760
  %963 = vst [vmem:[%s948] ss:$9 sm:$0xff] %v762
  %964 = vst [vmem:[%s950] ss:$9 sm:$0xff] %v764
  %965 = vst [vmem:[%s952] ss:$9 sm:$0xff] %v766
  %v966 = vld [vmem:[#allocation1] sm:$0xff]
  %967 = vst [vmem:[#allocation1] ss:$9 sm:$0xff] %v768
  %968 = vst [vmem:[%s946] ss:$9 sm:$0xff] %v770
  %969 = vst [vmem:[%s948] ss:$9 sm:$0xff] %v772
  %970 = vst [vmem:[%s950] ss:$9 sm:$0xff] %v774
  %971 = vst [vmem:[%s952] ss:$9 sm:$0xff] %v776
  %v972 = vld [vmem:[#allocation1] sm:$0xff]
  %973 = vst [vmem:[#allocation1] ss:$9 sm:$0xff] %v778
  %974 = vst [vmem:[%s946] ss:$9 sm:$0xff] %v780
  %975 = vst [vmem:[%s948] ss:$9 sm:$0xff] %v782
  %976 = vst [vmem:[%s950] ss:$9 sm:$0xff] %v784
  %977 = vst [vmem:[%s952] ss:$9 sm:$0xff] %v786
  %v978 = vld [vmem:[#allocation1] sm:$0xff]
  %979 = vst [vmem:[#allocation1] ss:$9 sm:$0xff] %v788
  %980 = vst [vmem:[%s946] ss:$9 sm:$0xff] %v790
  %981 = vst [vmem:[%s948] ss:$9 sm:$0xff] %v792
  %982 = vst [vmem:[%s950] ss:$9 sm:$0xff] %v794
  %983 = vst [vmem:[%s952] ss:$9 sm:$0xff] %v796
  %v984 = vld [vmem:[#allocation1] sm:$0xff]
  %985 = vst [vmem:[#allocation1] ss:$9 sm:$0xff] %v798
  %986 = vst [vmem:[%s946] ss:$9 sm:$0xff] %v800
  %987 = vst [vmem:[%s948] ss:$9 sm:$0xff] %v802
  %988 = vst [vmem:[%s950] ss:$9 sm:$0xff] %v804
  %989 = vst [vmem:[%s952] ss:$9 sm:$0xff] %v806
  %v990 = vld [vmem:[#allocation1] sm:$0xff]
  %991 = vst [vmem:[#allocation1] ss:$9 sm:$0xff] %v808
  %992 = vst [vmem:[%s946] ss:$9 sm:$0xff] %v810
  %993 = vst [vmem:[%s948] ss:$9 sm:$0xff] %v812
  %994 = vst [vmem:[%s950] ss:$9 sm:$0xff] %v814
  %995 = vst [vmem:[%s952] ss:$9 sm:$0xff] %v816
  %v996 = vld [vmem:[#allocation1] sm:$0xff]
  %v1005 = vpack.c.bf16 %v954, %v954
  %v1006 = vpack.c.bf16 %v960, %v960
  %v1007 = vpack.c.bf16 %v966, %v966
  %v1008 = vpack.c.bf16 %v972, %v972
  %v1009 = vpack.c.bf16 %v978, %v978
  %v1010 = vpack.c.bf16 %v984, %v984
  %v1011 = vpack.c.bf16 %v990, %v990
  %v1012 = vpack.c.bf16 %v996, %v996
  %vm1013 = vcmask 64512
  %v1015 = vsel %vm1013, %v937, 0
  %v1018 = vsel %vm1013, %v1005, 0
  %1020 = vmatpush.bf16.xpose.msra.mxu0 0
  %1021 = vmatpush.bf16.xpose.msra.mxu0 0
  %1022 = vmatpush.bf16.xpose.msra.mxu0 0
  %1023 = vmatpush.bf16.xpose.msra.mxu0 0
  %1024 = vmatpush.bf16.xpose.msra.mxu0 0
  %1025 = vmatpush.bf16.xpose.msra.mxu0 0
  %1026 = vmatpush.bf16.xpose.msra.mxu0 0
  %1027 = vmatpush.bf16.xpose.msra.mxu0 %v1018
  %1028 = vmatmul.bf16.gmra.mxu0 %v1015
  %v1029 = vpop.f32.mrf.mxu0
  %v1030 = vadd.f32 0.0, %v1029
  %v1031 = vpop.f32.mrf.mxu0
  %1032 = vdwg.mxu0
  %v1034 = vsel %vm1013, %v938, 0
  %v1037 = vsel %vm1013, %v1006, 0
  %1039 = vmatpush.bf16.xpose.msra.mxu0 0
  %1040 = vmatpush.bf16.xpose.msra.mxu0 0
  %1041 = vmatpush.bf16.xpose.msra.mxu0 0
  %1042 = vmatpush.bf16.xpose.msra.mxu0 0
  %1043 = vmatpush.bf16.xpose.msra.mxu0 0
  %1044 = vmatpush.bf16.xpose.msra.mxu0 0
  %1045 = vmatpush.bf16.xpose.msra.mxu0 0
  %1046 = vmatpush.bf16.xpose.msra.mxu0 %v1037
  %1047 = vmatmul.bf16.gmra.mxu0 %v1034
  %v1048 = vpop.f32.mrf.mxu0
  %v1049 = vadd.f32 0.0, %v1048
  %v1050 = vpop.f32.mrf.mxu0
  %1051 = vdwg.mxu0
  %v1053 = vsel %vm1013, %v939, 0
  %v1056 = vsel %vm1013, %v1007, 0
  %1058 = vmatpush.bf16.xpose.msra.mxu0 0
  %1059 = vmatpush.bf16.xpose.msra.mxu0 0
  %1060 = vmatpush.bf16.xpose.msra.mxu0 0
  %1061 = vmatpush.bf16.xpose.msra.mxu0 0
  %1062 = vmatpush.bf16.xpose.msra.mxu0 0
  %1063 = vmatpush.bf16.xpose.msra.mxu0 0
  %1064 = vmatpush.bf16.xpose.msra.mxu0 0
  %1065 = vmatpush.bf16.xpose.msra.mxu0 %v1056
  %1066 = vmatmul.bf16.gmra.mxu0 %v1053
  %v1067 = vpop.f32.mrf.mxu0
  %v1068 = vadd.f32 0.0, %v1067
  %v1069 = vpop.f32.mrf.mxu0
  %1070 = vdwg.mxu0
  %v1072 = vsel %vm1013, %v940, 0
  %v1075 = vsel %vm1013, %v1008, 0
  %1077 = vmatpush.bf16.xpose.msra.mxu0 0
  %1078 = vmatpush.bf16.xpose.msra.mxu0 0
  %1079 = vmatpush.bf16.xpose.msra.mxu0 0
  %1080 = vmatpush.bf16.xpose.msra.mxu0 0
  %1081 = vmatpush.bf16.xpose.msra.mxu0 0
  %1082 = vmatpush.bf16.xpose.msra.mxu0 0
  %1083 = vmatpush.bf16.xpose.msra.mxu0 0
  %1084 = vmatpush.bf16.xpose.msra.mxu0 %v1075
  %1085 = vmatmul.bf16.gmra.mxu0 %v1072
  %v1086 = vpop.f32.mrf.mxu0
  %v1087 = vadd.f32 0.0, %v1086
  %v1088 = vpop.f32.mrf.mxu0
  %1089 = vdwg.mxu0
  %v1091 = vsel %vm1013, %v941, 0
  %v1094 = vsel %vm1013, %v1009, 0
  %1096 = vmatpush.bf16.xpose.msra.mxu0 0
  %1097 = vmatpush.bf16.xpose.msra.mxu0 0
  %1098 = vmatpush.bf16.xpose.msra.mxu0 0
  %1099 = vmatpush.bf16.xpose.msra.mxu0 0
  %1100 = vmatpush.bf16.xpose.msra.mxu0 0
  %1101 = vmatpush.bf16.xpose.msra.mxu0 0
  %1102 = vmatpush.bf16.xpose.msra.mxu0 0
  %1103 = vmatpush.bf16.xpose.msra.mxu0 %v1094
  %1104 = vmatmul.bf16.gmra.mxu0 %v1091
  %v1105 = vpop.f32.mrf.mxu0
  %v1106 = vadd.f32 0.0, %v1105
  %v1107 = vpop.f32.mrf.mxu0
  %1108 = vdwg.mxu0
  %v1110 = vsel %vm1013, %v942, 0
  %v1113 = vsel %vm1013, %v1010, 0
  %1115 = vmatpush.bf16.xpose.msra.mxu0 0
  %1116 = vmatpush.bf16.xpose.msra.mxu0 0
  %1117 = vmatpush.bf16.xpose.msra.mxu0 0
  %1118 = vmatpush.bf16.xpose.msra.mxu0 0
  %1119 = vmatpush.bf16.xpose.msra.mxu0 0
  %1120 = vmatpush.bf16.xpose.msra.mxu0 0
  %1121 = vmatpush.bf16.xpose.msra.mxu0 0
  %1122 = vmatpush.bf16.xpose.msra.mxu0 %v1113
  %1123 = vmatmul.bf16.gmra.mxu0 %v1110
  %v1124 = vpop.f32.mrf.mxu0
  %v1125 = vadd.f32 0.0, %v1124
  %v1126 = vpop.f32.mrf.mxu0
  %1127 = vdwg.mxu0
  %v1129 = vsel %vm1013, %v943, 0
  %v1132 = vsel %vm1013, %v1011, 0
  %1134 = vmatpush.bf16.xpose.msra.mxu0 0
  %1135 = vmatpush.bf16.xpose.msra.mxu0 0
  %1136 = vmatpush.bf16.xpose.msra.mxu0 0
  %1137 = vmatpush.bf16.xpose.msra.mxu0 0
  %1138 = vmatpush.bf16.xpose.msra.mxu0 0
  %1139 = vmatpush.bf16.xpose.msra.mxu0 0
  %1140 = vmatpush.bf16.xpose.msra.mxu0 0
  %1141 = vmatpush.bf16.xpose.msra.mxu0 %v1132
  %1142 = vmatmul.bf16.gmra.mxu0 %v1129
  %v1143 = vpop.f32.mrf.mxu0
  %v1144 = vadd.f32 0.0, %v1143
  %v1145 = vpop.f32.mrf.mxu0
  %1146 = vdwg.mxu0
  %v1148 = vsel %vm1013, %v944, 0
  %v1151 = vsel %vm1013, %v1012, 0
  %1153 = vmatpush.bf16.xpose.msra.mxu0 0
  %1154 = vmatpush.bf16.xpose.msra.mxu0 0
  %1155 = vmatpush.bf16.xpose.msra.mxu0 0
  %1156 = vmatpush.bf16.xpose.msra.mxu0 0
  %1157 = vmatpush.bf16.xpose.msra.mxu0 0
  %1158 = vmatpush.bf16.xpose.msra.mxu0 0
  %1159 = vmatpush.bf16.xpose.msra.mxu0 0
  %1160 = vmatpush.bf16.xpose.msra.mxu0 %v1151
  %1161 = vmatmul.bf16.gmra.mxu0 %v1148
  %v1162 = vpop.f32.mrf.mxu0
  %v1163 = vadd.f32 0.0, %v1162
  %v1164 = vpop.f32.mrf.mxu0
  %1165 = vdwg.mxu0
  %v1166 = vmul.f32 %v1030, 0.35355338
  %v1167 = vmul.f32 %v1049, 0.35355338
  %v1168 = vmul.f32 %v1068, 0.35355338
  %v1169 = vmul.f32 %v1087, 0.35355338
  %v1170 = vmul.f32 %v1106, 0.35355338
  %v1171 = vmul.f32 %v1125, 0.35355338
  %v1172 = vmul.f32 %v1144, 0.35355338
  %v1173 = vmul.f32 %v1163, 0.35355338
  %vm1174 = vcmask 36864
  %v1175 = vsel %vm1174, %v1166, -inf
  %1176 = vmax.xlane.f32.xlu0 %v1175
  %v1177 = vpop.xlane.xlu0 %1176
  %v1178 = vsel %vm1174, %v1167, -inf
  %1179 = vmax.xlane.f32.xlu0 %v1178
  %v1180 = vpop.xlane.xlu0 %1179
  %v1181 = vsel %vm1174, %v1168, -inf
  %1182 = vmax.xlane.f32.xlu0 %v1181
  %v1183 = vpop.xlane.xlu0 %1182
  %v1184 = vsel %vm1174, %v1169, -inf
  %1185 = vmax.xlane.f32.xlu0 %v1184
  %v1186 = vpop.xlane.xlu0 %1185
  %v1187 = vsel %vm1174, %v1170, -inf
  %1188 = vmax.xlane.f32.xlu0 %v1187
  %v1189 = vpop.xlane.xlu0 %1188
  %v1190 = vsel %vm1174, %v1171, -inf
  %1191 = vmax.xlane.f32.xlu0 %v1190
  %v1192 = vpop.xlane.xlu0 %1191
  %v1193 = vsel %vm1174, %v1172, -inf
  %1194 = vmax.xlane.f32.xlu0 %v1193
  %v1195 = vpop.xlane.xlu0 %1194
  %v1196 = vsel %vm1174, %v1173, -inf
  %1197 = vmax.xlane.f32.xlu0 %v1196
  %v1198 = vpop.xlane.xlu0 %1197
  %v1199 = vsub.f32 %v1166, %v1177
  %v1200 = vsub.f32 %v1167, %v1180
  %v1201 = vsub.f32 %v1168, %v1183
  %v1202 = vsub.f32 %v1169, %v1186
  %v1203 = vsub.f32 %v1170, %v1189
  %v1204 = vsub.f32 %v1171, %v1192
  %v1205 = vsub.f32 %v1172, %v1195
  %v1206 = vsub.f32 %v1173, %v1198
  %v1207 = vmul.f32 %v1199, 1.442695
  %v1208 = vpow.pop %v1207
  %v1209 = vmul.f32 %v1200, 1.442695
  %v1210 = vpow.pop %v1209
  %v1211 = vmul.f32 %v1201, 1.442695
  %v1212 = vpow.pop %v1211
  %v1213 = vmul.f32 %v1202, 1.442695
  %v1214 = vpow.pop %v1213
  %v1215 = vmul.f32 %v1203, 1.442695
  %v1216 = vpow.pop %v1215
  %v1217 = vmul.f32 %v1204, 1.442695
  %v1218 = vpow.pop %v1217
  %v1219 = vmul.f32 %v1205, 1.442695
  %v1220 = vpow.pop %v1219
  %v1221 = vmul.f32 %v1206, 1.442695
  %v1222 = vpow.pop %v1221
  %v1223 = vsel %vm1174, %v1208, 0.0
  %1224 = vadd.xlane.f32.xlu0 %v1223
  %v1225 = vpop.xlane.xlu0 %1224
  %v1226 = vsel %vm1174, %v1210, 0.0
  %1227 = vadd.xlane.f32.xlu0 %v1226
  %v1228 = vpop.xlane.xlu0 %1227
  %v1229 = vsel %vm1174, %v1212, 0.0
  %1230 = vadd.xlane.f32.xlu0 %v1229
  %v1231 = vpop.xlane.xlu0 %1230
  %v1232 = vsel %vm1174, %v1214, 0.0
  %1233 = vadd.xlane.f32.xlu0 %v1232
  %v1234 = vpop.xlane.xlu0 %1233
  %v1235 = vsel %vm1174, %v1216, 0.0
  %1236 = vadd.xlane.f32.xlu0 %v1235
  %v1237 = vpop.xlane.xlu0 %1236
  %v1238 = vsel %vm1174, %v1218, 0.0
  %1239 = vadd.xlane.f32.xlu0 %v1238
  %v1240 = vpop.xlane.xlu0 %1239
  %v1241 = vsel %vm1174, %v1220, 0.0
  %1242 = vadd.xlane.f32.xlu0 %v1241
  %v1243 = vpop.xlane.xlu0 %1242
  %v1244 = vsel %vm1174, %v1222, 0.0
  %1245 = vadd.xlane.f32.xlu0 %v1244
  %v1246 = vpop.xlane.xlu0 %1245
  %v1247 = vrcp.pop %v1225
  %v1248 = vrcp.pop %v1228
  %v1249 = vrcp.pop %v1231
  %v1250 = vrcp.pop %v1234
  %v1251 = vrcp.pop %v1237
  %v1252 = vrcp.pop %v1240
  %v1253 = vrcp.pop %v1243
  %v1254 = vrcp.pop %v1246
  %v1255 = vmul.f32 %v1208, %v1247
  %v1256 = vmul.f32 %v1210, %v1248
  %v1257 = vmul.f32 %v1212, %v1249
  %v1258 = vmul.f32 %v1214, %v1250
  %v1259 = vmul.f32 %v1216, %v1251
  %v1260 = vmul.f32 %v1218, %v1252
  %v1261 = vmul.f32 %v1220, %v1253
  %v1262 = vmul.f32 %v1222, %v1254
  %v1263 = vpack.c.bf16 %v1255, %v1255
  %v1264 = vpack.c.bf16 %v1256, %v1256
  %v1265 = vpack.c.bf16 %v1257, %v1257
  %v1266 = vpack.c.bf16 %v1258, %v1258
  %v1267 = vpack.c.bf16 %v1259, %v1259
  %v1268 = vpack.c.bf16 %v1260, %v1260
  %v1269 = vpack.c.bf16 %v1261, %v1261
  %v1270 = vpack.c.bf16 %v1262, %v1262
  %1271 = vst [vmem:[#allocation1] ss:$9 sm:$0xff] %v683
  %s1272 = scalar_lea.vmem [#allocation1], 1
  %1273 = vst [vmem:[%s1272] ss:$9 sm:$0xff] %v689
  %s1274 = scalar_lea.vmem [#allocation1], 2
  %1275 = vst [vmem:[%s1274] ss:$9 sm:$0xff] %v690
  %s1276 = scalar_lea.vmem [#allocation1], 3
  %1277 = vst [vmem:[%s1276] ss:$9 sm:$0xff] %v691
  %s1278 = scalar_lea.vmem [#allocation1], 4
  %1279 = vst [vmem:[%s1278] ss:$9 sm:$0xff] %v692
  %v1280 = vld [vmem:[#allocation1] sm:$0xff]
  %1281 = vst [vmem:[#allocation1] ss:$9 sm:$0xff] %v693
  %1282 = vst [vmem:[%s1272] ss:$9 sm:$0xff] %v694
  %1283 = vst [vmem:[%s1274] ss:$9 sm:$0xff] %v695
  %1284 = vst [vmem:[%s1276] ss:$9 sm:$0xff] %v685
  %1285 = vst [vmem:[%s1278] ss:$9 sm:$0xff] %v696
  %v1286 = vld [vmem:[#allocation1] sm:$0xff]
  %1287 = vst [vmem:[#allocation1] ss:$9 sm:$0xff] %v818
  %1288 = vst [vmem:[%s1272] ss:$9 sm:$0xff] %v820
  %1289 = vst [vmem:[%s1274] ss:$9 sm:$0xff] %v822
  %1290 = vst [vmem:[%s1276] ss:$9 sm:$0xff] %v824
  %1291 = vst [vmem:[%s1278] ss:$9 sm:$0xff] %v826
  %v1292 = vld [vmem:[#allocation1] sm:$0xff]
  %1293 = vst [vmem:[#allocation1] ss:$9 sm:$0xff] %v828
  %1294 = vst [vmem:[%s1272] ss:$9 sm:$0xff] %v830
  %1295 = vst [vmem:[%s1274] ss:$9 sm:$0xff] %v832
  %1296 = vst [vmem:[%s1276] ss:$9 sm:$0xff] %v834
  %1297 = vst [vmem:[%s1278] ss:$9 sm:$0xff] %v836
  %v1298 = vld [vmem:[#allocation1] sm:$0xff]
  %1299 = vst [vmem:[#allocation1] ss:$9 sm:$0xff] %v838
  %1300 = vst [vmem:[%s1272] ss:$9 sm:$0xff] %v840
  %1301 = vst [vmem:[%s1274] ss:$9 sm:$0xff] %v842
  %1302 = vst [vmem:[%s1276] ss:$9 sm:$0xff] %v844
  %1303 = vst [vmem:[%s1278] ss:$9 sm:$0xff] %v846
  %v1304 = vld [vmem:[#allocation1] sm:$0xff]
  %1305 = vst [vmem:[#allocation1] ss:$9 sm:$0xff] %v848
  %1306 = vst [vmem:[%s1272] ss:$9 sm:$0xff] %v850
  %1307 = vst [vmem:[%s1274] ss:$9 sm:$0xff] %v852
  %1308 = vst [vmem:[%s1276] ss:$9 sm:$0xff] %v854
  %1309 = vst [vmem:[%s1278] ss:$9 sm:$0xff] %v856
  %v1310 = vld [vmem:[#allocation1] sm:$0xff]
  %1311 = vst [vmem:[#allocation1] ss:$9 sm:$0xff] %v858
  %1312 = vst [vmem:[%s1272] ss:$9 sm:$0xff] %v860
  %1313 = vst [vmem:[%s1274] ss:$9 sm:$0xff] %v862
  %1314 = vst [vmem:[%s1276] ss:$9 sm:$0xff] %v864
  %1315 = vst [vmem:[%s1278] ss:$9 sm:$0xff] %v866
  %v1316 = vld [vmem:[#allocation1] sm:$0xff]
  %1317 = vst [vmem:[#allocation1] ss:$9 sm:$0xff] %v868
  %1318 = vst [vmem:[%s1272] ss:$9 sm:$0xff] %v870
  %1319 = vst [vmem:[%s1274] ss:$9 sm:$0xff] %v872
  %1320 = vst [vmem:[%s1276] ss:$9 sm:$0xff] %v874
  %1321 = vst [vmem:[%s1278] ss:$9 sm:$0xff] %v876
  %v1322 = vld [vmem:[#allocation1] sm:$0xff]
  %v1331 = vpack.c.bf16 %v1280, %v1280
  %v1332 = vpack.c.bf16 %v1286, %v1286
  %v1333 = vpack.c.bf16 %v1292, %v1292
  %v1334 = vpack.c.bf16 %v1298, %v1298
  %v1335 = vpack.c.bf16 %v1304, %v1304
  %v1336 = vpack.c.bf16 %v1310, %v1310
  %v1337 = vpack.c.bf16 %v1316, %v1316
  %v1338 = vpack.c.bf16 %v1322, %v1322
  %vm1339 = vcmask 39936
  %v1341 = vsel %vm1339, %v1263, 0
  %vm1343 = vcmask 1041408
  %vm1344 = vcmask 1042432
  %v1345 = vsel %vm1343, 4294967295, 65535
  %v1346 = vsel %vm1344, %v1345, 0
  %v1348 = vand.u32 %v1331, %v1346
  %1350 = vmatpush.bf16.msra.mxu0 0
  %1351 = vmatpush.bf16.msra.mxu0 0
  %1352 = vmatpush.bf16.msra.mxu0 0
  %1353 = vmatpush.bf16.msra.mxu0 0
  %1354 = vmatpush.bf16.msra.mxu0 0
  %1355 = vmatpush.bf16.msra.mxu0 0
  %1356 = vmatpush.bf16.msra.mxu0 0
  %1357 = vmatpush.bf16.msra.mxu0 %v1348
  %1358 = vmatmul.bf16.gmra.mxu0 %v1341
  %v1359 = vpop.f32.mrf.mxu0
  %v1360 = vadd.f32 0.0, %v1359
  %v1361 = vpop.f32.mrf.mxu0
  %1362 = vdwg.mxu0
  %v1364 = vsel %vm1339, %v1264, 0
  %v1367 = vand.u32 %v1332, %v1346
  %1369 = vmatpush.bf16.msra.mxu0 0
  %1370 = vmatpush.bf16.msra.mxu0 0
  %1371 = vmatpush.bf16.msra.mxu0 0
  %1372 = vmatpush.bf16.msra.mxu0 0
  %1373 = vmatpush.bf16.msra.mxu0 0
  %1374 = vmatpush.bf16.msra.mxu0 0
  %1375 = vmatpush.bf16.msra.mxu0 0
  %1376 = vmatpush.bf16.msra.mxu0 %v1367
  %1377 = vmatmul.bf16.gmra.mxu0 %v1364
  %v1378 = vpop.f32.mrf.mxu0
  %v1379 = vadd.f32 0.0, %v1378
  %v1380 = vpop.f32.mrf.mxu0
  %1381 = vdwg.mxu0
  %v1383 = vsel %vm1339, %v1265, 0
  %v1386 = vand.u32 %v1333, %v1346
  %1388 = vmatpush.bf16.msra.mxu0 0
  %1389 = vmatpush.bf16.msra.mxu0 0
  %1390 = vmatpush.bf16.msra.mxu0 0
  %1391 = vmatpush.bf16.msra.mxu0 0
  %1392 = vmatpush.bf16.msra.mxu0 0
  %1393 = vmatpush.bf16.msra.mxu0 0
  %1394 = vmatpush.bf16.msra.mxu0 0
  %1395 = vmatpush.bf16.msra.mxu0 %v1386
  %1396 = vmatmul.bf16.gmra.mxu0 %v1383
  %v1397 = vpop.f32.mrf.mxu0
  %v1398 = vadd.f32 0.0, %v1397
  %v1399 = vpop.f32.mrf.mxu0
  %1400 = vdwg.mxu0
  %v1402 = vsel %vm1339, %v1266, 0
  %v1405 = vand.u32 %v1334, %v1346
  %1407 = vmatpush.bf16.msra.mxu0 0
  %1408 = vmatpush.bf16.msra.mxu0 0
  %1409 = vmatpush.bf16.msra.mxu0 0
  %1410 = vmatpush.bf16.msra.mxu0 0
  %1411 = vmatpush.bf16.msra.mxu0 0
  %1412 = vmatpush.bf16.msra.mxu0 0
  %1413 = vmatpush.bf16.msra.mxu0 0
  %1414 = vmatpush.bf16.msra.mxu0 %v1405
  %1415 = vmatmul.bf16.gmra.mxu0 %v1402
  %v1416 = vpop.f32.mrf.mxu0
  %v1417 = vadd.f32 0.0, %v1416
  %v1418 = vpop.f32.mrf.mxu0
  %1419 = vdwg.mxu0
  %v1421 = vsel %vm1339, %v1267, 0
  %v1424 = vand.u32 %v1335, %v1346
  %1426 = vmatpush.bf16.msra.mxu0 0
  %1427 = vmatpush.bf16.msra.mxu0 0
  %1428 = vmatpush.bf16.msra.mxu0 0
  %1429 = vmatpush.bf16.msra.mxu0 0
  %1430 = vmatpush.bf16.msra.mxu0 0
  %1431 = vmatpush.bf16.msra.mxu0 0
  %1432 = vmatpush.bf16.msra.mxu0 0
  %1433 = vmatpush.bf16.msra.mxu0 %v1424
  %1434 = vmatmul.bf16.gmra.mxu0 %v1421
  %v1435 = vpop.f32.mrf.mxu0
  %v1436 = vadd.f32 0.0, %v1435
  %v1437 = vpop.f32.mrf.mxu0
  %1438 = vdwg.mxu0
  %v1440 = vsel %vm1339, %v1268, 0
  %v1443 = vand.u32 %v1336, %v1346
  %1445 = vmatpush.bf16.msra.mxu0 0
  %1446 = vmatpush.bf16.msra.mxu0 0
  %1447 = vmatpush.bf16.msra.mxu0 0
  %1448 = vmatpush.bf16.msra.mxu0 0
  %1449 = vmatpush.bf16.msra.mxu0 0
  %1450 = vmatpush.bf16.msra.mxu0 0
  %1451 = vmatpush.bf16.msra.mxu0 0
  %1452 = vmatpush.bf16.msra.mxu0 %v1443
  %1453 = vmatmul.bf16.gmra.mxu0 %v1440
  %v1454 = vpop.f32.mrf.mxu0
  %v1455 = vadd.f32 0.0, %v1454
  %v1456 = vpop.f32.mrf.mxu0
  %1457 = vdwg.mxu0
  %v1459 = vsel %vm1339, %v1269, 0
  %v1462 = vand.u32 %v1337, %v1346
  %1464 = vmatpush.bf16.msra.mxu0 0
  %1465 = vmatpush.bf16.msra.mxu0 0
  %1466 = vmatpush.bf16.msra.mxu0 0
  %1467 = vmatpush.bf16.msra.mxu0 0
  %1468 = vmatpush.bf16.msra.mxu0 0
  %1469 = vmatpush.bf16.msra.mxu0 0
  %1470 = vmatpush.bf16.msra.mxu0 0
  %1471 = vmatpush.bf16.msra.mxu0 %v1462
  %1472 = vmatmul.bf16.gmra.mxu0 %v1459
  %v1473 = vpop.f32.mrf.mxu0
  %v1474 = vadd.f32 0.0, %v1473
  %v1475 = vpop.f32.mrf.mxu0
  %1476 = vdwg.mxu0
  %v1478 = vsel %vm1339, %v1270, 0
  %v1481 = vand.u32 %v1338, %v1346
  %1483 = vmatpush.bf16.msra.mxu0 0
  %1484 = vmatpush.bf16.msra.mxu0 0
  %1485 = vmatpush.bf16.msra.mxu0 0
  %1486 = vmatpush.bf16.msra.mxu0 0
  %1487 = vmatpush.bf16.msra.mxu0 0
  %1488 = vmatpush.bf16.msra.mxu0 0
  %1489 = vmatpush.bf16.msra.mxu0 0
  %1490 = vmatpush.bf16.msra.mxu0 %v1481
  %1491 = vmatmul.bf16.gmra.mxu0 %v1478
  %v1492 = vpop.f32.mrf.mxu0
  %v1493 = vadd.f32 0.0, %v1492
  %v1494 = vpop.f32.mrf.mxu0
  %1495 = vdwg.mxu0
  %1498 = vrot.lane.b32.xlu0 %v1398, 8
  %v1499 = vpop.permute.xlu0 %1498
  %1500 = vrot.lane.b32.xlu0 %v1417, 8
  %v1501 = vpop.permute.xlu0 %1500
  %1506 = vrot.lane.b32.xlu0 %v1436, 16
  %v1507 = vpop.permute.xlu0 %1506
  %1508 = vrot.lane.b32.xlu0 %v1455, 16
  %v1509 = vpop.permute.xlu0 %1508
  %1514 = vrot.lane.b32.xlu0 %v1474, 24
  %v1515 = vpop.permute.xlu0 %1514
  %1516 = vrot.lane.b32.xlu0 %v1493, 24
  %v1517 = vpop.permute.xlu0 %1516
  %v1520 = vsel %vm1013, %v1360, %v1499
  %v1521 = vsel %vm1013, %v1379, %v1501
  %vm1522 = vcmask 130048
  %v1523 = vsel %vm1522, %v1520, %v1507
  %v1524 = vsel %vm1522, %v1521, %v1509
  %vm1525 = vcmask 195584
  %v1526 = vsel %vm1525, %v1523, %v1515
  %v1527 = vsel %vm1525, %v1524, %v1517
  %v1530 = vrot.slane %v1526, 1
  %v1531 = vrot.slane %v1526, 2
  %v1532 = vrot.slane %v1526, 3
  %v1533 = vrot.slane %v1526, 4
  %v1534 = vrot.slane %v1527, 1
  %v1535 = vrot.slane %v1527, 2
  %v1536 = vrot.slane %v1527, 3
  %v1537 = vrot.slane %v1527, 4
  %v1538 = vld [vmem:[%s27] sm:$0xf]
  %v1539 = vld [vmem:[%s27 + $0x4] sm:$0xf]
  %v1540 = vld [vmem:[%s27 + $0x8] sm:$0xf]
  %v1541 = vld [vmem:[%s27 + $0xc] sm:$0xf]
  %1542 = vst [vmem:[#allocation1] ss:$9 sm:$0xff] %v1526
  %s1543 = scalar_lea.vmem [#allocation1], 1
  %1544 = vst [vmem:[%s1543] ss:$9 sm:$0xff] %v1530
  %s1545 = scalar_lea.vmem [#allocation1], 2
  %1546 = vst [vmem:[%s1545] ss:$9 sm:$0xff] %v1531
  %s1547 = scalar_lea.vmem [#allocation1], 3
  %1548 = vst [vmem:[%s1547] ss:$9 sm:$0xff] %v1532
  %s1549 = scalar_lea.vmem [#allocation1], 4
  %1550 = vst [vmem:[%s1549] ss:$9 sm:$0xff] %v1533
  %s1551 = scalar_lea.vmem [#allocation1], 5
  %1552 = vst [vmem:[%s1551] ss:$9 sm:$0xff] %v1527
  %s1553 = scalar_lea.vmem [#allocation1], 6
  %1554 = vst [vmem:[%s1553] ss:$9 sm:$0xff] %v1534
  %s1555 = scalar_lea.vmem [#allocation1], 7
  %1556 = vst [vmem:[%s1555] ss:$9 sm:$0xff] %v1535
  %v1557 = vld [vmem:[#allocation1] sm:$0xff]
  %1558 = vst [vmem:[#allocation1] ss:$9 sm:$0xff] %v1536
  %1559 = vst [vmem:[%s1543] ss:$9 sm:$0xff] %v1537
  %v1560 = vld [vmem:[#allocation1] sm:$0xff]
  %v1563 = vpack.c.bf16 %v1560, %v1557
  %v1568 = vunpack.c.l.b16 %v1538
  %v1569 = vunpack.c.l.b16 %v1539
  %v1570 = vunpack.c.l.b16 %v1540
  %v1571 = vunpack.c.l.b16 %v1541
  %v1572 = vpack.c.b16 %v1569, %v1568
  %v1573 = vpack.c.b16 %v1571, %v1570
  %v1577 = vsel %vm324, %v1563, 0
  %1579 = vmatpush.bf16.msra.mxu0 0
  %1580 = vmatpush.bf16.msra.mxu0 0
  %1581 = vmatpush.bf16.msra.mxu0 0
  %1582 = vmatpush.bf16.msra.mxu0 0
  %1583 = vmatpush.bf16.msra.mxu0 0
  %1584 = vmatpush.bf16.msra.mxu0 0
  %1585 = vmatpush.bf16.msra.mxu0 %v1573
  %1586 = vmatpush.bf16.msra.mxu0 %v1572
  %1587 = vmatmul.bf16.gmra.mxu0 %v1577
  %v1588 = vpop.f32.mrf.mxu0
  %v1589 = vadd.f32 0.0, %v1588
  %v1590 = vpop.f32.mrf.mxu0
  %v1591 = vadd.f32 0.0, %v1590
  %1592 = vdwg.mxu0
  %v1595 = vrot.slane %v1589, 1
  %v1596 = vrot.slane %v1589, 2
  %v1597 = vrot.slane %v1589, 3
  %v1598 = vrot.slane %v1589, 4
  %v1599 = vrot.slane %v1589, 5
  %v1600 = vrot.slane %v1589, 6
  %v1601 = vrot.slane %v1589, 7
  %v1602 = vrot.slane %v1591, 1
  %v1611 = vadd.f32 %v281, %v1589
  %v1612 = vadd.f32 %v285, %v1595
  %v1613 = vadd.f32 %v286, %v1596
  %v1614 = vadd.f32 %v287, %v1597
  %v1615 = vadd.f32 %v288, %v1598
  %v1616 = vadd.f32 %v282, %v1599
  %v1617 = vadd.f32 %v289, %v1600
  %v1618 = vadd.f32 %v290, %v1601
  %v1619 = vadd.f32 %v291, %v1591
  %v1620 = vadd.f32 %v292, %v1602
  %v1621 = vld [vmem:[%s29] sm:$0x1]
  %v1623 = vperm.slane %v1621, 0
  %v1625 = vrot.slane %v1623, 1
  %v1626 = vrot.slane %v1623, 2
  %v1627 = vrot.slane %v1623, 3
  %v1628 = vrot.slane %v1623, 4
  %v1629 = vrot.slane %v1623, 5
  %v1630 = vrot.slane %v1623, 6
  %v1631 = vrot.slane %v1623, 7
  %v1639 = vadd.f32 %v1611, %v1623
  %v1640 = vadd.f32 %v1612, %v1625
  %v1641 = vadd.f32 %v1613, %v1626
  %v1642 = vadd.f32 %v1614, %v1627
  %v1643 = vadd.f32 %v1615, %v1628
  %v1644 = vadd.f32 %v1616, %v1629
  %v1645 = vadd.f32 %v1617, %v1630
  %v1646 = vadd.f32 %v1618, %v1631
  %v1647 = vadd.f32 %v1619, %v1623
  %v1648 = vadd.f32 %v1620, %v1625
  %v1649 = vld [vmem:[%s31] sm:$0x1]
  %v1650 = vld [vmem:[%s33] sm:$0x1]
  %1661 = vst [vmem:[#allocation1] ss:$9 sm:$0xff] %v1639
  %s1662 = scalar_lea.vmem [#allocation1], 1
  %1663 = vst [vmem:[%s1662] ss:$9 sm:$0xff] %v1640
  %s1664 = scalar_lea.vmem [#allocation1], 2
  %1665 = vst [vmem:[%s1664] ss:$9 sm:$0xff] %v1641
  %s1666 = scalar_lea.vmem [#allocation1], 3
  %1667 = vst [vmem:[%s1666] ss:$9 sm:$0xff] %v1642
  %s1668 = scalar_lea.vmem [#allocation1], 4
  %1669 = vst [vmem:[%s1668] ss:$9 sm:$0xff] %v1643
  %s1670 = scalar_lea.vmem [#allocation1], 5
  %1671 = vst [vmem:[%s1670] ss:$9 sm:$0xff] %v1644
  %s1672 = scalar_lea.vmem [#allocation1], 6
  %1673 = vst [vmem:[%s1672] ss:$9 sm:$0xff] %v1645
  %s1674 = scalar_lea.vmem [#allocation1], 7
  %1675 = vst [vmem:[%s1674] ss:$9 sm:$0xff] %v1646
  %v1676 = vld [vmem:[#allocation1] sm:$0xff]
  %1677 = vst [vmem:[#allocation1] ss:$9 sm:$0xff] %v1647
  %1678 = vst [vmem:[%s1662] ss:$9 sm:$0xff] %v1648
  %v1679 = vld [vmem:[#allocation1] sm:$0xff]
  %v1682 = vsel %vm324, %v1676, 0.0
  %1683 = vadd.xlane.f32.xlu0 %v1682
  %v1684 = vpop.xlane.xlu0 %1683
  %v1685 = vsel %vm328, %v1679, 0.0
  %1686 = vadd.xlane.f32.xlu0 %v1685
  %v1687 = vpop.xlane.xlu0 %1686
  %v1688 = vmul.f32 %v1684, %v338
  %v1689 = vmul.f32 %v1687, %v338
  %v1692 = vperm.slane %v1688, 0
  %v1693 = vperm.slane %v1688, 1
  %v1694 = vperm.slane %v1688, 2
  %v1695 = vperm.slane %v1688, 3
  %v1696 = vperm.slane %v1688, 4
  %v1697 = vperm.slane %v1688, 5
  %v1698 = vperm.slane %v1688, 6
  %v1699 = vperm.slane %v1688, 7
  %v1700 = vperm.slane %v1689, 0
  %v1701 = vperm.slane %v1689, 1
  %v1712 = vsub.f32 %v1639, %v1692
  %v1713 = vsub.f32 %v1640, %v1693
  %v1714 = vsub.f32 %v1641, %v1694
  %v1715 = vsub.f32 %v1642, %v1695
  %v1716 = vsub.f32 %v1643, %v1696
  %v1717 = vsub.f32 %v1644, %v1697
  %v1718 = vsub.f32 %v1645, %v1698
  %v1719 = vsub.f32 %v1646, %v1699
  %v1720 = vsub.f32 %v1647, %v1700
  %v1721 = vsub.f32 %v1648, %v1701
  %v1722 = vmul.f32 %v1712, %v1712
  %v1723 = vmul.f32 %v1713, %v1713
  %v1724 = vmul.f32 %v1714, %v1714
  %v1725 = vmul.f32 %v1715, %v1715
  %v1726 = vmul.f32 %v1716, %v1716
  %v1727 = vmul.f32 %v1717, %v1717
  %v1728 = vmul.f32 %v1718, %v1718
  %v1729 = vmul.f32 %v1719, %v1719
  %v1730 = vmul.f32 %v1720, %v1720
  %v1731 = vmul.f32 %v1721, %v1721
  %1742 = vst [vmem:[#allocation1] ss:$9 sm:$0xff] %v1722
  %s1743 = scalar_lea.vmem [#allocation1], 1
  %1744 = vst [vmem:[%s1743] ss:$9 sm:$0xff] %v1723
  %s1745 = scalar_lea.vmem [#allocation1], 2
  %1746 = vst [vmem:[%s1745] ss:$9 sm:$0xff] %v1724
  %s1747 = scalar_lea.vmem [#allocation1], 3
  %1748 = vst [vmem:[%s1747] ss:$9 sm:$0xff] %v1725
  %s1749 = scalar_lea.vmem [#allocation1], 4
  %1750 = vst [vmem:[%s1749] ss:$9 sm:$0xff] %v1726
  %s1751 = scalar_lea.vmem [#allocation1], 5
  %1752 = vst [vmem:[%s1751] ss:$9 sm:$0xff] %v1727
  %s1753 = scalar_lea.vmem [#allocation1], 6
  %1754 = vst [vmem:[%s1753] ss:$9 sm:$0xff] %v1728
  %s1755 = scalar_lea.vmem [#allocation1], 7
  %1756 = vst [vmem:[%s1755] ss:$9 sm:$0xff] %v1729
  %v1757 = vld [vmem:[#allocation1] sm:$0xff]
  %1758 = vst [vmem:[#allocation1] ss:$9 sm:$0xff] %v1730
  %1759 = vst [vmem:[%s1743] ss:$9 sm:$0xff] %v1731
  %v1760 = vld [vmem:[#allocation1] sm:$0xff]
  %v1763 = vsel %vm324, %v1757, 0.0
  %1764 = vadd.xlane.f32.xlu0 %v1763
  %v1765 = vpop.xlane.xlu0 %1764
  %v1766 = vsel %vm328, %v1760, 0.0
  %1767 = vadd.xlane.f32.xlu0 %v1766
  %v1768 = vpop.xlane.xlu0 %1767
  %v1769 = vmul.f32 %v1765, %v338
  %v1770 = vmul.f32 %v1768, %v338
  %v1771 = vadd.f32 %v1769, 1e-06
  %v1772 = vadd.f32 %v1770, 1e-06
  %v1773 = vrsqrt.pop %v1771
  %v1774 = vmul.f32 %v1773, %v1771
  %v1775 = vmul.f32 %v1774, %v1773
  %v1776 = vmul.f32 0.5, %v1775
  %v1777 = vsub.f32 1.5, %v1776
  %v1778 = vmul.f32 %v1773, %v1777
  %vm1779 = vweird.f32 %v1771
  %vm1780 = vweird.f32 %v1773
  %vm1781 = vmor %vm1779, %vm1780
  %v1782 = vsel %vm1781, %v1773, %v1778
  %v1783 = vrsqrt.pop %v1772
  %v1784 = vmul.f32 %v1783, %v1772
  %v1785 = vmul.f32 %v1784, %v1783
  %v1786 = vmul.f32 0.5, %v1785
  %v1787 = vsub.f32 1.5, %v1786
  %v1788 = vmul.f32 %v1783, %v1787
  %vm1789 = vweird.f32 %v1772
  %vm1790 = vweird.f32 %v1783
  %vm1791 = vmor %vm1789, %vm1790
  %v1792 = vsel %vm1791, %v1783, %v1788
  %v1795 = vperm.slane %v1782, 0
  %v1796 = vperm.slane %v1782, 1
  %v1797 = vperm.slane %v1782, 2
  %v1798 = vperm.slane %v1782, 3
  %v1799 = vperm.slane %v1782, 4
  %v1800 = vperm.slane %v1782, 5
  %v1801 = vperm.slane %v1782, 6
  %v1802 = vperm.slane %v1782, 7
  %v1803 = vperm.slane %v1792, 0
  %v1804 = vperm.slane %v1792, 1
  %v1815 = vmul.f32 %v1712, %v1795
  %v1816 = vmul.f32 %v1713, %v1796
  %v1817 = vmul.f32 %v1714, %v1797
  %v1818 = vmul.f32 %v1715, %v1798
  %v1819 = vmul.f32 %v1716, %v1799
  %v1820 = vmul.f32 %v1717, %v1800
  %v1821 = vmul.f32 %v1718, %v1801
  %v1822 = vmul.f32 %v1719, %v1802
  %v1823 = vmul.f32 %v1720, %v1803
  %v1824 = vmul.f32 %v1721, %v1804
  %v1826 = vperm.slane %v1649, 0
  %v1828 = vrot.slane %v1826, 1
  %v1829 = vrot.slane %v1826, 2
  %v1830 = vrot.slane %v1826, 3
  %v1831 = vrot.slane %v1826, 4
  %v1832 = vrot.slane %v1826, 5
  %v1833 = vrot.slane %v1826, 6
  %v1834 = vrot.slane %v1826, 7
  %v1842 = vmul.f32 %v1815, %v1826
  %v1843 = vmul.f32 %v1816, %v1828
  %v1844 = vmul.f32 %v1817, %v1829
  %v1845 = vmul.f32 %v1818, %v1830
  %v1846 = vmul.f32 %v1819, %v1831
  %v1847 = vmul.f32 %v1820, %v1832
  %v1848 = vmul.f32 %v1821, %v1833
  %v1849 = vmul.f32 %v1822, %v1834
  %v1850 = vmul.f32 %v1823, %v1826
  %v1851 = vmul.f32 %v1824, %v1828
  %v1853 = vperm.slane %v1650, 0
  %v1855 = vrot.slane %v1853, 1
  %v1856 = vrot.slane %v1853, 2
  %v1857 = vrot.slane %v1853, 3
  %v1858 = vrot.slane %v1853, 4
  %v1859 = vrot.slane %v1853, 5
  %v1860 = vrot.slane %v1853, 6
  %v1861 = vrot.slane %v1853, 7
  %v1869 = vadd.f32 %v1842, %v1853
  %v1870 = vadd.f32 %v1843, %v1855
  %v1871 = vadd.f32 %v1844, %v1856
  %v1872 = vadd.f32 %v1845, %v1857
  %v1873 = vadd.f32 %v1846, %v1858
  %v1874 = vadd.f32 %v1847, %v1859
  %v1875 = vadd.f32 %v1848, %v1860
  %v1876 = vadd.f32 %v1849, %v1861
  %v1877 = vadd.f32 %v1850, %v1853
  %v1878 = vadd.f32 %v1851, %v1855
  %v1879 = vld [vmem:[%s35] sm:$0xf]
  %v1880 = vld [vmem:[%s35 + $0x4] sm:$0xf]
  %v1881 = vld [vmem:[%s35 + $0x8] sm:$0xf]
  %v1882 = vld [vmem:[%s35 + $0xc] sm:$0xf]
  %1893 = vst [vmem:[#allocation1] ss:$9 sm:$0xff] %v1869
  %s1894 = scalar_lea.vmem [#allocation1], 1
  %1895 = vst [vmem:[%s1894] ss:$9 sm:$0xff] %v1870
  %s1896 = scalar_lea.vmem [#allocation1], 2
  %1897 = vst [vmem:[%s1896] ss:$9 sm:$0xff] %v1871
  %s1898 = scalar_lea.vmem [#allocation1], 3
  %1899 = vst [vmem:[%s1898] ss:$9 sm:$0xff] %v1872
  %s1900 = scalar_lea.vmem [#allocation1], 4
  %1901 = vst [vmem:[%s1900] ss:$9 sm:$0xff] %v1873
  %s1902 = scalar_lea.vmem [#allocation1], 5
  %1903 = vst [vmem:[%s1902] ss:$9 sm:$0xff] %v1874
  %s1904 = scalar_lea.vmem [#allocation1], 6
  %1905 = vst [vmem:[%s1904] ss:$9 sm:$0xff] %v1875
  %s1906 = scalar_lea.vmem [#allocation1], 7
  %1907 = vst [vmem:[%s1906] ss:$9 sm:$0xff] %v1876
  %v1908 = vld [vmem:[#allocation1] sm:$0xff]
  %1909 = vst [vmem:[#allocation1] ss:$9 sm:$0xff] %v1877
  %1910 = vst [vmem:[%s1894] ss:$9 sm:$0xff] %v1878
  %v1911 = vld [vmem:[#allocation1] sm:$0xff]
  %v1914 = vpack.c.bf16 %v1911, %v1908
  %v1915 = vld [vmem:[%s37] sm:$0x1]
  %v1917 = vperm.slane %v1915, 0
  %v1923 = vunpack.c.l.b16 %v1879
  %v1924 = vunpack.c.l.b16 %v1880
  %v1925 = vunpack.c.l.b16 %v1881
  %v1926 = vunpack.c.l.b16 %v1882
  %v1927 = vpack.c.b16 %v1924, %v1923
  %v1928 = vpack.c.b16 %v1926, %v1925
  %v1932 = vsel %vm324, %v1914, 0
  %1934 = vmatpush.bf16.msra.mxu0 0
  %1935 = vmatpush.bf16.msra.mxu0 0
  %1936 = vmatpush.bf16.msra.mxu0 0
  %1937 = vmatpush.bf16.msra.mxu0 0
  %1938 = vmatpush.bf16.msra.mxu0 0
  %1939 = vmatpush.bf16.msra.mxu0 0
  %1940 = vmatpush.bf16.msra.mxu0 %v1928
  %1941 = vmatpush.bf16.msra.mxu0 %v1927
  %1942 = vmatmul.bf16.gmra.mxu0 %v1932
  %v1943 = vpop.f32.mrf.mxu0
  %v1944 = vadd.f32 %v1917, %v1943
  %v1945 = vpop.f32.mrf.mxu0
  %v1946 = vadd.f32 %v1917, %v1945
  %1947 = vdwg.mxu0
  %v1948 = vmul.f32 %v1944, %v1944
  %v1949 = vmul.f32 %v1946, %v1946
  %v1950 = vmul.f32 %v1944, %v1948
  %v1951 = vmul.f32 %v1946, %v1949
  %v1952 = vmul.f32 %v1950, 0.044715
  %v1953 = vmul.f32 %v1951, 0.044715
  %v1954 = vadd.f32 %v1944, %v1952
  %v1955 = vadd.f32 %v1946, %v1953
  %v1956 = vmul.f32 %v1954, 0.7978846
  %v1957 = vmul.f32 %v1955, 0.7978846
  %v1958 = vtanh.pop %v1956
  %v1959 = vtanh.pop %v1957
  %v1960 = vadd.f32 %v1958, 1.0
  %v1961 = vadd.f32 %v1959, 1.0
  %v1962 = vmul.f32 %v1960, 0.5
  %v1963 = vmul.f32 %v1961, 0.5
  %v1964 = vmul.f32 %v1944, %v1962
  %v1965 = vmul.f32 %v1946, %v1963
  %v1966 = vld [vmem:[%s39] sm:$0xf]
  %v1967 = vld [vmem:[%s39 + $0x4] sm:$0xf]
  %v1968 = vld [vmem:[%s39 + $0x8] sm:$0xf]
  %v1969 = vld [vmem:[%s39 + $0xc] sm:$0xf]
  %v1970 = vld [vmem:[%s39 + $0x10] sm:$0xf]
  %v1971 = vld [vmem:[%s39 + $0x14] sm:$0xf]
  %v1972 = vld [vmem:[%s39 + $0x18] sm:$0xf]
  %v1973 = vld [vmem:[%s39 + $0x1c] sm:$0xf]
  %v1974 = vld [vmem:[%s39 + $0x20] sm:$0xf]
  %v1975 = vld [vmem:[%s39 + $0x24] sm:$0xf]
  %v1976 = vld [vmem:[%s39 + $0x28] sm:$0xf]
  %v1977 = vld [vmem:[%s39 + $0x2c] sm:$0xf]
  %v1978 = vld [vmem:[%s39 + $0x30] sm:$0xf]
  %v1979 = vld [vmem:[%s39 + $0x34] sm:$0xf]
  %v1980 = vld [vmem:[%s39 + $0x38] sm:$0xf]
  %v1981 = vld [vmem:[%s39 + $0x3c] sm:$0xf]
  %v1982 = vpack.c.bf16 %v1965, %v1964
  %v1999 = vunpack.c.l.b16 %v1966
  %v2000 = vunpack.c.l.b16 %v1967
  %v2001 = vunpack.c.l.b16 %v1968
  %v2002 = vunpack.c.l.b16 %v1969
  %v2003 = vunpack.c.l.b16 %v1970
  %v2004 = vunpack.c.l.b16 %v1971
  %v2005 = vunpack.c.l.b16 %v1972
  %v2006 = vunpack.c.l.b16 %v1973
  %v2007 = vunpack.c.l.b16 %v1974
  %v2008 = vunpack.c.l.b16 %v1975
  %v2009 = vunpack.c.l.b16 %v1976
  %v2010 = vunpack.c.l.b16 %v1977
  %v2011 = vunpack.c.l.b16 %v1978
  %v2012 = vunpack.c.l.b16 %v1979
  %v2013 = vunpack.c.l.b16 %v1980
  %v2014 = vunpack.c.l.b16 %v1981
  %v2015 = vpack.c.b16 %v2000, %v1999
  %v2016 = vpack.c.b16 %v2002, %v2001
  %v2017 = vpack.c.b16 %v2004, %v2003
  %v2018 = vpack.c.b16 %v2006, %v2005
  %v2019 = vpack.c.b16 %v2008, %v2007
  %v2020 = vpack.c.b16 %v2010, %v2009
  %v2021 = vpack.c.b16 %v2012, %v2011
  %v2022 = vpack.c.b16 %v2014, %v2013
  %2031 = vmatpush.bf16.msra.mxu0 %v2022
  %2032 = vmatpush.bf16.msra.mxu0 %v2021
  %2033 = vmatpush.bf16.msra.mxu0 %v2020
  %2034 = vmatpush.bf16.msra.mxu0 %v2019
  %2035 = vmatpush.bf16.msra.mxu0 %v2018
  %2036 = vmatpush.bf16.msra.mxu0 %v2017
  %2037 = vmatpush.bf16.msra.mxu0 %v2016
  %2038 = vmatpush.bf16.msra.mxu0 %v2015
  %2039 = vmatmul.bf16.gmra.mxu0 %v1982
  %v2040 = vpop.f32.mrf.mxu0
  %v2041 = vadd.f32 0.0, %v2040
  %v2042 = vpop.f32.mrf.mxu0
  %v2043 = vadd.f32 0.0, %v2042
  %2044 = vdwg.mxu0
  %v2047 = vrot.slane %v2041, 1
  %v2048 = vrot.slane %v2041, 2
  %v2049 = vrot.slane %v2041, 3
  %v2050 = vrot.slane %v2041, 4
  %v2051 = vrot.slane %v2041, 5
  %v2052 = vrot.slane %v2041, 6
  %v2053 = vrot.slane %v2041, 7
  %v2054 = vrot.slane %v2043, 1
  %v2063 = vadd.f32 %v1639, %v2041
  %v2064 = vadd.f32 %v1640, %v2047
  %v2065 = vadd.f32 %v1641, %v2048
  %v2066 = vadd.f32 %v1642, %v2049
  %v2067 = vadd.f32 %v1643, %v2050
  %v2068 = vadd.f32 %v1644, %v2051
  %v2069 = vadd.f32 %v1645, %v2052
  %v2070 = vadd.f32 %v1646, %v2053
  %v2071 = vadd.f32 %v1647, %v2043
  %v2072 = vadd.f32 %v1648, %v2054
  %v2073 = vld [vmem:[%s41] sm:$0x1]
  %v2075 = vperm.slane %v2073, 0
  %v2077 = vrot.slane %v2075, 1
  %v2078 = vrot.slane %v2075, 2
  %v2079 = vrot.slane %v2075, 3
  %v2080 = vrot.slane %v2075, 4
  %v2081 = vrot.slane %v2075, 5
  %v2082 = vrot.slane %v2075, 6
  %v2083 = vrot.slane %v2075, 7
  %v2091 = vadd.f32 %v2063, %v2075
  %v2092 = vadd.f32 %v2064, %v2077
  %v2093 = vadd.f32 %v2065, %v2078
  %v2094 = vadd.f32 %v2066, %v2079
  %v2095 = vadd.f32 %v2067, %v2080
  %v2096 = vadd.f32 %v2068, %v2081
  %v2097 = vadd.f32 %v2069, %v2082
  %v2098 = vadd.f32 %v2070, %v2083
  %v2099 = vadd.f32 %v2071, %v2075
  %v2100 = vadd.f32 %v2072, %v2077
  %s2101 = scalar_lea.vmem %s11, 1
  %v2102 = vld [vmem:[%s2101] sm:$0x1]
  %s2103 = scalar_lea.vmem %s13, 1
  %v2104 = vld [vmem:[%s2103] sm:$0x1]
  %2115 = vst [vmem:[#allocation1] ss:$9 sm:$0xff] %v2091
  %s2116 = scalar_lea.vmem [#allocation1], 1
  %2117 = vst [vmem:[%s2116] ss:$9 sm:$0xff] %v2092
  %s2118 = scalar_lea.vmem [#allocation1], 2
  %2119 = vst [vmem:[%s2118] ss:$9 sm:$0xff] %v2093
  %s2120 = scalar_lea.vmem [#allocation1], 3
  %2121 = vst [vmem:[%s2120] ss:$9 sm:$0xff] %v2094
  %s2122 = scalar_lea.vmem [#allocation1], 4
  %2123 = vst [vmem:[%s2122] ss:$9 sm:$0xff] %v2095
  %s2124 = scalar_lea.vmem [#allocation1], 5
  %2125 = vst [vmem:[%s2124] ss:$9 sm:$0xff] %v2096
  %s2126 = scalar_lea.vmem [#allocation1], 6
  %2127 = vst [vmem:[%s2126] ss:$9 sm:$0xff] %v2097
  %s2128 = scalar_lea.vmem [#allocation1], 7
  %2129 = vst [vmem:[%s2128] ss:$9 sm:$0xff] %v2098
  %v2130 = vld [vmem:[#allocation1] sm:$0xff]
  %2131 = vst [vmem:[#allocation1] ss:$9 sm:$0xff] %v2099
  %2132 = vst [vmem:[%s2116] ss:$9 sm:$0xff] %v2100
  %v2133 = vld [vmem:[#allocation1] sm:$0xff]
  %v2136 = vsel %vm324, %v2130, 0.0
  %2137 = vadd.xlane.f32.xlu0 %v2136
  %v2138 = vpop.xlane.xlu0 %2137
  %v2139 = vsel %vm328, %v2133, 0.0
  %2140 = vadd.xlane.f32.xlu0 %v2139
  %v2141 = vpop.xlane.xlu0 %2140
  %v2142 = vmul.f32 %v2138, %v338
  %v2143 = vmul.f32 %v2141, %v338
  %v2146 = vperm.slane %v2142, 0
  %v2147 = vperm.slane %v2142, 1
  %v2148 = vperm.slane %v2142, 2
  %v2149 = vperm.slane %v2142, 3
  %v2150 = vperm.slane %v2142, 4
  %v2151 = vperm.slane %v2142, 5
  %v2152 = vperm.slane %v2142, 6
  %v2153 = vperm.slane %v2142, 7
  %v2154 = vperm.slane %v2143, 0
  %v2155 = vperm.slane %v2143, 1
  %v2166 = vsub.f32 %v2091, %v2146
  %v2167 = vsub.f32 %v2092, %v2147
  %v2168 = vsub.f32 %v2093, %v2148
  %v2169 = vsub.f32 %v2094, %v2149
  %v2170 = vsub.f32 %v2095, %v2150
  %v2171 = vsub.f32 %v2096, %v2151
  %v2172 = vsub.f32 %v2097, %v2152
  %v2173 = vsub.f32 %v2098, %v2153
  %v2174 = vsub.f32 %v2099, %v2154
  %v2175 = vsub.f32 %v2100, %v2155
  %v2176 = vmul.f32 %v2166, %v2166
  %v2177 = vmul.f32 %v2167, %v2167
  %v2178 = vmul.f32 %v2168, %v2168
  %v2179 = vmul.f32 %v2169, %v2169
  %v2180 = vmul.f32 %v2170, %v2170
  %v2181 = vmul.f32 %v2171, %v2171
  %v2182 = vmul.f32 %v2172, %v2172
  %v2183 = vmul.f32 %v2173, %v2173
  %v2184 = vmul.f32 %v2174, %v2174
  %v2185 = vmul.f32 %v2175, %v2175
  %2196 = vst [vmem:[#allocation1] ss:$9 sm:$0xff] %v2176
  %s2197 = scalar_lea.vmem [#allocation1], 1
  %2198 = vst [vmem:[%s2197] ss:$9 sm:$0xff] %v2177
  %s2199 = scalar_lea.vmem [#allocation1], 2
  %2200 = vst [vmem:[%s2199] ss:$9 sm:$0xff] %v2178
  %s2201 = scalar_lea.vmem [#allocation1], 3
  %2202 = vst [vmem:[%s2201] ss:$9 sm:$0xff] %v2179
  %s2203 = scalar_lea.vmem [#allocation1], 4
  %2204 = vst [vmem:[%s2203] ss:$9 sm:$0xff] %v2180
  %s2205 = scalar_lea.vmem [#allocation1], 5
  %2206 = vst [vmem:[%s2205] ss:$9 sm:$0xff] %v2181
  %s2207 = scalar_lea.vmem [#allocation1], 6
  %2208 = vst [vmem:[%s2207] ss:$9 sm:$0xff] %v2182
  %s2209 = scalar_lea.vmem [#allocation1], 7
  %2210 = vst [vmem:[%s2209] ss:$9 sm:$0xff] %v2183
  %v2211 = vld [vmem:[#allocation1] sm:$0xff]
  %2212 = vst [vmem:[#allocation1] ss:$9 sm:$0xff] %v2184
  %2213 = vst [vmem:[%s2197] ss:$9 sm:$0xff] %v2185
  %v2214 = vld [vmem:[#allocation1] sm:$0xff]
  %v2217 = vsel %vm324, %v2211, 0.0
  %2218 = vadd.xlane.f32.xlu0 %v2217
  %v2219 = vpop.xlane.xlu0 %2218
  %v2220 = vsel %vm328, %v2214, 0.0
  %2221 = vadd.xlane.f32.xlu0 %v2220
  %v2222 = vpop.xlane.xlu0 %2221
  %v2223 = vmul.f32 %v2219, %v338
  %v2224 = vmul.f32 %v2222, %v338
  %v2225 = vadd.f32 %v2223, 1e-06
  %v2226 = vadd.f32 %v2224, 1e-06
  %v2227 = vrsqrt.pop %v2225
  %v2228 = vmul.f32 %v2227, %v2225
  %v2229 = vmul.f32 %v2228, %v2227
  %v2230 = vmul.f32 0.5, %v2229
  %v2231 = vsub.f32 1.5, %v2230
  %v2232 = vmul.f32 %v2227, %v2231
  %vm2233 = vweird.f32 %v2225
  %vm2234 = vweird.f32 %v2227
  %vm2235 = vmor %vm2233, %vm2234
  %v2236 = vsel %vm2235, %v2227, %v2232
  %v2237 = vrsqrt.pop %v2226
  %v2238 = vmul.f32 %v2237, %v2226
  %v2239 = vmul.f32 %v2238, %v2237
  %v2240 = vmul.f32 0.5, %v2239
  %v2241 = vsub.f32 1.5, %v2240
  %v2242 = vmul.f32 %v2237, %v2241
  %vm2243 = vweird.f32 %v2226
  %vm2244 = vweird.f32 %v2237
  %vm2245 = vmor %vm2243, %vm2244
  %v2246 = vsel %vm2245, %v2237, %v2242
  %v2249 = vperm.slane %v2236, 0
  %v2250 = vperm.slane %v2236, 1
  %v2251 = vperm.slane %v2236, 2
  %v2252 = vperm.slane %v2236, 3
  %v2253 = vperm.slane %v2236, 4
  %v2254 = vperm.slane %v2236, 5
  %v2255 = vperm.slane %v2236, 6
  %v2256 = vperm.slane %v2236, 7
  %v2257 = vperm.slane %v2246, 0
  %v2258 = vperm.slane %v2246, 1
  %v2269 = vmul.f32 %v2166, %v2249
  %v2270 = vmul.f32 %v2167, %v2250
  %v2271 = vmul.f32 %v2168, %v2251
  %v2272 = vmul.f32 %v2169, %v2252
  %v2273 = vmul.f32 %v2170, %v2253
  %v2274 = vmul.f32 %v2171, %v2254
  %v2275 = vmul.f32 %v2172, %v2255
  %v2276 = vmul.f32 %v2173, %v2256
  %v2277 = vmul.f32 %v2174, %v2257
  %v2278 = vmul.f32 %v2175, %v2258
  %v2280 = vperm.slane %v2102, 0
  %v2282 = vrot.slane %v2280, 1
  %v2283 = vrot.slane %v2280, 2
  %v2284 = vrot.slane %v2280, 3
  %v2285 = vrot.slane %v2280, 4
  %v2286 = vrot.slane %v2280, 5
  %v2287 = vrot.slane %v2280, 6
  %v2288 = vrot.slane %v2280, 7
  %v2296 = vmul.f32 %v2269, %v2280
  %v2297 = vmul.f32 %v2270, %v2282
  %v2298 = vmul.f32 %v2271, %v2283
  %v2299 = vmul.f32 %v2272, %v2284
  %v2300 = vmul.f32 %v2273, %v2285
  %v2301 = vmul.f32 %v2274, %v2286
  %v2302 = vmul.f32 %v2275, %v2287
  %v2303 = vmul.f32 %v2276, %v2288
  %v2304 = vmul.f32 %v2277, %v2280
  %v2305 = vmul.f32 %v2278, %v2282
  %v2307 = vperm.slane %v2104, 0
  %v2309 = vrot.slane %v2307, 1
  %v2310 = vrot.slane %v2307, 2
  %v2311 = vrot.slane %v2307, 3
  %v2312 = vrot.slane %v2307, 4
  %v2313 = vrot.slane %v2307, 5
  %v2314 = vrot.slane %v2307, 6
  %v2315 = vrot.slane %v2307, 7
  %v2323 = vadd.f32 %v2296, %v2307
  %v2324 = vadd.f32 %v2297, %v2309
  %v2325 = vadd.f32 %v2298, %v2310
  %v2326 = vadd.f32 %v2299, %v2311
  %v2327 = vadd.f32 %v2300, %v2312
  %v2328 = vadd.f32 %v2301, %v2313
  %v2329 = vadd.f32 %v2302, %v2314
  %v2330 = vadd.f32 %v2303, %v2315
  %v2331 = vadd.f32 %v2304, %v2307
  %v2332 = vadd.f32 %v2305, %v2309
  %s2333 = scalar_lea.vmem %s15, 16
  %v2334 = vld [vmem:[%s2333] sm:$0xf]
  %v2335 = vld [vmem:[%s2333 + $0x4] sm:$0xf]
  %v2336 = vld [vmem:[%s2333 + $0x8] sm:$0xf]
  %v2337 = vld [vmem:[%s2333 + $0xc] sm:$0xf]
  %2348 = vst [vmem:[#allocation1] ss:$9 sm:$0xff] %v2323
  %s2349 = scalar_lea.vmem [#allocation1], 1
  %2350 = vst [vmem:[%s2349] ss:$9 sm:$0xff] %v2324
  %s2351 = scalar_lea.vmem [#allocation1], 2
  %2352 = vst [vmem:[%s2351] ss:$9 sm:$0xff] %v2325
  %s2353 = scalar_lea.vmem [#allocation1], 3
  %2354 = vst [vmem:[%s2353] ss:$9 sm:$0xff] %v2326
  %s2355 = scalar_lea.vmem [#allocation1], 4
  %2356 = vst [vmem:[%s2355] ss:$9 sm:$0xff] %v2327
  %s2357 = scalar_lea.vmem [#allocation1], 5
  %2358 = vst [vmem:[%s2357] ss:$9 sm:$0xff] %v2328
  %s2359 = scalar_lea.vmem [#allocation1], 6
  %2360 = vst [vmem:[%s2359] ss:$9 sm:$0xff] %v2329
  %s2361 = scalar_lea.vmem [#allocation1], 7
  %2362 = vst [vmem:[%s2361] ss:$9 sm:$0xff] %v2330
  %v2363 = vld [vmem:[#allocation1] sm:$0xff]
  %2364 = vst [vmem:[#allocation1] ss:$9 sm:$0xff] %v2331
  %2365 = vst [vmem:[%s2349] ss:$9 sm:$0xff] %v2332
  %v2366 = vld [vmem:[#allocation1] sm:$0xff]
  %v2369 = vpack.c.bf16 %v2366, %v2363
  %s2370 = scalar_lea.vmem %s17, 1
  %v2371 = vld [vmem:[%s2370] sm:$0x1]
  %v2373 = vperm.slane %v2371, 0
  %v2379 = vunpack.c.l.b16 %v2334
  %v2380 = vunpack.c.l.b16 %v2335
  %v2381 = vunpack.c.l.b16 %v2336
  %v2382 = vunpack.c.l.b16 %v2337
  %v2383 = vpack.c.b16 %v2380, %v2379
  %v2384 = vpack.c.b16 %v2382, %v2381
  %v2388 = vsel %vm324, %v2369, 0
  %2390 = vmatpush.bf16.msra.mxu0 0
  %2391 = vmatpush.bf16.msra.mxu0 0
  %2392 = vmatpush.bf16.msra.mxu0 0
  %2393 = vmatpush.bf16.msra.mxu0 0
  %2394 = vmatpush.bf16.msra.mxu0 0
  %2395 = vmatpush.bf16.msra.mxu0 0
  %2396 = vmatpush.bf16.msra.mxu0 %v2384
  %2397 = vmatpush.bf16.msra.mxu0 %v2383
  %2398 = vmatmul.bf16.gmra.mxu0 %v2388
  %v2399 = vpop.f32.mrf.mxu0
  %v2400 = vadd.f32 %v2373, %v2399
  %v2401 = vpop.f32.mrf.mxu0
  %v2402 = vadd.f32 %v2373, %v2401
  %2403 = vdwg.mxu0
  %v2406 = vrot.slane %v2400, 1
  %v2407 = vrot.slane %v2400, 2
  %v2408 = vrot.slane %v2400, 3
  %v2409 = vrot.slane %v2400, 4
  %v2410 = vrot.slane %v2400, 5
  %v2411 = vrot.slane %v2400, 6
  %v2412 = vrot.slane %v2400, 7
  %v2413 = vrot.slane %v2402, 1
  %s2414 = scalar_lea.vmem %s19, 16
  %v2415 = vld [vmem:[%s2414] sm:$0xf]
  %v2416 = vld [vmem:[%s2414 + $0x4] sm:$0xf]
  %v2417 = vld [vmem:[%s2414 + $0x8] sm:$0xf]
  %v2418 = vld [vmem:[%s2414 + $0xc] sm:$0xf]
  %s2419 = scalar_lea.vmem %s21, 1
  %v2420 = vld [vmem:[%s2419] sm:$0x1]
  %v2422 = vperm.slane %v2420, 0
  %v2428 = vunpack.c.l.b16 %v2415
  %v2429 = vunpack.c.l.b16 %v2416
  %v2430 = vunpack.c.l.b16 %v2417
  %v2431 = vunpack.c.l.b16 %v2418
  %v2432 = vpack.c.b16 %v2429, %v2428
  %v2433 = vpack.c.b16 %v2431, %v2430
  %2436 = vmatpush.bf16.msra.mxu0 0
  %2437 = vmatpush.bf16.msra.mxu0 0
  %2438 = vmatpush.bf16.msra.mxu0 0
  %2439 = vmatpush.bf16.msra.mxu0 0
  %2440 = vmatpush.bf16.msra.mxu0 0
  %2441 = vmatpush.bf16.msra.mxu0 0
  %2442 = vmatpush.bf16.msra.mxu0 %v2433
  %2443 = vmatpush.bf16.msra.mxu0 %v2432
  %2444 = vmatmul.bf16.gmra.mxu0 %v2388
  %v2445 = vpop.f32.mrf.mxu0
  %v2446 = vadd.f32 %v2422, %v2445
  %v2447 = vpop.f32.mrf.mxu0
  %v2448 = vadd.f32 %v2422, %v2447
  %2449 = vdwg.mxu0
  %v2452 = vrot.slane %v2446, 1
  %v2453 = vrot.slane %v2446, 2
  %v2454 = vrot.slane %v2446, 3
  %v2455 = vrot.slane %v2446, 4
  %v2456 = vrot.slane %v2446, 5
  %v2457 = vrot.slane %v2446, 6
  %v2458 = vrot.slane %v2446, 7
  %v2459 = vrot.slane %v2448, 1
  %s2460 = scalar_lea.vmem %s23, 16
  %v2461 = vld [vmem:[%s2460] sm:$0xf]
  %v2462 = vld [vmem:[%s2460 + $0x4] sm:$0xf]
  %v2463 = vld [vmem:[%s2460 + $0x8] sm:$0xf]
  %v2464 = vld [vmem:[%s2460 + $0xc] sm:$0xf]
  %s2465 = scalar_lea.vmem %s25, 1
  %v2466 = vld [vmem:[%s2465] sm:$0x1]
  %v2468 = vperm.slane %v2466, 0
  %v2474 = vunpack.c.l.b16 %v2461
  %v2475 = vunpack.c.l.b16 %v2462
  %v2476 = vunpack.c.l.b16 %v2463
  %v2477 = vunpack.c.l.b16 %v2464
  %v2478 = vpack.c.b16 %v2475, %v2474
  %v2479 = vpack.c.b16 %v2477, %v2476
  %2482 = vmatpush.bf16.msra.mxu0 0
  %2483 = vmatpush.bf16.msra.mxu0 0
  %2484 = vmatpush.bf16.msra.mxu0 0
  %2485 = vmatpush.bf16.msra.mxu0 0
  %2486 = vmatpush.bf16.msra.mxu0 0
  %2487 = vmatpush.bf16.msra.mxu0 0
  %2488 = vmatpush.bf16.msra.mxu0 %v2479
  %2489 = vmatpush.bf16.msra.mxu0 %v2478
  %2490 = vmatmul.bf16.gmra.mxu0 %v2388
  %v2491 = vpop.f32.mrf.mxu0
  %v2492 = vadd.f32 %v2468, %v2491
  %v2493 = vpop.f32.mrf.mxu0
  %v2494 = vadd.f32 %v2468, %v2493
  %2495 = vdwg.mxu0
  %v2498 = vrot.slane %v2492, 1
  %v2499 = vrot.slane %v2492, 2
  %v2500 = vrot.slane %v2492, 3
  %v2501 = vrot.slane %v2492, 4
  %v2502 = vrot.slane %v2492, 5
  %v2503 = vrot.slane %v2492, 6
  %v2504 = vrot.slane %v2492, 7
  %v2505 = vrot.slane %v2494, 1
  %2506 = vrot.lane.b32.xlu0 %v2400, 120
  %v2507 = vpop.permute.xlu0 %2506
  %2508 = vrot.lane.b32.xlu0 %v2406, 120
  %v2509 = vpop.permute.xlu0 %2508
  %2510 = vrot.lane.b32.xlu0 %v2407, 120
  %v2511 = vpop.permute.xlu0 %2510
  %2512 = vrot.lane.b32.xlu0 %v2408, 120
  %v2513 = vpop.permute.xlu0 %2512
  %2514 = vrot.lane.b32.xlu0 %v2409, 120
  %v2515 = vpop.permute.xlu0 %2514
  %2516 = vrot.lane.b32.xlu0 %v2410, 120
  %v2517 = vpop.permute.xlu0 %2516
  %2518 = vrot.lane.b32.xlu0 %v2411, 120
  %v2519 = vpop.permute.xlu0 %2518
  %2520 = vrot.lane.b32.xlu0 %v2412, 120
  %v2521 = vpop.permute.xlu0 %2520
  %2522 = vrot.lane.b32.xlu0 %v2402, 120
  %v2523 = vpop.permute.xlu0 %2522
  %2524 = vrot.lane.b32.xlu0 %v2413, 120
  %v2525 = vpop.permute.xlu0 %2524
  %2526 = vrot.lane.b32.xlu0 %v2400, 112
  %v2527 = vpop.permute.xlu0 %2526
  %2528 = vrot.lane.b32.xlu0 %v2406, 112
  %v2529 = vpop.permute.xlu0 %2528
  %2530 = vrot.lane.b32.xlu0 %v2407, 112
  %v2531 = vpop.permute.xlu0 %2530
  %2532 = vrot.lane.b32.xlu0 %v2408, 112
  %v2533 = vpop.permute.xlu0 %2532
  %2534 = vrot.lane.b32.xlu0 %v2409, 112
  %v2535 = vpop.permute.xlu0 %2534
  %2536 = vrot.lane.b32.xlu0 %v2410, 112
  %v2537 = vpop.permute.xlu0 %2536
  %2538 = vrot.lane.b32.xlu0 %v2411, 112
  %v2539 = vpop.permute.xlu0 %2538
  %2540 = vrot.lane.b32.xlu0 %v2412, 112
  %v2541 = vpop.permute.xlu0 %2540
  %2542 = vrot.lane.b32.xlu0 %v2402, 112
  %v2543 = vpop.permute.xlu0 %2542
  %2544 = vrot.lane.b32.xlu0 %v2413, 112
  %v2545 = vpop.permute.xlu0 %2544
  %2546 = vrot.lane.b32.xlu0 %v2400, 104
  %v2547 = vpop.permute.xlu0 %2546
  %2548 = vrot.lane.b32.xlu0 %v2406, 104
  %v2549 = vpop.permute.xlu0 %2548
  %2550 = vrot.lane.b32.xlu0 %v2407, 104
  %v2551 = vpop.permute.xlu0 %2550
  %2552 = vrot.lane.b32.xlu0 %v2408, 104
  %v2553 = vpop.permute.xlu0 %2552
  %2554 = vrot.lane.b32.xlu0 %v2409, 104
  %v2555 = vpop.permute.xlu0 %2554
  %2556 = vrot.lane.b32.xlu0 %v2410, 104
  %v2557 = vpop.permute.xlu0 %2556
  %2558 = vrot.lane.b32.xlu0 %v2411, 104
  %v2559 = vpop.permute.xlu0 %2558
  %2560 = vrot.lane.b32.xlu0 %v2412, 104
  %v2561 = vpop.permute.xlu0 %2560
  %2562 = vrot.lane.b32.xlu0 %v2402, 104
  %v2563 = vpop.permute.xlu0 %2562
  %2564 = vrot.lane.b32.xlu0 %v2413, 104
  %v2565 = vpop.permute.xlu0 %2564
  %2566 = vrot.lane.b32.xlu0 %v2446, 120
  %v2567 = vpop.permute.xlu0 %2566
  %2568 = vrot.lane.b32.xlu0 %v2452, 120
  %v2569 = vpop.permute.xlu0 %2568
  %2570 = vrot.lane.b32.xlu0 %v2453, 120
  %v2571 = vpop.permute.xlu0 %2570
  %2572 = vrot.lane.b32.xlu0 %v2454, 120
  %v2573 = vpop.permute.xlu0 %2572
  %2574 = vrot.lane.b32.xlu0 %v2455, 120
  %v2575 = vpop.permute.xlu0 %2574
  %2576 = vrot.lane.b32.xlu0 %v2456, 120
  %v2577 = vpop.permute.xlu0 %2576
  %2578 = vrot.lane.b32.xlu0 %v2457, 120
  %v2579 = vpop.permute.xlu0 %2578
  %2580 = vrot.lane.b32.xlu0 %v2458, 120
  %v2581 = vpop.permute.xlu0 %2580
  %2582 = vrot.lane.b32.xlu0 %v2448, 120
  %v2583 = vpop.permute.xlu0 %2582
  %2584 = vrot.lane.b32.xlu0 %v2459, 120
  %v2585 = vpop.permute.xlu0 %2584
  %2586 = vrot.lane.b32.xlu0 %v2446, 112
  %v2587 = vpop.permute.xlu0 %2586
  %2588 = vrot.lane.b32.xlu0 %v2452, 112
  %v2589 = vpop.permute.xlu0 %2588
  %2590 = vrot.lane.b32.xlu0 %v2453, 112
  %v2591 = vpop.permute.xlu0 %2590
  %2592 = vrot.lane.b32.xlu0 %v2454, 112
  %v2593 = vpop.permute.xlu0 %2592
  %2594 = vrot.lane.b32.xlu0 %v2455, 112
  %v2595 = vpop.permute.xlu0 %2594
  %2596 = vrot.lane.b32.xlu0 %v2456, 112
  %v2597 = vpop.permute.xlu0 %2596
  %2598 = vrot.lane.b32.xlu0 %v2457, 112
  %v2599 = vpop.permute.xlu0 %2598
  %2600 = vrot.lane.b32.xlu0 %v2458, 112
  %v2601 = vpop.permute.xlu0 %2600
  %2602 = vrot.lane.b32.xlu0 %v2448, 112
  %v2603 = vpop.permute.xlu0 %2602
  %2604 = vrot.lane.b32.xlu0 %v2459, 112
  %v2605 = vpop.permute.xlu0 %2604
  %2606 = vrot.lane.b32.xlu0 %v2446, 104
  %v2607 = vpop.permute.xlu0 %2606
  %2608 = vrot.lane.b32.xlu0 %v2452, 104
  %v2609 = vpop.permute.xlu0 %2608
  %2610 = vrot.lane.b32.xlu0 %v2453, 104
  %v2611 = vpop.permute.xlu0 %2610
  %2612 = vrot.lane.b32.xlu0 %v2454, 104
  %v2613 = vpop.permute.xlu0 %2612
  %2614 = vrot.lane.b32.xlu0 %v2455, 104
  %v2615 = vpop.permute.xlu0 %2614
  %2616 = vrot.lane.b32.xlu0 %v2456, 104
  %v2617 = vpop.permute.xlu0 %2616
  %2618 = vrot.lane.b32.xlu0 %v2457, 104
  %v2619 = vpop.permute.xlu0 %2618
  %2620 = vrot.lane.b32.xlu0 %v2458, 104
  %v2621 = vpop.permute.xlu0 %2620
  %2622 = vrot.lane.b32.xlu0 %v2448, 104
  %v2623 = vpop.permute.xlu0 %2622
  %2624 = vrot.lane.b32.xlu0 %v2459, 104
  %v2625 = vpop.permute.xlu0 %2624
  %2626 = vrot.lane.b32.xlu0 %v2492, 120
  %v2627 = vpop.permute.xlu0 %2626
  %2628 = vrot.lane.b32.xlu0 %v2498, 120
  %v2629 = vpop.permute.xlu0 %2628
  %2630 = vrot.lane.b32.xlu0 %v2499, 120
  %v2631 = vpop.permute.xlu0 %2630
  %2632 = vrot.lane.b32.xlu0 %v2500, 120
  %v2633 = vpop.permute.xlu0 %2632
  %2634 = vrot.lane.b32.xlu0 %v2501, 120
  %v2635 = vpop.permute.xlu0 %2634
  %2636 = vrot.lane.b32.xlu0 %v2502, 120
  %v2637 = vpop.permute.xlu0 %2636
  %2638 = vrot.lane.b32.xlu0 %v2503, 120
  %v2639 = vpop.permute.xlu0 %2638
  %2640 = vrot.lane.b32.xlu0 %v2504, 120
  %v2641 = vpop.permute.xlu0 %2640
  %2642 = vrot.lane.b32.xlu0 %v2494, 120
  %v2643 = vpop.permute.xlu0 %2642
  %2644 = vrot.lane.b32.xlu0 %v2505, 120
  %v2645 = vpop.permute.xlu0 %2644
  %2646 = vrot.lane.b32.xlu0 %v2492, 112
  %v2647 = vpop.permute.xlu0 %2646
  %2648 = vrot.lane.b32.xlu0 %v2498, 112
  %v2649 = vpop.permute.xlu0 %2648
  %2650 = vrot.lane.b32.xlu0 %v2499, 112
  %v2651 = vpop.permute.xlu0 %2650
  %2652 = vrot.lane.b32.xlu0 %v2500, 112
  %v2653 = vpop.permute.xlu0 %2652
  %2654 = vrot.lane.b32.xlu0 %v2501, 112
  %v2655 = vpop.permute.xlu0 %2654
  %2656 = vrot.lane.b32.xlu0 %v2502, 112
  %v2657 = vpop.permute.xlu0 %2656
  %2658 = vrot.lane.b32.xlu0 %v2503, 112
  %v2659 = vpop.permute.xlu0 %2658
  %2660 = vrot.lane.b32.xlu0 %v2504, 112
  %v2661 = vpop.permute.xlu0 %2660
  %2662 = vrot.lane.b32.xlu0 %v2494, 112
  %v2663 = vpop.permute.xlu0 %2662
  %2664 = vrot.lane.b32.xlu0 %v2505, 112
  %v2665 = vpop.permute.xlu0 %2664
  %2666 = vrot.lane.b32.xlu0 %v2492, 104
  %v2667 = vpop.permute.xlu0 %2666
  %2668 = vrot.lane.b32.xlu0 %v2498, 104
  %v2669 = vpop.permute.xlu0 %2668
  %2670 = vrot.lane.b32.xlu0 %v2499, 104
  %v2671 = vpop.permute.xlu0 %2670
  %2672 = vrot.lane.b32.xlu0 %v2500, 104
  %v2673 = vpop.permute.xlu0 %2672
  %2674 = vrot.lane.b32.xlu0 %v2501, 104
  %v2675 = vpop.permute.xlu0 %2674
  %2676 = vrot.lane.b32.xlu0 %v2502, 104
  %v2677 = vpop.permute.xlu0 %2676
  %2678 = vrot.lane.b32.xlu0 %v2503, 104
  %v2679 = vpop.permute.xlu0 %2678
  %2680 = vrot.lane.b32.xlu0 %v2504, 104
  %v2681 = vpop.permute.xlu0 %2680
  %2682 = vrot.lane.b32.xlu0 %v2494, 104
  %v2683 = vpop.permute.xlu0 %2682
  %2684 = vrot.lane.b32.xlu0 %v2505, 104
  %v2685 = vpop.permute.xlu0 %2684
  %2686 = vst [vmem:[#allocation1] ss:$9 sm:$0xff] %v2400
  %s2687 = scalar_lea.vmem [#allocation1], 1
  %2688 = vst [vmem:[%s2687] ss:$9 sm:$0xff] %v2406
  %s2689 = scalar_lea.vmem [#allocation1], 2
  %2690 = vst [vmem:[%s2689] ss:$9 sm:$0xff] %v2407
  %s2691 = scalar_lea.vmem [#allocation1], 3
  %2692 = vst [vmem:[%s2691] ss:$9 sm:$0xff] %v2408
  %s2693 = scalar_lea.vmem [#allocation1], 4
  %2694 = vst [vmem:[%s2693] ss:$9 sm:$0xff] %v2409
  %v2695 = vld [vmem:[#allocation1] sm:$0xff]
  %2696 = vst [vmem:[#allocation1] ss:$9 sm:$0xff] %v2410
  %2697 = vst [vmem:[%s2687] ss:$9 sm:$0xff] %v2411
  %2698 = vst [vmem:[%s2689] ss:$9 sm:$0xff] %v2412
  %2699 = vst [vmem:[%s2691] ss:$9 sm:$0xff] %v2402
  %2700 = vst [vmem:[%s2693] ss:$9 sm:$0xff] %v2413
  %v2701 = vld [vmem:[#allocation1] sm:$0xff]
  %2702 = vst [vmem:[#allocation1] ss:$9 sm:$0xff] %v2507
  %2703 = vst [vmem:[%s2687] ss:$9 sm:$0xff] %v2509
  %2704 = vst [vmem:[%s2689] ss:$9 sm:$0xff] %v2511
  %2705 = vst [vmem:[%s2691] ss:$9 sm:$0xff] %v2513
  %2706 = vst [vmem:[%s2693] ss:$9 sm:$0xff] %v2515
  %v2707 = vld [vmem:[#allocation1] sm:$0xff]
  %2708 = vst [vmem:[#allocation1] ss:$9 sm:$0xff] %v2517
  %2709 = vst [vmem:[%s2687] ss:$9 sm:$0xff] %v2519
  %2710 = vst [vmem:[%s2689] ss:$9 sm:$0xff] %v2521
  %2711 = vst [vmem:[%s2691] ss:$9 sm:$0xff] %v2523
  %2712 = vst [vmem:[%s2693] ss:$9 sm:$0xff] %v2525
  %v2713 = vld [vmem:[#allocation1] sm:$0xff]
  %2714 = vst [vmem:[#allocation1] ss:$9 sm:$0xff] %v2527
  %2715 = vst [vmem:[%s2687] ss:$9 sm:$0xff] %v2529
  %2716 = vst [vmem:[%s2689] ss:$9 sm:$0xff] %v2531
  %2717 = vst [vmem:[%s2691] ss:$9 sm:$0xff] %v2533
  %2718 = vst [vmem:[%s2693] ss:$9 sm:$0xff] %v2535
  %v2719 = vld [vmem:[#allocation1] sm:$0xff]
  %2720 = vst [vmem:[#allocation1] ss:$9 sm:$0xff] %v2537
  %2721 = vst [vmem:[%s2687] ss:$9 sm:$0xff] %v2539
  %2722 = vst [vmem:[%s2689] ss:$9 sm:$0xff] %v2541
  %2723 = vst [vmem:[%s2691] ss:$9 sm:$0xff] %v2543
  %2724 = vst [vmem:[%s2693] ss:$9 sm:$0xff] %v2545
  %v2725 = vld [vmem:[#allocation1] sm:$0xff]
  %2726 = vst [vmem:[#allocation1] ss:$9 sm:$0xff] %v2547
  %2727 = vst [vmem:[%s2687] ss:$9 sm:$0xff] %v2549
  %2728 = vst [vmem:[%s2689] ss:$9 sm:$0xff] %v2551
  %2729 = vst [vmem:[%s2691] ss:$9 sm:$0xff] %v2553
  %2730 = vst [vmem:[%s2693] ss:$9 sm:$0xff] %v2555
  %v2731 = vld [vmem:[#allocation1] sm:$0xff]
  %2732 = vst [vmem:[#allocation1] ss:$9 sm:$0xff] %v2557
  %2733 = vst [vmem:[%s2687] ss:$9 sm:$0xff] %v2559
  %2734 = vst [vmem:[%s2689] ss:$9 sm:$0xff] %v2561
  %2735 = vst [vmem:[%s2691] ss:$9 sm:$0xff] %v2563
  %2736 = vst [vmem:[%s2693] ss:$9 sm:$0xff] %v2565
  %v2737 = vld [vmem:[#allocation1] sm:$0xff]
  %v2746 = vpack.c.bf16 %v2695, %v2695
  %v2747 = vpack.c.bf16 %v2701, %v2701
  %v2748 = vpack.c.bf16 %v2707, %v2707
  %v2749 = vpack.c.bf16 %v2713, %v2713
  %v2750 = vpack.c.bf16 %v2719, %v2719
  %v2751 = vpack.c.bf16 %v2725, %v2725
  %v2752 = vpack.c.bf16 %v2731, %v2731
  %v2753 = vpack.c.bf16 %v2737, %v2737
  %2754 = vst [vmem:[#allocation1] ss:$9 sm:$0xff] %v2446
  %s2755 = scalar_lea.vmem [#allocation1], 1
  %2756 = vst [vmem:[%s2755] ss:$9 sm:$0xff] %v2452
  %s2757 = scalar_lea.vmem [#allocation1], 2
  %2758 = vst [vmem:[%s2757] ss:$9 sm:$0xff] %v2453
  %s2759 = scalar_lea.vmem [#allocation1], 3
  %2760 = vst [vmem:[%s2759] ss:$9 sm:$0xff] %v2454
  %s2761 = scalar_lea.vmem [#allocation1], 4
  %2762 = vst [vmem:[%s2761] ss:$9 sm:$0xff] %v2455
  %v2763 = vld [vmem:[#allocation1] sm:$0xff]
  %2764 = vst [vmem:[#allocation1] ss:$9 sm:$0xff] %v2456
  %2765 = vst [vmem:[%s2755] ss:$9 sm:$0xff] %v2457
  %2766 = vst [vmem:[%s2757] ss:$9 sm:$0xff] %v2458
  %2767 = vst [vmem:[%s2759] ss:$9 sm:$0xff] %v2448
  %2768 = vst [vmem:[%s2761] ss:$9 sm:$0xff] %v2459
  %v2769 = vld [vmem:[#allocation1] sm:$0xff]
  %2770 = vst [vmem:[#allocation1] ss:$9 sm:$0xff] %v2567
  %2771 = vst [vmem:[%s2755] ss:$9 sm:$0xff] %v2569
  %2772 = vst [vmem:[%s2757] ss:$9 sm:$0xff] %v2571
  %2773 = vst [vmem:[%s2759] ss:$9 sm:$0xff] %v2573
  %2774 = vst [vmem:[%s2761] ss:$9 sm:$0xff] %v2575
  %v2775 = vld [vmem:[#allocation1] sm:$0xff]
  %2776 = vst [vmem:[#allocation1] ss:$9 sm:$0xff] %v2577
  %2777 = vst [vmem:[%s2755] ss:$9 sm:$0xff] %v2579
  %2778 = vst [vmem:[%s2757] ss:$9 sm:$0xff] %v2581
  %2779 = vst [vmem:[%s2759] ss:$9 sm:$0xff] %v2583
  %2780 = vst [vmem:[%s2761] ss:$9 sm:$0xff] %v2585
  %v2781 = vld [vmem:[#allocation1] sm:$0xff]
  %2782 = vst [vmem:[#allocation1] ss:$9 sm:$0xff] %v2587
  %2783 = vst [vmem:[%s2755] ss:$9 sm:$0xff] %v2589
  %2784 = vst [vmem:[%s2757] ss:$9 sm:$0xff] %v2591
  %2785 = vst [vmem:[%s2759] ss:$9 sm:$0xff] %v2593
  %2786 = vst [vmem:[%s2761] ss:$9 sm:$0xff] %v2595
  %v2787 = vld [vmem:[#allocation1] sm:$0xff]
  %2788 = vst [vmem:[#allocation1] ss:$9 sm:$0xff] %v2597
  %2789 = vst [vmem:[%s2755] ss:$9 sm:$0xff] %v2599
  %2790 = vst [vmem:[%s2757] ss:$9 sm:$0xff] %v2601
  %2791 = vst [vmem:[%s2759] ss:$9 sm:$0xff] %v2603
  %2792 = vst [vmem:[%s2761] ss:$9 sm:$0xff] %v2605
  %v2793 = vld [vmem:[#allocation1] sm:$0xff]
  %2794 = vst [vmem:[#allocation1] ss:$9 sm:$0xff] %v2607
  %2795 = vst [vmem:[%s2755] ss:$9 sm:$0xff] %v2609
  %2796 = vst [vmem:[%s2757] ss:$9 sm:$0xff] %v2611
  %2797 = vst [vmem:[%s2759] ss:$9 sm:$0xff] %v2613
  %2798 = vst [vmem:[%s2761] ss:$9 sm:$0xff] %v2615
  %v2799 = vld [vmem:[#allocation1] sm:$0xff]
  %2800 = vst [vmem:[#allocation1] ss:$9 sm:$0xff] %v2617
  %2801 = vst [vmem:[%s2755] ss:$9 sm:$0xff] %v2619
  %2802 = vst [vmem:[%s2757] ss:$9 sm:$0xff] %v2621
  %2803 = vst [vmem:[%s2759] ss:$9 sm:$0xff] %v2623
  %2804 = vst [vmem:[%s2761] ss:$9 sm:$0xff] %v2625
  %v2805 = vld [vmem:[#allocation1] sm:$0xff]
  %v2814 = vpack.c.bf16 %v2763, %v2763
  %v2815 = vpack.c.bf16 %v2769, %v2769
  %v2816 = vpack.c.bf16 %v2775, %v2775
  %v2817 = vpack.c.bf16 %v2781, %v2781
  %v2818 = vpack.c.bf16 %v2787, %v2787
  %v2819 = vpack.c.bf16 %v2793, %v2793
  %v2820 = vpack.c.bf16 %v2799, %v2799
  %v2821 = vpack.c.bf16 %v2805, %v2805
  %v2823 = vsel %vm1013, %v2746, 0
  %v2826 = vsel %vm1013, %v2814, 0
  %2828 = vmatpush.bf16.xpose.msra.mxu0 0
  %2829 = vmatpush.bf16.xpose.msra.mxu0 0
  %2830 = vmatpush.bf16.xpose.msra.mxu0 0
  %2831 = vmatpush.bf16.xpose.msra.mxu0 0
  %2832 = vmatpush.bf16.xpose.msra.mxu0 0
  %2833 = vmatpush.bf16.xpose.msra.mxu0 0
  %2834 = vmatpush.bf16.xpose.msra.mxu0 0
  %2835 = vmatpush.bf16.xpose.msra.mxu0 %v2826
  %2836 = vmatmul.bf16.gmra.mxu0 %v2823
  %v2837 = vpop.f32.mrf.mxu0
  %v2838 = vadd.f32 0.0, %v2837
  %v2839 = vpop.f32.mrf.mxu0
  %2840 = vdwg.mxu0
  %v2842 = vsel %vm1013, %v2747, 0
  %v2845 = vsel %vm1013, %v2815, 0
  %2847 = vmatpush.bf16.xpose.msra.mxu0 0
  %2848 = vmatpush.bf16.xpose.msra.mxu0 0
  %2849 = vmatpush.bf16.xpose.msra.mxu0 0
  %2850 = vmatpush.bf16.xpose.msra.mxu0 0
  %2851 = vmatpush.bf16.xpose.msra.mxu0 0
  %2852 = vmatpush.bf16.xpose.msra.mxu0 0
  %2853 = vmatpush.bf16.xpose.msra.mxu0 0
  %2854 = vmatpush.bf16.xpose.msra.mxu0 %v2845
  %2855 = vmatmul.bf16.gmra.mxu0 %v2842
  %v2856 = vpop.f32.mrf.mxu0
  %v2857 = vadd.f32 0.0, %v2856
  %v2858 = vpop.f32.mrf.mxu0
  %2859 = vdwg.mxu0
  %v2861 = vsel %vm1013, %v2748, 0
  %v2864 = vsel %vm1013, %v2816, 0
  %2866 = vmatpush.bf16.xpose.msra.mxu0 0
  %2867 = vmatpush.bf16.xpose.msra.mxu0 0
  %2868 = vmatpush.bf16.xpose.msra.mxu0 0
  %2869 = vmatpush.bf16.xpose.msra.mxu0 0
  %2870 = vmatpush.bf16.xpose.msra.mxu0 0
  %2871 = vmatpush.bf16.xpose.msra.mxu0 0
  %2872 = vmatpush.bf16.xpose.msra.mxu0 0
  %2873 = vmatpush.bf16.xpose.msra.mxu0 %v2864
  %2874 = vmatmul.bf16.gmra.mxu0 %v2861
  %v2875 = vpop.f32.mrf.mxu0
  %v2876 = vadd.f32 0.0, %v2875
  %v2877 = vpop.f32.mrf.mxu0
  %2878 = vdwg.mxu0
  %v2880 = vsel %vm1013, %v2749, 0
  %v2883 = vsel %vm1013, %v2817, 0
  %2885 = vmatpush.bf16.xpose.msra.mxu0 0
  %2886 = vmatpush.bf16.xpose.msra.mxu0 0
  %2887 = vmatpush.bf16.xpose.msra.mxu0 0
  %2888 = vmatpush.bf16.xpose.msra.mxu0 0
  %2889 = vmatpush.bf16.xpose.msra.mxu0 0
  %2890 = vmatpush.bf16.xpose.msra.mxu0 0
  %2891 = vmatpush.bf16.xpose.msra.mxu0 0
  %2892 = vmatpush.bf16.xpose.msra.mxu0 %v2883
  %2893 = vmatmul.bf16.gmra.mxu0 %v2880
  %v2894 = vpop.f32.mrf.mxu0
  %v2895 = vadd.f32 0.0, %v2894
  %v2896 = vpop.f32.mrf.mxu0
  %2897 = vdwg.mxu0
  %v2899 = vsel %vm1013, %v2750, 0
  %v2902 = vsel %vm1013, %v2818, 0
  %2904 = vmatpush.bf16.xpose.msra.mxu0 0
  %2905 = vmatpush.bf16.xpose.msra.mxu0 0
  %2906 = vmatpush.bf16.xpose.msra.mxu0 0
  %2907 = vmatpush.bf16.xpose.msra.mxu0 0
  %2908 = vmatpush.bf16.xpose.msra.mxu0 0
  %2909 = vmatpush.bf16.xpose.msra.mxu0 0
  %2910 = vmatpush.bf16.xpose.msra.mxu0 0
  %2911 = vmatpush.bf16.xpose.msra.mxu0 %v2902
  %2912 = vmatmul.bf16.gmra.mxu0 %v2899
  %v2913 = vpop.f32.mrf.mxu0
  %v2914 = vadd.f32 0.0, %v2913
  %v2915 = vpop.f32.mrf.mxu0
  %2916 = vdwg.mxu0
  %v2918 = vsel %vm1013, %v2751, 0
  %v2921 = vsel %vm1013, %v2819, 0
  %2923 = vmatpush.bf16.xpose.msra.mxu0 0
  %2924 = vmatpush.bf16.xpose.msra.mxu0 0
  %2925 = vmatpush.bf16.xpose.msra.mxu0 0
  %2926 = vmatpush.bf16.xpose.msra.mxu0 0
  %2927 = vmatpush.bf16.xpose.msra.mxu0 0
  %2928 = vmatpush.bf16.xpose.msra.mxu0 0
  %2929 = vmatpush.bf16.xpose.msra.mxu0 0
  %2930 = vmatpush.bf16.xpose.msra.mxu0 %v2921
  %2931 = vmatmul.bf16.gmra.mxu0 %v2918
  %v2932 = vpop.f32.mrf.mxu0
  %v2933 = vadd.f32 0.0, %v2932
  %v2934 = vpop.f32.mrf.mxu0
  %2935 = vdwg.mxu0
  %v2937 = vsel %vm1013, %v2752, 0
  %v2940 = vsel %vm1013, %v2820, 0
  %2942 = vmatpush.bf16.xpose.msra.mxu0 0
  %2943 = vmatpush.bf16.xpose.msra.mxu0 0
  %2944 = vmatpush.bf16.xpose.msra.mxu0 0
  %2945 = vmatpush.bf16.xpose.msra.mxu0 0
  %2946 = vmatpush.bf16.xpose.msra.mxu0 0
  %2947 = vmatpush.bf16.xpose.msra.mxu0 0
  %2948 = vmatpush.bf16.xpose.msra.mxu0 0
  %2949 = vmatpush.bf16.xpose.msra.mxu0 %v2940
  %2950 = vmatmul.bf16.gmra.mxu0 %v2937
  %v2951 = vpop.f32.mrf.mxu0
  %v2952 = vadd.f32 0.0, %v2951
  %v2953 = vpop.f32.mrf.mxu0
  %2954 = vdwg.mxu0
  %v2956 = vsel %vm1013, %v2753, 0
  %v2959 = vsel %vm1013, %v2821, 0
  %2961 = vmatpush.bf16.xpose.msra.mxu0 0
  %2962 = vmatpush.bf16.xpose.msra.mxu0 0
  %2963 = vmatpush.bf16.xpose.msra.mxu0 0
  %2964 = vmatpush.bf16.xpose.msra.mxu0 0
  %2965 = vmatpush.bf16.xpose.msra.mxu0 0
  %2966 = vmatpush.bf16.xpose.msra.mxu0 0
  %2967 = vmatpush.bf16.xpose.msra.mxu0 0
  %2968 = vmatpush.bf16.xpose.msra.mxu0 %v2959
  %2969 = vmatmul.bf16.gmra.mxu0 %v2956
  %v2970 = vpop.f32.mrf.mxu0
  %v2971 = vadd.f32 0.0, %v2970
  %v2972 = vpop.f32.mrf.mxu0
  %2973 = vdwg.mxu0
  %v2974 = vmul.f32 %v2838, 0.35355338
  %v2975 = vmul.f32 %v2857, 0.35355338
  %v2976 = vmul.f32 %v2876, 0.35355338
  %v2977 = vmul.f32 %v2895, 0.35355338
  %v2978 = vmul.f32 %v2914, 0.35355338
  %v2979 = vmul.f32 %v2933, 0.35355338
  %v2980 = vmul.f32 %v2952, 0.35355338
  %v2981 = vmul.f32 %v2971, 0.35355338
  %v2982 = vsel %vm1174, %v2974, -inf
  %2983 = vmax.xlane.f32.xlu0 %v2982
  %v2984 = vpop.xlane.xlu0 %2983
  %v2985 = vsel %vm1174, %v2975, -inf
  %2986 = vmax.xlane.f32.xlu0 %v2985
  %v2987 = vpop.xlane.xlu0 %2986
  %v2988 = vsel %vm1174, %v2976, -inf
  %2989 = vmax.xlane.f32.xlu0 %v2988
  %v2990 = vpop.xlane.xlu0 %2989
  %v2991 = vsel %vm1174, %v2977, -inf
  %2992 = vmax.xlane.f32.xlu0 %v2991
  %v2993 = vpop.xlane.xlu0 %2992
  %v2994 = vsel %vm1174, %v2978, -inf
  %2995 = vmax.xlane.f32.xlu0 %v2994
  %v2996 = vpop.xlane.xlu0 %2995
  %v2997 = vsel %vm1174, %v2979, -inf
  %2998 = vmax.xlane.f32.xlu0 %v2997
  %v2999 = vpop.xlane.xlu0 %2998
  %v3000 = vsel %vm1174, %v2980, -inf
  %3001 = vmax.xlane.f32.xlu0 %v3000
  %v3002 = vpop.xlane.xlu0 %3001
  %v3003 = vsel %vm1174, %v2981, -inf
  %3004 = vmax.xlane.f32.xlu0 %v3003
  %v3005 = vpop.xlane.xlu0 %3004
  %v3006 = vsub.f32 %v2974, %v2984
  %v3007 = vsub.f32 %v2975, %v2987
  %v3008 = vsub.f32 %v2976, %v2990
  %v3009 = vsub.f32 %v2977, %v2993
  %v3010 = vsub.f32 %v2978, %v2996
  %v3011 = vsub.f32 %v2979, %v2999
  %v3012 = vsub.f32 %v2980, %v3002
  %v3013 = vsub.f32 %v2981, %v3005
  %v3014 = vmul.f32 %v3006, 1.442695
  %v3015 = vpow.pop %v3014
  %v3016 = vmul.f32 %v3007, 1.442695
  %v3017 = vpow.pop %v3016
  %v3018 = vmul.f32 %v3008, 1.442695
  %v3019 = vpow.pop %v3018
  %v3020 = vmul.f32 %v3009, 1.442695
  %v3021 = vpow.pop %v3020
  %v3022 = vmul.f32 %v3010, 1.442695
  %v3023 = vpow.pop %v3022
  %v3024 = vmul.f32 %v3011, 1.442695
  %v3025 = vpow.pop %v3024
  %v3026 = vmul.f32 %v3012, 1.442695
  %v3027 = vpow.pop %v3026
  %v3028 = vmul.f32 %v3013, 1.442695
  %v3029 = vpow.pop %v3028
  %v3030 = vsel %vm1174, %v3015, 0.0
  %3031 = vadd.xlane.f32.xlu0 %v3030
  %v3032 = vpop.xlane.xlu0 %3031
  %v3033 = vsel %vm1174, %v3017, 0.0
  %3034 = vadd.xlane.f32.xlu0 %v3033
  %v3035 = vpop.xlane.xlu0 %3034
  %v3036 = vsel %vm1174, %v3019, 0.0
  %3037 = vadd.xlane.f32.xlu0 %v3036
  %v3038 = vpop.xlane.xlu0 %3037
  %v3039 = vsel %vm1174, %v3021, 0.0
  %3040 = vadd.xlane.f32.xlu0 %v3039
  %v3041 = vpop.xlane.xlu0 %3040
  %v3042 = vsel %vm1174, %v3023, 0.0
  %3043 = vadd.xlane.f32.xlu0 %v3042
  %v3044 = vpop.xlane.xlu0 %3043
  %v3045 = vsel %vm1174, %v3025, 0.0
  %3046 = vadd.xlane.f32.xlu0 %v3045
  %v3047 = vpop.xlane.xlu0 %3046
  %v3048 = vsel %vm1174, %v3027, 0.0
  %3049 = vadd.xlane.f32.xlu0 %v3048
  %v3050 = vpop.xlane.xlu0 %3049
  %v3051 = vsel %vm1174, %v3029, 0.0
  %3052 = vadd.xlane.f32.xlu0 %v3051
  %v3053 = vpop.xlane.xlu0 %3052
  %v3054 = vrcp.pop %v3032
  %v3055 = vrcp.pop %v3035
  %v3056 = vrcp.pop %v3038
  %v3057 = vrcp.pop %v3041
  %v3058 = vrcp.pop %v3044
  %v3059 = vrcp.pop %v3047
  %v3060 = vrcp.pop %v3050
  %v3061 = vrcp.pop %v3053
  %v3062 = vmul.f32 %v3015, %v3054
  %v3063 = vmul.f32 %v3017, %v3055
  %v3064 = vmul.f32 %v3019, %v3056
  %v3065 = vmul.f32 %v3021, %v3057
  %v3066 = vmul.f32 %v3023, %v3058
  %v3067 = vmul.f32 %v3025, %v3059
  %v3068 = vmul.f32 %v3027, %v3060
  %v3069 = vmul.f32 %v3029, %v3061
  %v3070 = vpack.c.bf16 %v3062, %v3062
  %v3071 = vpack.c.bf16 %v3063, %v3063
  %v3072 = vpack.c.bf16 %v3064, %v3064
  %v3073 = vpack.c.bf16 %v3065, %v3065
  %v3074 = vpack.c.bf16 %v3066, %v3066
  %v3075 = vpack.c.bf16 %v3067, %v3067
  %v3076 = vpack.c.bf16 %v3068, %v3068
  %v3077 = vpack.c.bf16 %v3069, %v3069
  %3078 = vst [vmem:[#allocation1] ss:$9 sm:$0xff] %v2492
  %s3079 = scalar_lea.vmem [#allocation1], 1
  %3080 = vst [vmem:[%s3079] ss:$9 sm:$0xff] %v2498
  %s3081 = scalar_lea.vmem [#allocation1], 2
  %3082 = vst [vmem:[%s3081] ss:$9 sm:$0xff] %v2499
  %s3083 = scalar_lea.vmem [#allocation1], 3
  %3084 = vst [vmem:[%s3083] ss:$9 sm:$0xff] %v2500
  %s3085 = scalar_lea.vmem [#allocation1], 4
  %3086 = vst [vmem:[%s3085] ss:$9 sm:$0xff] %v2501
  %v3087 = vld [vmem:[#allocation1] sm:$0xff]
  %3088 = vst [vmem:[#allocation1] ss:$9 sm:$0xff] %v2502
  %3089 = vst [vmem:[%s3079] ss:$9 sm:$0xff] %v2503
  %3090 = vst [vmem:[%s3081] ss:$9 sm:$0xff] %v2504
  %3091 = vst [vmem:[%s3083] ss:$9 sm:$0xff] %v2494
  %3092 = vst [vmem:[%s3085] ss:$9 sm:$0xff] %v2505
  %v3093 = vld [vmem:[#allocation1] sm:$0xff]
  %3094 = vst [vmem:[#allocation1] ss:$9 sm:$0xff] %v2627
  %3095 = vst [vmem:[%s3079] ss:$9 sm:$0xff] %v2629
  %3096 = vst [vmem:[%s3081] ss:$9 sm:$0xff] %v2631
  %3097 = vst [vmem:[%s3083] ss:$9 sm:$0xff] %v2633
  %3098 = vst [vmem:[%s3085] ss:$9 sm:$0xff] %v2635
  %v3099 = vld [vmem:[#allocation1] sm:$0xff]
  %3100 = vst [vmem:[#allocation1] ss:$9 sm:$0xff] %v2637
  %3101 = vst [vmem:[%s3079] ss:$9 sm:$0xff] %v2639
  %3102 = vst [vmem:[%s3081] ss:$9 sm:$0xff] %v2641
  %3103 = vst [vmem:[%s3083] ss:$9 sm:$0xff] %v2643
  %3104 = vst [vmem:[%s3085] ss:$9 sm:$0xff] %v2645
  %v3105 = vld [vmem:[#allocation1] sm:$0xff]
  %3106 = vst [vmem:[#allocation1] ss:$9 sm:$0xff] %v2647
  %3107 = vst [vmem:[%s3079] ss:$9 sm:$0xff] %v2649
  %3108 = vst [vmem:[%s3081] ss:$9 sm:$0xff] %v2651
  %3109 = vst [vmem:[%s3083] ss:$9 sm:$0xff] %v2653
  %3110 = vst [vmem:[%s3085] ss:$9 sm:$0xff] %v2655
  %v3111 = vld [vmem:[#allocation1] sm:$0xff]
  %3112 = vst [vmem:[#allocation1] ss:$9 sm:$0xff] %v2657
  %3113 = vst [vmem:[%s3079] ss:$9 sm:$0xff] %v2659
  %3114 = vst [vmem:[%s3081] ss:$9 sm:$0xff] %v2661
  %3115 = vst [vmem:[%s3083] ss:$9 sm:$0xff] %v2663
  %3116 = vst [vmem:[%s3085] ss:$9 sm:$0xff] %v2665
  %v3117 = vld [vmem:[#allocation1] sm:$0xff]
  %3118 = vst [vmem:[#allocation1] ss:$9 sm:$0xff] %v2667
  %3119 = vst [vmem:[%s3079] ss:$9 sm:$0xff] %v2669
  %3120 = vst [vmem:[%s3081] ss:$9 sm:$0xff] %v2671
  %3121 = vst [vmem:[%s3083] ss:$9 sm:$0xff] %v2673
  %3122 = vst [vmem:[%s3085] ss:$9 sm:$0xff] %v2675
  %v3123 = vld [vmem:[#allocation1] sm:$0xff]
  %3124 = vst [vmem:[#allocation1] ss:$9 sm:$0xff] %v2677
  %3125 = vst [vmem:[%s3079] ss:$9 sm:$0xff] %v2679
  %3126 = vst [vmem:[%s3081] ss:$9 sm:$0xff] %v2681
  %3127 = vst [vmem:[%s3083] ss:$9 sm:$0xff] %v2683
  %3128 = vst [vmem:[%s3085] ss:$9 sm:$0xff] %v2685
  %v3129 = vld [vmem:[#allocation1] sm:$0xff]
  %v3138 = vpack.c.bf16 %v3087, %v3087
  %v3139 = vpack.c.bf16 %v3093, %v3093
  %v3140 = vpack.c.bf16 %v3099, %v3099
  %v3141 = vpack.c.bf16 %v3105, %v3105
  %v3142 = vpack.c.bf16 %v3111, %v3111
  %v3143 = vpack.c.bf16 %v3117, %v3117
  %v3144 = vpack.c.bf16 %v3123, %v3123
  %v3145 = vpack.c.bf16 %v3129, %v3129
  %v3147 = vsel %vm1339, %v3070, 0
  %v3150 = vand.u32 %v3138, %v1346
  %3152 = vmatpush.bf16.msra.mxu0 0
  %3153 = vmatpush.bf16.msra.mxu0 0
  %3154 = vmatpush.bf16.msra.mxu0 0
  %3155 = vmatpush.bf16.msra.mxu0 0
  %3156 = vmatpush.bf16.msra.mxu0 0
  %3157 = vmatpush.bf16.msra.mxu0 0
  %3158 = vmatpush.bf16.msra.mxu0 0
  %3159 = vmatpush.bf16.msra.mxu0 %v3150
  %3160 = vmatmul.bf16.gmra.mxu0 %v3147
  %v3161 = vpop.f32.mrf.mxu0
  %v3162 = vadd.f32 0.0, %v3161
  %v3163 = vpop.f32.mrf.mxu0
  %3164 = vdwg.mxu0
  %v3166 = vsel %vm1339, %v3071, 0
  %v3169 = vand.u32 %v3139, %v1346
  %3171 = vmatpush.bf16.msra.mxu0 0
  %3172 = vmatpush.bf16.msra.mxu0 0
  %3173 = vmatpush.bf16.msra.mxu0 0
  %3174 = vmatpush.bf16.msra.mxu0 0
  %3175 = vmatpush.bf16.msra.mxu0 0
  %3176 = vmatpush.bf16.msra.mxu0 0
  %3177 = vmatpush.bf16.msra.mxu0 0
  %3178 = vmatpush.bf16.msra.mxu0 %v3169
  %3179 = vmatmul.bf16.gmra.mxu0 %v3166
  %v3180 = vpop.f32.mrf.mxu0
  %v3181 = vadd.f32 0.0, %v3180
  %v3182 = vpop.f32.mrf.mxu0
  %3183 = vdwg.mxu0
  %v3185 = vsel %vm1339, %v3072, 0
  %v3188 = vand.u32 %v3140, %v1346
  %3190 = vmatpush.bf16.msra.mxu0 0
  %3191 = vmatpush.bf16.msra.mxu0 0
  %3192 = vmatpush.bf16.msra.mxu0 0
  %3193 = vmatpush.bf16.msra.mxu0 0
  %3194 = vmatpush.bf16.msra.mxu0 0
  %3195 = vmatpush.bf16.msra.mxu0 0
  %3196 = vmatpush.bf16.msra.mxu0 0
  %3197 = vmatpush.bf16.msra.mxu0 %v3188
  %3198 = vmatmul.bf16.gmra.mxu0 %v3185
  %v3199 = vpop.f32.mrf.mxu0
  %v3200 = vadd.f32 0.0, %v3199
  %v3201 = vpop.f32.mrf.mxu0
  %3202 = vdwg.mxu0
  %v3204 = vsel %vm1339, %v3073, 0
  %v3207 = vand.u32 %v3141, %v1346
  %3209 = vmatpush.bf16.msra.mxu0 0
  %3210 = vmatpush.bf16.msra.mxu0 0
  %3211 = vmatpush.bf16.msra.mxu0 0
  %3212 = vmatpush.bf16.msra.mxu0 0
  %3213 = vmatpush.bf16.msra.mxu0 0
  %3214 = vmatpush.bf16.msra.mxu0 0
  %3215 = vmatpush.bf16.msra.mxu0 0
  %3216 = vmatpush.bf16.msra.mxu0 %v3207
  %3217 = vmatmul.bf16.gmra.mxu0 %v3204
  %v3218 = vpop.f32.mrf.mxu0
  %v3219 = vadd.f32 0.0, %v3218
  %v3220 = vpop.f32.mrf.mxu0
  %3221 = vdwg.mxu0
  %v3223 = vsel %vm1339, %v3074, 0
  %v3226 = vand.u32 %v3142, %v1346
  %3228 = vmatpush.bf16.msra.mxu0 0
  %3229 = vmatpush.bf16.msra.mxu0 0
  %3230 = vmatpush.bf16.msra.mxu0 0
  %3231 = vmatpush.bf16.msra.mxu0 0
  %3232 = vmatpush.bf16.msra.mxu0 0
  %3233 = vmatpush.bf16.msra.mxu0 0
  %3234 = vmatpush.bf16.msra.mxu0 0
  %3235 = vmatpush.bf16.msra.mxu0 %v3226
  %3236 = vmatmul.bf16.gmra.mxu0 %v3223
  %v3237 = vpop.f32.mrf.mxu0
  %v3238 = vadd.f32 0.0, %v3237
  %v3239 = vpop.f32.mrf.mxu0
  %3240 = vdwg.mxu0
  %v3242 = vsel %vm1339, %v3075, 0
  %v3245 = vand.u32 %v3143, %v1346
  %3247 = vmatpush.bf16.msra.mxu0 0
  %3248 = vmatpush.bf16.msra.mxu0 0
  %3249 = vmatpush.bf16.msra.mxu0 0
  %3250 = vmatpush.bf16.msra.mxu0 0
  %3251 = vmatpush.bf16.msra.mxu0 0
  %3252 = vmatpush.bf16.msra.mxu0 0
  %3253 = vmatpush.bf16.msra.mxu0 0
  %3254 = vmatpush.bf16.msra.mxu0 %v3245
  %3255 = vmatmul.bf16.gmra.mxu0 %v3242
  %v3256 = vpop.f32.mrf.mxu0
  %v3257 = vadd.f32 0.0, %v3256
  %v3258 = vpop.f32.mrf.mxu0
  %3259 = vdwg.mxu0
  %v3261 = vsel %vm1339, %v3076, 0
  %v3264 = vand.u32 %v3144, %v1346
  %3266 = vmatpush.bf16.msra.mxu0 0
  %3267 = vmatpush.bf16.msra.mxu0 0
  %3268 = vmatpush.bf16.msra.mxu0 0
  %3269 = vmatpush.bf16.msra.mxu0 0
  %3270 = vmatpush.bf16.msra.mxu0 0
  %3271 = vmatpush.bf16.msra.mxu0 0
  %3272 = vmatpush.bf16.msra.mxu0 0
  %3273 = vmatpush.bf16.msra.mxu0 %v3264
  %3274 = vmatmul.bf16.gmra.mxu0 %v3261
  %v3275 = vpop.f32.mrf.mxu0
  %v3276 = vadd.f32 0.0, %v3275
  %v3277 = vpop.f32.mrf.mxu0
  %3278 = vdwg.mxu0
  %v3280 = vsel %vm1339, %v3077, 0
  %v3283 = vand.u32 %v3145, %v1346
  %3285 = vmatpush.bf16.msra.mxu0 0
  %3286 = vmatpush.bf16.msra.mxu0 0
  %3287 = vmatpush.bf16.msra.mxu0 0
  %3288 = vmatpush.bf16.msra.mxu0 0
  %3289 = vmatpush.bf16.msra.mxu0 0
  %3290 = vmatpush.bf16.msra.mxu0 0
  %3291 = vmatpush.bf16.msra.mxu0 0
  %3292 = vmatpush.bf16.msra.mxu0 %v3283
  %3293 = vmatmul.bf16.gmra.mxu0 %v3280
  %v3294 = vpop.f32.mrf.mxu0
  %v3295 = vadd.f32 0.0, %v3294
  %v3296 = vpop.f32.mrf.mxu0
  %3297 = vdwg.mxu0
  %3300 = vrot.lane.b32.xlu0 %v3200, 8
  %v3301 = vpop.permute.xlu0 %3300
  %3302 = vrot.lane.b32.xlu0 %v3219, 8
  %v3303 = vpop.permute.xlu0 %3302
  %3308 = vrot.lane.b32.xlu0 %v3238, 16
  %v3309 = vpop.permute.xlu0 %3308
  %3310 = vrot.lane.b32.xlu0 %v3257, 16
  %v3311 = vpop.permute.xlu0 %3310
  %3316 = vrot.lane.b32.xlu0 %v3276, 24
  %v3317 = vpop.permute.xlu0 %3316
  %3318 = vrot.lane.b32.xlu0 %v3295, 24
  %v3319 = vpop.permute.xlu0 %3318
  %v3322 = vsel %vm1013, %v3162, %v3301
  %v3323 = vsel %vm1013, %v3181, %v3303
  %v3324 = vsel %vm1522, %v3322, %v3309
  %v3325 = vsel %vm1522, %v3323, %v3311
  %v3326 = vsel %vm1525, %v3324, %v3317
  %v3327 = vsel %vm1525, %v3325, %v3319
  %v3330 = vrot.slane %v3326, 1
  %v3331 = vrot.slane %v3326, 2
  %v3332 = vrot.slane %v3326, 3
  %v3333 = vrot.slane %v3326, 4
  %v3334 = vrot.slane %v3327, 1
  %v3335 = vrot.slane %v3327, 2
  %v3336 = vrot.slane %v3327, 3
  %v3337 = vrot.slane %v3327, 4
  %s3338 = scalar_lea.vmem %s27, 16
  %v3339 = vld [vmem:[%s3338] sm:$0xf]
  %v3340 = vld [vmem:[%s3338 + $0x4] sm:$0xf]
  %v3341 = vld [vmem:[%s3338 + $0x8] sm:$0xf]
  %v3342 = vld [vmem:[%s3338 + $0xc] sm:$0xf]
  %3343 = vst [vmem:[#allocation1] ss:$9 sm:$0xff] %v3326
  %s3344 = scalar_lea.vmem [#allocation1], 1
  %3345 = vst [vmem:[%s3344] ss:$9 sm:$0xff] %v3330
  %s3346 = scalar_lea.vmem [#allocation1], 2
  %3347 = vst [vmem:[%s3346] ss:$9 sm:$0xff] %v3331
  %s3348 = scalar_lea.vmem [#allocation1], 3
  %3349 = vst [vmem:[%s3348] ss:$9 sm:$0xff] %v3332
  %s3350 = scalar_lea.vmem [#allocation1], 4
  %3351 = vst [vmem:[%s3350] ss:$9 sm:$0xff] %v3333
  %s3352 = scalar_lea.vmem [#allocation1], 5
  %3353 = vst [vmem:[%s3352] ss:$9 sm:$0xff] %v3327
  %s3354 = scalar_lea.vmem [#allocation1], 6
  %3355 = vst [vmem:[%s3354] ss:$9 sm:$0xff] %v3334
  %s3356 = scalar_lea.vmem [#allocation1], 7
  %3357 = vst [vmem:[%s3356] ss:$9 sm:$0xff] %v3335
  %v3358 = vld [vmem:[#allocation1] sm:$0xff]
  %3359 = vst [vmem:[#allocation1] ss:$9 sm:$0xff] %v3336
  %3360 = vst [vmem:[%s3344] ss:$9 sm:$0xff] %v3337
  %v3361 = vld [vmem:[#allocation1] sm:$0xff]
  %v3364 = vpack.c.bf16 %v3361, %v3358
  %v3369 = vunpack.c.l.b16 %v3339
  %v3370 = vunpack.c.l.b16 %v3340
  %v3371 = vunpack.c.l.b16 %v3341
  %v3372 = vunpack.c.l.b16 %v3342
  %v3373 = vpack.c.b16 %v3370, %v3369
  %v3374 = vpack.c.b16 %v3372, %v3371
  %v3378 = vsel %vm324, %v3364, 0
  %3380 = vmatpush.bf16.msra.mxu0 0
  %3381 = vmatpush.bf16.msra.mxu0 0
  %3382 = vmatpush.bf16.msra.mxu0 0
  %3383 = vmatpush.bf16.msra.mxu0 0
  %3384 = vmatpush.bf16.msra.mxu0 0
  %3385 = vmatpush.bf16.msra.mxu0 0
  %3386 = vmatpush.bf16.msra.mxu0 %v3374
  %3387 = vmatpush.bf16.msra.mxu0 %v3373
  %3388 = vmatmul.bf16.gmra.mxu0 %v3378
  %v3389 = vpop.f32.mrf.mxu0
  %v3390 = vadd.f32 0.0, %v3389
  %v3391 = vpop.f32.mrf.mxu0
  %v3392 = vadd.f32 0.0, %v3391
  %3393 = vdwg.mxu0
  %v3396 = vrot.slane %v3390, 1
  %v3397 = vrot.slane %v3390, 2
  %v3398 = vrot.slane %v3390, 3
  %v3399 = vrot.slane %v3390, 4
  %v3400 = vrot.slane %v3390, 5
  %v3401 = vrot.slane %v3390, 6
  %v3402 = vrot.slane %v3390, 7
  %v3403 = vrot.slane %v3392, 1
  %v3412 = vadd.f32 %v2091, %v3390
  %v3413 = vadd.f32 %v2092, %v3396
  %v3414 = vadd.f32 %v2093, %v3397
  %v3415 = vadd.f32 %v2094, %v3398
  %v3416 = vadd.f32 %v2095, %v3399
  %v3417 = vadd.f32 %v2096, %v3400
  %v3418 = vadd.f32 %v2097, %v3401
  %v3419 = vadd.f32 %v2098, %v3402
  %v3420 = vadd.f32 %v2099, %v3392
  %v3421 = vadd.f32 %v2100, %v3403
  %s3422 = scalar_lea.vmem %s29, 1
  %v3423 = vld [vmem:[%s3422] sm:$0x1]
  %v3425 = vperm.slane %v3423, 0
  %v3427 = vrot.slane %v3425, 1
  %v3428 = vrot.slane %v3425, 2
  %v3429 = vrot.slane %v3425, 3
  %v3430 = vrot.slane %v3425, 4
  %v3431 = vrot.slane %v3425, 5
  %v3432 = vrot.slane %v3425, 6
  %v3433 = vrot.slane %v3425, 7
  %v3441 = vadd.f32 %v3412, %v3425
  %v3442 = vadd.f32 %v3413, %v3427
  %v3443 = vadd.f32 %v3414, %v3428
  %v3444 = vadd.f32 %v3415, %v3429
  %v3445 = vadd.f32 %v3416, %v3430
  %v3446 = vadd.f32 %v3417, %v3431
  %v3447 = vadd.f32 %v3418, %v3432
  %v3448 = vadd.f32 %v3419, %v3433
  %v3449 = vadd.f32 %v3420, %v3425
  %v3450 = vadd.f32 %v3421, %v3427
  %s3451 = scalar_lea.vmem %s31, 1
  %v3452 = vld [vmem:[%s3451] sm:$0x1]
  %s3453 = scalar_lea.vmem %s33, 1
  %v3454 = vld [vmem:[%s3453] sm:$0x1]
  %3465 = vst [vmem:[#allocation1] ss:$9 sm:$0xff] %v3441
  %s3466 = scalar_lea.vmem [#allocation1], 1
  %3467 = vst [vmem:[%s3466] ss:$9 sm:$0xff] %v3442
  %s3468 = scalar_lea.vmem [#allocation1], 2
  %3469 = vst [vmem:[%s3468] ss:$9 sm:$0xff] %v3443
  %s3470 = scalar_lea.vmem [#allocation1], 3
  %3471 = vst [vmem:[%s3470] ss:$9 sm:$0xff] %v3444
  %s3472 = scalar_lea.vmem [#allocation1], 4
  %3473 = vst [vmem:[%s3472] ss:$9 sm:$0xff] %v3445
  %s3474 = scalar_lea.vmem [#allocation1], 5
  %3475 = vst [vmem:[%s3474] ss:$9 sm:$0xff] %v3446
  %s3476 = scalar_lea.vmem [#allocation1], 6
  %3477 = vst [vmem:[%s3476] ss:$9 sm:$0xff] %v3447
  %s3478 = scalar_lea.vmem [#allocation1], 7
  %3479 = vst [vmem:[%s3478] ss:$9 sm:$0xff] %v3448
  %v3480 = vld [vmem:[#allocation1] sm:$0xff]
  %3481 = vst [vmem:[#allocation1] ss:$9 sm:$0xff] %v3449
  %3482 = vst [vmem:[%s3466] ss:$9 sm:$0xff] %v3450
  %v3483 = vld [vmem:[#allocation1] sm:$0xff]
  %v3486 = vsel %vm324, %v3480, 0.0
  %3487 = vadd.xlane.f32.xlu0 %v3486
  %v3488 = vpop.xlane.xlu0 %3487
  %v3489 = vsel %vm328, %v3483, 0.0
  %3490 = vadd.xlane.f32.xlu0 %v3489
  %v3491 = vpop.xlane.xlu0 %3490
  %v3492 = vmul.f32 %v3488, %v338
  %v3493 = vmul.f32 %v3491, %v338
  %v3496 = vperm.slane %v3492, 0
  %v3497 = vperm.slane %v3492, 1
  %v3498 = vperm.slane %v3492, 2
  %v3499 = vperm.slane %v3492, 3
  %v3500 = vperm.slane %v3492, 4
  %v3501 = vperm.slane %v3492, 5
  %v3502 = vperm.slane %v3492, 6
  %v3503 = vperm.slane %v3492, 7
  %v3504 = vperm.slane %v3493, 0
  %v3505 = vperm.slane %v3493, 1
  %v3516 = vsub.f32 %v3441, %v3496
  %v3517 = vsub.f32 %v3442, %v3497
  %v3518 = vsub.f32 %v3443, %v3498
  %v3519 = vsub.f32 %v3444, %v3499
  %v3520 = vsub.f32 %v3445, %v3500
  %v3521 = vsub.f32 %v3446, %v3501
  %v3522 = vsub.f32 %v3447, %v3502
  %v3523 = vsub.f32 %v3448, %v3503
  %v3524 = vsub.f32 %v3449, %v3504
  %v3525 = vsub.f32 %v3450, %v3505
  %v3526 = vmul.f32 %v3516, %v3516
  %v3527 = vmul.f32 %v3517, %v3517
  %v3528 = vmul.f32 %v3518, %v3518
  %v3529 = vmul.f32 %v3519, %v3519
  %v3530 = vmul.f32 %v3520, %v3520
  %v3531 = vmul.f32 %v3521, %v3521
  %v3532 = vmul.f32 %v3522, %v3522
  %v3533 = vmul.f32 %v3523, %v3523
  %v3534 = vmul.f32 %v3524, %v3524
  %v3535 = vmul.f32 %v3525, %v3525
  %3546 = vst [vmem:[#allocation1] ss:$9 sm:$0xff] %v3526
  %s3547 = scalar_lea.vmem [#allocation1], 1
  %3548 = vst [vmem:[%s3547] ss:$9 sm:$0xff] %v3527
  %s3549 = scalar_lea.vmem [#allocation1], 2
  %3550 = vst [vmem:[%s3549] ss:$9 sm:$0xff] %v3528
  %s3551 = scalar_lea.vmem [#allocation1], 3
  %3552 = vst [vmem:[%s3551] ss:$9 sm:$0xff] %v3529
  %s3553 = scalar_lea.vmem [#allocation1], 4
  %3554 = vst [vmem:[%s3553] ss:$9 sm:$0xff] %v3530
  %s3555 = scalar_lea.vmem [#allocation1], 5
  %3556 = vst [vmem:[%s3555] ss:$9 sm:$0xff] %v3531
  %s3557 = scalar_lea.vmem [#allocation1], 6
  %3558 = vst [vmem:[%s3557] ss:$9 sm:$0xff] %v3532
  %s3559 = scalar_lea.vmem [#allocation1], 7
  %3560 = vst [vmem:[%s3559] ss:$9 sm:$0xff] %v3533
  %v3561 = vld [vmem:[#allocation1] sm:$0xff]
  %3562 = vst [vmem:[#allocation1] ss:$9 sm:$0xff] %v3534
  %3563 = vst [vmem:[%s3547] ss:$9 sm:$0xff] %v3535
  %v3564 = vld [vmem:[#allocation1] sm:$0xff]
  %v3567 = vsel %vm324, %v3561, 0.0
  %3568 = vadd.xlane.f32.xlu0 %v3567
  %v3569 = vpop.xlane.xlu0 %3568
  %v3570 = vsel %vm328, %v3564, 0.0
  %3571 = vadd.xlane.f32.xlu0 %v3570
  %v3572 = vpop.xlane.xlu0 %3571
  %v3573 = vmul.f32 %v3569, %v338
  %v3574 = vmul.f32 %v3572, %v338
  %v3575 = vadd.f32 %v3573, 1e-06
  %v3576 = vadd.f32 %v3574, 1e-06
  %v3577 = vrsqrt.pop %v3575
  %v3578 = vmul.f32 %v3577, %v3575
  %v3579 = vmul.f32 %v3578, %v3577
  %v3580 = vmul.f32 0.5, %v3579
  %v3581 = vsub.f32 1.5, %v3580
  %v3582 = vmul.f32 %v3577, %v3581
  %vm3583 = vweird.f32 %v3575
  %vm3584 = vweird.f32 %v3577
  %vm3585 = vmor %vm3583, %vm3584
  %v3586 = vsel %vm3585, %v3577, %v3582
  %v3587 = vrsqrt.pop %v3576
  %v3588 = vmul.f32 %v3587, %v3576
  %v3589 = vmul.f32 %v3588, %v3587
  %v3590 = vmul.f32 0.5, %v3589
  %v3591 = vsub.f32 1.5, %v3590
  %v3592 = vmul.f32 %v3587, %v3591
  %vm3593 = vweird.f32 %v3576
  %vm3594 = vweird.f32 %v3587
  %vm3595 = vmor %vm3593, %vm3594
  %v3596 = vsel %vm3595, %v3587, %v3592
  %v3599 = vperm.slane %v3586, 0
  %v3600 = vperm.slane %v3586, 1
  %v3601 = vperm.slane %v3586, 2
  %v3602 = vperm.slane %v3586, 3
  %v3603 = vperm.slane %v3586, 4
  %v3604 = vperm.slane %v3586, 5
  %v3605 = vperm.slane %v3586, 6
  %v3606 = vperm.slane %v3586, 7
  %v3607 = vperm.slane %v3596, 0
  %v3608 = vperm.slane %v3596, 1
  %v3619 = vmul.f32 %v3516, %v3599
  %v3620 = vmul.f32 %v3517, %v3600
  %v3621 = vmul.f32 %v3518, %v3601
  %v3622 = vmul.f32 %v3519, %v3602
  %v3623 = vmul.f32 %v3520, %v3603
  %v3624 = vmul.f32 %v3521, %v3604
  %v3625 = vmul.f32 %v3522, %v3605
  %v3626 = vmul.f32 %v3523, %v3606
  %v3627 = vmul.f32 %v3524, %v3607
  %v3628 = vmul.f32 %v3525, %v3608
  %v3630 = vperm.slane %v3452, 0
  %v3632 = vrot.slane %v3630, 1
  %v3633 = vrot.slane %v3630, 2
  %v3634 = vrot.slane %v3630, 3
  %v3635 = vrot.slane %v3630, 4
  %v3636 = vrot.slane %v3630, 5
  %v3637 = vrot.slane %v3630, 6
  %v3638 = vrot.slane %v3630, 7
  %v3646 = vmul.f32 %v3619, %v3630
  %v3647 = vmul.f32 %v3620, %v3632
  %v3648 = vmul.f32 %v3621, %v3633
  %v3649 = vmul.f32 %v3622, %v3634
  %v3650 = vmul.f32 %v3623, %v3635
  %v3651 = vmul.f32 %v3624, %v3636
  %v3652 = vmul.f32 %v3625, %v3637
  %v3653 = vmul.f32 %v3626, %v3638
  %v3654 = vmul.f32 %v3627, %v3630
  %v3655 = vmul.f32 %v3628, %v3632
  %v3657 = vperm.slane %v3454, 0
  %v3659 = vrot.slane %v3657, 1
  %v3660 = vrot.slane %v3657, 2
  %v3661 = vrot.slane %v3657, 3
  %v3662 = vrot.slane %v3657, 4
  %v3663 = vrot.slane %v3657, 5
  %v3664 = vrot.slane %v3657, 6
  %v3665 = vrot.slane %v3657, 7
  %v3673 = vadd.f32 %v3646, %v3657
  %v3674 = vadd.f32 %v3647, %v3659
  %v3675 = vadd.f32 %v3648, %v3660
  %v3676 = vadd.f32 %v3649, %v3661
  %v3677 = vadd.f32 %v3650, %v3662
  %v3678 = vadd.f32 %v3651, %v3663
  %v3679 = vadd.f32 %v3652, %v3664
  %v3680 = vadd.f32 %v3653, %v3665
  %v3681 = vadd.f32 %v3654, %v3657
  %v3682 = vadd.f32 %v3655, %v3659
  %s3683 = scalar_lea.vmem %s35, 16
  %v3684 = vld [vmem:[%s3683] sm:$0xf]
  %v3685 = vld [vmem:[%s3683 + $0x4] sm:$0xf]
  %v3686 = vld [vmem:[%s3683 + $0x8] sm:$0xf]
  %v3687 = vld [vmem:[%s3683 + $0xc] sm:$0xf]
  %3698 = vst [vmem:[#allocation1] ss:$9 sm:$0xff] %v3673
  %s3699 = scalar_lea.vmem [#allocation1], 1
  %3700 = vst [vmem:[%s3699] ss:$9 sm:$0xff] %v3674
  %s3701 = scalar_lea.vmem [#allocation1], 2
  %3702 = vst [vmem:[%s3701] ss:$9 sm:$0xff] %v3675
  %s3703 = scalar_lea.vmem [#allocation1], 3
  %3704 = vst [vmem:[%s3703] ss:$9 sm:$0xff] %v3676
  %s3705 = scalar_lea.vmem [#allocation1], 4
  %3706 = vst [vmem:[%s3705] ss:$9 sm:$0xff] %v3677
  %s3707 = scalar_lea.vmem [#allocation1], 5
  %3708 = vst [vmem:[%s3707] ss:$9 sm:$0xff] %v3678
  %s3709 = scalar_lea.vmem [#allocation1], 6
  %3710 = vst [vmem:[%s3709] ss:$9 sm:$0xff] %v3679
  %s3711 = scalar_lea.vmem [#allocation1], 7
  %3712 = vst [vmem:[%s3711] ss:$9 sm:$0xff] %v3680
  %v3713 = vld [vmem:[#allocation1] sm:$0xff]
  %3714 = vst [vmem:[#allocation1] ss:$9 sm:$0xff] %v3681
  %3715 = vst [vmem:[%s3699] ss:$9 sm:$0xff] %v3682
  %v3716 = vld [vmem:[#allocation1] sm:$0xff]
  %v3719 = vpack.c.bf16 %v3716, %v3713
  %s3720 = scalar_lea.vmem %s37, 1
  %v3721 = vld [vmem:[%s3720] sm:$0x1]
  %v3723 = vperm.slane %v3721, 0
  %v3729 = vunpack.c.l.b16 %v3684
  %v3730 = vunpack.c.l.b16 %v3685
  %v3731 = vunpack.c.l.b16 %v3686
  %v3732 = vunpack.c.l.b16 %v3687
  %v3733 = vpack.c.b16 %v3730, %v3729
  %v3734 = vpack.c.b16 %v3732, %v3731
  %v3738 = vsel %vm324, %v3719, 0
  %3740 = vmatpush.bf16.msra.mxu0 0
  %3741 = vmatpush.bf16.msra.mxu0 0
  %3742 = vmatpush.bf16.msra.mxu0 0
  %3743 = vmatpush.bf16.msra.mxu0 0
  %3744 = vmatpush.bf16.msra.mxu0 0
  %3745 = vmatpush.bf16.msra.mxu0 0
  %3746 = vmatpush.bf16.msra.mxu0 %v3734
  %3747 = vmatpush.bf16.msra.mxu0 %v3733
  %3748 = vmatmul.bf16.gmra.mxu0 %v3738
  %v3749 = vpop.f32.mrf.mxu0
  %v3750 = vadd.f32 %v3723, %v3749
  %v3751 = vpop.f32.mrf.mxu0
  %v3752 = vadd.f32 %v3723, %v3751
  %3753 = vdwg.mxu0
  %v3754 = vmul.f32 %v3750, %v3750
  %v3755 = vmul.f32 %v3752, %v3752
  %v3756 = vmul.f32 %v3750, %v3754
  %v3757 = vmul.f32 %v3752, %v3755
  %v3758 = vmul.f32 %v3756, 0.044715
  %v3759 = vmul.f32 %v3757, 0.044715
  %v3760 = vadd.f32 %v3750, %v3758
  %v3761 = vadd.f32 %v3752, %v3759
  %v3762 = vmul.f32 %v3760, 0.7978846
  %v3763 = vmul.f32 %v3761, 0.7978846
  %v3764 = vtanh.pop %v3762
  %v3765 = vtanh.pop %v3763
  %v3766 = vadd.f32 %v3764, 1.0
  %v3767 = vadd.f32 %v3765, 1.0
  %v3768 = vmul.f32 %v3766, 0.5
  %v3769 = vmul.f32 %v3767, 0.5
  %v3770 = vmul.f32 %v3750, %v3768
  %v3771 = vmul.f32 %v3752, %v3769
  %s3772 = scalar_lea.vmem %s39, 64
  %v3773 = vld [vmem:[%s3772] sm:$0xf]
  %v3774 = vld [vmem:[%s3772 + $0x4] sm:$0xf]
  %v3775 = vld [vmem:[%s3772 + $0x8] sm:$0xf]
  %v3776 = vld [vmem:[%s3772 + $0xc] sm:$0xf]
  %v3777 = vld [vmem:[%s3772 + $0x10] sm:$0xf]
  %v3778 = vld [vmem:[%s3772 + $0x14] sm:$0xf]
  %v3779 = vld [vmem:[%s3772 + $0x18] sm:$0xf]
  %v3780 = vld [vmem:[%s3772 + $0x1c] sm:$0xf]
  %v3781 = vld [vmem:[%s3772 + $0x20] sm:$0xf]
  %v3782 = vld [vmem:[%s3772 + $0x24] sm:$0xf]
  %v3783 = vld [vmem:[%s3772 + $0x28] sm:$0xf]
  %v3784 = vld [vmem:[%s3772 + $0x2c] sm:$0xf]
  %v3785 = vld [vmem:[%s3772 + $0x30] sm:$0xf]
  %v3786 = vld [vmem:[%s3772 + $0x34] sm:$0xf]
  %v3787 = vld [vmem:[%s3772 + $0x38] sm:$0xf]
  %v3788 = vld [vmem:[%s3772 + $0x3c] sm:$0xf]
  %v3789 = vpack.c.bf16 %v3771, %v3770
  %v3806 = vunpack.c.l.b16 %v3773
  %v3807 = vunpack.c.l.b16 %v3774
  %v3808 = vunpack.c.l.b16 %v3775
  %v3809 = vunpack.c.l.b16 %v3776
  %v3810 = vunpack.c.l.b16 %v3777
  %v3811 = vunpack.c.l.b16 %v3778
  %v3812 = vunpack.c.l.b16 %v3779
  %v3813 = vunpack.c.l.b16 %v3780
  %v3814 = vunpack.c.l.b16 %v3781
  %v3815 = vunpack.c.l.b16 %v3782
  %v3816 = vunpack.c.l.b16 %v3783
  %v3817 = vunpack.c.l.b16 %v3784
  %v3818 = vunpack.c.l.b16 %v3785
  %v3819 = vunpack.c.l.b16 %v3786
  %v3820 = vunpack.c.l.b16 %v3787
  %v3821 = vunpack.c.l.b16 %v3788
  %v3822 = vpack.c.b16 %v3807, %v3806
  %v3823 = vpack.c.b16 %v3809, %v3808
  %v3824 = vpack.c.b16 %v3811, %v3810
  %v3825 = vpack.c.b16 %v3813, %v3812
  %v3826 = vpack.c.b16 %v3815, %v3814
  %v3827 = vpack.c.b16 %v3817, %v3816
  %v3828 = vpack.c.b16 %v3819, %v3818
  %v3829 = vpack.c.b16 %v3821, %v3820
  %3838 = vmatpush.bf16.msra.mxu0 %v3829
  %3839 = vmatpush.bf16.msra.mxu0 %v3828
  %3840 = vmatpush.bf16.msra.mxu0 %v3827
  %3841 = vmatpush.bf16.msra.mxu0 %v3826
  %3842 = vmatpush.bf16.msra.mxu0 %v3825
  %3843 = vmatpush.bf16.msra.mxu0 %v3824
  %3844 = vmatpush.bf16.msra.mxu0 %v3823
  %3845 = vmatpush.bf16.msra.mxu0 %v3822
  %3846 = vmatmul.bf16.gmra.mxu0 %v3789
  %v3847 = vpop.f32.mrf.mxu0
  %v3848 = vadd.f32 0.0, %v3847
  %v3849 = vpop.f32.mrf.mxu0
  %3850 = vdwg.mxu0
  %v3852 = vrot.slane %v3848, 5
  %v3854 = vadd.f32 %v3441, %v3848
  %v3855 = vadd.f32 %v3446, %v3852
  %s3856 = scalar_lea.vmem %s41, 1
  %v3857 = vld [vmem:[%s3856] sm:$0x1]
  %v3859 = vperm.slane %v3857, 0
  %v3861 = vrot.slane %v3859, 5
  %v3863 = vadd.f32 %v3854, %v3859
  %v3864 = vadd.f32 %v3855, %v3861
  %v3866 = vperm.slane %v3864, 0
  %v3868 = vsel %vm277, %v3863, %v3866
  %v3869 = vld [vmem:[%s43] sm:$0x1]
  %v3870 = vld [vmem:[%s45] sm:$0x1]
  %v3871 = vsel %vm328, %v3868, 0.0
  %3872 = vadd.xlane.f32.xlu0 %v3871
  %v3873 = vpop.xlane.xlu0 %3872
  %v3874 = vmul.f32 %v3873, %v338
  %v3875 = vsub.f32 %v3868, %v3874
  %v3876 = vmul.f32 %v3875, %v3875
  %v3877 = vsel %vm328, %v3876, 0.0
  %3878 = vadd.xlane.f32.xlu0 %v3877
  %v3879 = vpop.xlane.xlu0 %3878
  %v3880 = vmul.f32 %v3879, %v338
  %v3881 = vadd.f32 %v3880, 1e-06
  %v3882 = vrsqrt.pop %v3881
  %v3883 = vmul.f32 %v3882, %v3881
  %v3884 = vmul.f32 %v3883, %v3882
  %v3885 = vmul.f32 0.5, %v3884
  %v3886 = vsub.f32 1.5, %v3885
  %v3887 = vmul.f32 %v3882, %v3886
  %vm3888 = vweird.f32 %v3881
  %vm3889 = vweird.f32 %v3882
  %vm3890 = vmor %vm3888, %vm3889
  %v3891 = vsel %vm3890, %v3882, %v3887
  %v3892 = vmul.f32 %v3875, %v3891
  %v3894 = vperm.slane %v3869, 0
  %v3896 = vmul.f32 %v3892, %v3894
  %v3898 = vperm.slane %v3870, 0
  %v3900 = vadd.f32 %v3896, %v3898
  %v3901 = vld [vmem:[%s47] sm:$0xf]
  %v3902 = vld [vmem:[%s47 + $0x4] sm:$0xf]
  %v3903 = vld [vmem:[%s47 + $0x8] sm:$0xf]
  %v3904 = vld [vmem:[%s47 + $0xc] sm:$0xf]
  %v3905 = vpack.c.bf16 %v3900, %v3900
  %v3906 = vld [vmem:[%s49] sm:$0x1]
  %v3908 = vperm.slane %v3906, 0
  %v3914 = vunpack.c.l.b16 %v3901
  %v3915 = vunpack.c.l.b16 %v3902
  %v3916 = vunpack.c.l.b16 %v3903
  %v3917 = vunpack.c.l.b16 %v3904
  %v3918 = vpack.c.b16 %v3915, %v3914
  %v3919 = vpack.c.b16 %v3917, %v3916
  %v3923 = vsel %vm324, %v3905, 0
  %3925 = vmatpush.bf16.msra.mxu0 0
  %3926 = vmatpush.bf16.msra.mxu0 0
  %3927 = vmatpush.bf16.msra.mxu0 0
  %3928 = vmatpush.bf16.msra.mxu0 0
  %3929 = vmatpush.bf16.msra.mxu0 0
  %3930 = vmatpush.bf16.msra.mxu0 0
  %3931 = vmatpush.bf16.msra.mxu0 %v3919
  %3932 = vmatpush.bf16.msra.mxu0 %v3918
  %3933 = vmatmul.bf16.gmra.mxu0 %v3923
  %v3934 = vpop.f32.mrf.mxu0
  %v3935 = vadd.f32 %v3908, %v3934
  %v3936 = vpop.f32.mrf.mxu0
  %3937 = vdwg.mxu0
  %v3938 = vmax.f32 %v3935, 0.0
  %v3939 = vld [vmem:[%s51] sm:$0xf]
  %v3940 = vld [vmem:[%s51 + $0x4] sm:$0xf]
  %v3941 = vld [vmem:[%s51 + $0x8] sm:$0xf]
  %v3942 = vld [vmem:[%s51 + $0xc] sm:$0xf]
  %v3943 = vpack.c.bf16 %v3938, %v3938
  %v3944 = vld [vmem:[%s53] sm:$0x1]
  %v3946 = vperm.slane %v3944, 0
  %v3952 = vunpack.c.l.b16 %v3939
  %v3953 = vunpack.c.l.b16 %v3940
  %v3954 = vunpack.c.l.b16 %v3941
  %v3955 = vunpack.c.l.b16 %v3942
  %v3956 = vpack.c.b16 %v3953, %v3952
  %v3957 = vpack.c.b16 %v3955, %v3954
  %v3961 = vsel %vm324, %v3943, 0
  %3963 = vmatpush.bf16.msra.mxu0 0
  %3964 = vmatpush.bf16.msra.mxu0 0
  %3965 = vmatpush.bf16.msra.mxu0 0
  %3966 = vmatpush.bf16.msra.mxu0 0
  %3967 = vmatpush.bf16.msra.mxu0 0
  %3968 = vmatpush.bf16.msra.mxu0 0
  %3969 = vmatpush.bf16.msra.mxu0 %v3957
  %3970 = vmatpush.bf16.msra.mxu0 %v3956
  %3971 = vmatmul.bf16.gmra.mxu0 %v3961
  %v3972 = vpop.f32.mrf.mxu0
  %v3973 = vadd.f32 %v3946, %v3972
  %v3974 = vpop.f32.mrf.mxu0
  %3975 = vdwg.mxu0
  %v3976 = vld [vmem:[%s55] sm:$0xf]
  %v3977 = vld [vmem:[%s55 + $0x4] sm:$0xf]
  %v3978 = vld [vmem:[%s55 + $0x8] sm:$0xf]
  %v3979 = vld [vmem:[%s55 + $0xc] sm:$0xf]
  %v3980 = vpack.c.bf16 %v3973, %v3973
  %v3981 = vld [vmem:[%s57] sm:$0x1]
  %v3983 = vperm.slane %v3981, 0
  %v3989 = vunpack.c.l.b16 %v3976
  %v3990 = vunpack.c.l.b16 %v3977
  %v3991 = vunpack.c.l.b16 %v3978
  %v3992 = vunpack.c.l.b16 %v3979
  %v3993 = vpack.c.b16 %v3990, %v3989
  %v3994 = vpack.c.b16 %v3992, %v3991
  %v3998 = vsel %vm324, %v3980, 0
  %4000 = vmatpush.bf16.msra.mxu0 0
  %4001 = vmatpush.bf16.msra.mxu0 0
  %4002 = vmatpush.bf16.msra.mxu0 0
  %4003 = vmatpush.bf16.msra.mxu0 0
  %4004 = vmatpush.bf16.msra.mxu0 0
  %4005 = vmatpush.bf16.msra.mxu0 0
  %4006 = vmatpush.bf16.msra.mxu0 %v3994
  %4007 = vmatpush.bf16.msra.mxu0 %v3993
  %4008 = vmatmul.bf16.gmra.mxu0 %v3998
  %v4009 = vpop.f32.mrf.mxu0
  %v4010 = vadd.f32 %v3983, %v4009
  %v4011 = vpop.f32.mrf.mxu0
  %4012 = vdwg.mxu0
  %v4013 = vmax.f32 %v4010, 0.0
  %v4014 = vld [vmem:[%s59] sm:$0x1]
  %v4015 = vpack.c.bf16 %v4013, %v4013
  %v4016 = vld [vmem:[%s61] sm:$0x1]
  %v4018 = vperm.slane %v4016, 0
  %vm4020 = vcmask 15360
  %v4022 = vsel %vm4020, %v4015, 0
  %v4025 = vsel %vm277, %v4014, 0
  %4027 = vmatpush.bf16.msra.mxu0 0
  %4028 = vmatpush.bf16.msra.mxu0 0
  %4029 = vmatpush.bf16.msra.mxu0 0
  %4030 = vmatpush.bf16.msra.mxu0 0
  %4031 = vmatpush.bf16.msra.mxu0 0
  %4032 = vmatpush.bf16.msra.mxu0 0
  %4033 = vmatpush.bf16.msra.mxu0 0
  %4034 = vmatpush.bf16.msra.mxu0 %v4025
  %4035 = vmatmul.bf16.gmra.mxu0 %v4022
  %v4036 = vpop.f32.mrf.mxu0
  %v4037 = vadd.f32 %v4018, %v4036
  %v4038 = vpop.f32.mrf.mxu0
  %4039 = vdwg.mxu0
  %v4040 = vxor.u32 %v4037, 2147483648
  %v4041 = vmul.f32 %v4040, 1.442695
  %v4042 = vpow.pop %v4041
  %v4043 = vadd.f32 %v4042, 1.0
  %v4044 = vrcp.pop %v4043
  %v4045 = vmul.f32 %v4043, %v4044
  %v4046 = vsub.f32 1.0, %v4045
  %v4047 = vmul.f32 %v4044, %v4046
  %v4048 = vadd.f32 %v4044, %v4047
  %vm4049 = vweird.f32 %v4043
  %vm4050 = vweird.f32 %v4044
  %vm4051 = vmor %vm4049, %vm4050
  %v4052 = vsel %vm4051, %v4044, %v4048
  %v4053 = vand.u32 2147483647, %v4043
  %vm4054 = vcmp.eq.f32.partialorder %v4053, 8.507059e+37
  %v4055 = vand.u32 %v4043, 2147483648
  %v4056 = vor.u32 1.1754944e-38, %v4055
  %v4057 = vsel %vm4054, %v4056, %v4052
  %v4058 = vmul.f32 1.0, %v4057
  %v4059 = vmul.f32 %v3973, %v4058
  %v4060 = vsel %vm324, %v4059, 0.0
  %v4061 = vsel %vm1343, %v4060, 0.0
  %4062 = vst [vmem:[%s63] sm:$0xff] %v4061
  // Predicated region
  $region126: #{sp_simclr_forward.1} parent=0 // pred_check
    _
  $region127: #{sp_simclr_forward.1} parent=0 // pred_check_branch
    %4064 = sbr.rel (0) target = $region129
  $region128: #{sp_simclr_forward.1} parent=0 // pred_region
    _
  $region129: #{sp_simclr_forward.1} parent=0 // pred_fallthru
    _
  // Predicated region
  $region130: #{sp_simclr_forward.1} parent=0 // pred_check
    _
  $region131: #{sp_simclr_forward.1} parent=0 // pred_check_branch
    %4066 = sbr.rel (0) target = $region133
  $region132: #{sp_simclr_forward.1} parent=0 // pred_region
    _
  $region133: #{sp_simclr_forward.1} parent=0 // pred_fallthru
    _

</llo_original>
